<compile_context>
chip_gen: v7x
topology: tpu7x:2x2x1
jax: 0.10.0
libtpu: 0.0.40
codegen_flags: <defaults>
</compile_context>

<pallas_src>
import functools
import math

import jax
import jax.numpy as jnp
from jax.experimental import pallas as pl
from jax.experimental.pallas import tpu as pltpu

EPS = 1e-12          # BERT LayerNorm eps
CLS_PAD = 128        # lane-dense padded width for the classifier output


def _gelu_tanh(x):
    # TODO(synk): HF BERT uses exact erf-GELU; tanh approximation is used here
    # because it lowers cleanly to the TPU EUP (tanh) path.
    c = math.sqrt(2.0 / math.pi)
    return 0.5 * x * (1.0 + jnp.tanh(c * (x + 0.044715 * x * x * x)))


# ----------------------------------------------------------------------------
# Fused whole-model kernel
# ----------------------------------------------------------------------------
def _fused_bert_kernel(emb_ref, bias_ref, eg_ref, eb_ref,
                       wqkv_ref, bqkv_ref, wo_ref, bo_ref, g1_ref, b1_ref,
                       wi_ref, bi_ref, wf_ref, bf_ref, g2_ref, b2_ref,
                       wc_ref, bc_ref,
                       out_ref,
                       *, B, S, NH, DH, H, L):

    def layernorm(x, g, b):
        # residual is already folded into x by the caller
        mu = jnp.mean(x, axis=-1, keepdims=True)
        var = jnp.mean((x - mu) ** 2, axis=-1, keepdims=True)
        return (x - mu) * jax.lax.rsqrt(var + EPS) * g + b

    def mm(a, w):
        # activation cast to bf16 (weights are already bf16); f32 accumulation
        return jnp.dot(a.astype(jnp.bfloat16), w,
                       preferred_element_type=jnp.float32)

    # embeddings already summed outside; LayerNorm here (dropout = identity in eval)
    x = layernorm(emb_ref[...], eg_ref[...], eb_ref[...])        # (B*S, H) f32
    bias = bias_ref[...]                                         # (B, S, S) additive mask

    for li in range(L):
        # ---- self-attention block (fused QKV matmul, heads batched over B) ----
        qkv = mm(x, wqkv_ref[li]) + bqkv_ref[li]                 # (B*S, 3H) f32
        qkv3 = qkv.reshape(B, S, 3 * H)                          # sublane-tile aligned split

        head_ctx = []
        for h in range(NH):                                      # small static unroll
            c0 = h * DH
            q = qkv3[:, :, c0:c0 + DH].astype(jnp.bfloat16)              # (B, S, DH)
            k = qkv3[:, :, H + c0:H + c0 + DH].astype(jnp.bfloat16)      # (B, S, DH)
            v = qkv3[:, :, 2 * H + c0:2 * H + c0 + DH].astype(jnp.bfloat16)
            # scores for both batch elements at once (1/sqrt(DH) pre-folded into Wq)
            s = jnp.einsum('bqd,bkd->bqk', q, k,
                           preferred_element_type=jnp.float32) + bias    # (B, S, S)
            m = jnp.max(s, axis=-1, keepdims=True)
            p = jnp.exp(s - m)
            denom = jnp.sum(p, axis=-1, keepdims=True)
            ctx_h = jnp.einsum('bqk,bkd->bqd', p.astype(jnp.bfloat16), v,
                               preferred_element_type=jnp.float32)       # (B, S, DH)
            # flash-style deferred normalization: one EUP reciprocal per head
            head_ctx.append(ctx_h * pl.reciprocal(denom, approx=True))

        # context stays in registers (no VMEM scratch round trip)
        ctx = jnp.concatenate(head_ctx, axis=-1).reshape(B * S, H)       # (B*S, H)
        attn_out = mm(ctx, wo_ref[li]) + bo_ref[li]
        x = layernorm(attn_out + x, g1_ref[li], b1_ref[li])             # residual + LN1

        # ---- feed-forward block (GELU fused onto first matmul) ----
        inter = _gelu_tanh(mm(x, wi_ref[li]) + bi_ref[li])
        ffn = mm(inter, wf_ref[li]) + bf_ref[li]
        x = layernorm(ffn + x, g2_ref[li], b2_ref[li])                   # residual + LN2

    # ---- classifier on [CLS] tokens: gather B rows, single matmul,
    #      single lane-dense (B, 128) store ----
    cls = jnp.concatenate([x[b * S:b * S + 1, :] for b in range(B)], axis=0)  # (B, H)
    out_ref[...] = mm(cls, wc_ref[...]) + bc_ref[...]


# ----------------------------------------------------------------------------
# Model config / parameters (synthetic, deterministic init)
# ----------------------------------------------------------------------------
class Config:
    vocab_size = 50
    hidden = 32          # args.hidden_sz
    n_heads = 4
    head_dim = 8
    n_layers = 2
    intermediate = 64
    max_pos = 16
    type_vocab = 2
    n_classes = 3        # args.n_classes


def init_params(key, cfg):
    std = 0.02
    H, I, L = cfg.hidden, cfg.intermediate, cfg.n_layers

    def nrm(k, shape):
        return std * jax.random.normal(k, shape, dtype=jnp.float32)

    ks = iter(jax.random.split(key, 8))
    return {
        "word_emb": nrm(next(ks), (cfg.vocab_size, H)),
        "pos_emb": nrm(next(ks), (cfg.max_pos, H)),
        "type_emb": nrm(next(ks), (cfg.type_vocab, H)),
        "emb_ln_g": jnp.ones((1, H), jnp.float32),
        "emb_ln_b": jnp.zeros((1, H), jnp.float32),
        # per-layer weights stacked on a leading layer axis
        "w_qkv": nrm(next(ks), (L, H, 3 * H)),      # fused Wq|Wk|Wv
        "b_qkv": jnp.zeros((L, 1, 3 * H), jnp.float32),
        "w_o": nrm(next(ks), (L, H, H)),
        "b_o": jnp.zeros((L, 1, H), jnp.float32),
        "ln1_g": jnp.ones((L, 1, H), jnp.float32),
        "ln1_b": jnp.zeros((L, 1, H), jnp.float32),
        "w_i": nrm(next(ks), (L, H, I)),
        "b_i": jnp.zeros((L, 1, I), jnp.float32),
        "w_f": nrm(next(ks), (L, I, H)),
        "b_f": jnp.zeros((L, 1, H), jnp.float32),
        "ln2_g": jnp.ones((L, 1, H), jnp.float32),
        "ln2_b": jnp.zeros((L, 1, H), jnp.float32),
        "clf_w": nrm(next(ks), (H, cfg.n_classes)),
        "clf_b": jnp.zeros((cfg.n_classes,), jnp.float32),
    }


# ----------------------------------------------------------------------------
# Forward pass (matches PruneBertClf.forward semantics, eval mode)
# ----------------------------------------------------------------------------
def prunebert_clf_forward(params, txt, mask, segment, cfg):
    B, S = txt.shape
    H, NH, DH = cfg.hidden, cfg.n_heads, cfg.head_dim
    L, C = cfg.n_layers, cfg.n_classes

    # --- embeddings (gather is JAX glue); LayerNorm happens inside the kernel ---
    pos = jnp.arange(S)
    emb = (params["word_emb"][txt]
           + params["pos_emb"][pos][None, :, :]
           + params["type_emb"][segment])
    emb2d = emb.reshape(B * S, H)

    # extended attention mask, pre-broadcast to (B, S, S) additive bias (plain add in-kernel)
    bias = jnp.broadcast_to(
        ((1.0 - mask.astype(jnp.float32)) * -10000.0)[:, None, :], (B, S, S))

    # fold 1/sqrt(DH) into the Q third of the fused QKV projection (host-side)
    qscale = jnp.concatenate([
        jnp.full((H,), 1.0 / math.sqrt(DH), jnp.float32),
        jnp.ones((2 * H,), jnp.float32)])
    w_qkv = (params["w_qkv"] * qscale).astype(jnp.bfloat16)
    b_qkv = params["b_qkv"] * qscale                               # biases stay f32

    # bf16 weights (halves DMA/VMEM, removes in-kernel weight converts)
    w_o = params["w_o"].astype(jnp.bfloat16)
    w_i = params["w_i"].astype(jnp.bfloat16)
    w_f = params["w_f"].astype(jnp.bfloat16)

    # pad classifier to 128 output lanes so the final store is lane-dense
    clf_w = (jnp.zeros((H, CLS_PAD), jnp.float32)
             .at[:, :C].set(params["clf_w"])).astype(jnp.bfloat16)
    clf_b = jnp.zeros((1, CLS_PAD), jnp.float32).at[0, :C].set(params["clf_b"])

    vmem_spec = pl.BlockSpec(memory_space=pltpu.MemorySpace.VMEM)
    kernel = functools.partial(_fused_bert_kernel, B=B, S=S, NH=NH, DH=DH, H=H, L=L)

    logits_padded = pl.pallas_call(
        kernel,
        out_shape=jax.ShapeDtypeStruct((B, CLS_PAD), jnp.float32),
        in_specs=[vmem_spec] * 18,
        out_specs=vmem_spec,
    )(emb2d, bias,
      params["emb_ln_g"], params["emb_ln_b"],
      w_qkv, b_qkv,
      w_o, params["b_o"],
      params["ln1_g"], params["ln1_b"],
      w_i, params["b_i"],
      w_f, params["b_f"],
      params["ln2_g"], params["ln2_b"],
      clf_w, clf_b)

    return logits_padded[:, :C]                                    # (B, n_classes)


# ----------------------------------------------------------------------------
if __name__ == "__main__":
    cfg = Config()
    B, S = 2, 8

    root = jax.random.PRNGKey(0)
    k_params, k_txt, k_seg = jax.random.split(root, 3)

    params = init_params(k_params, cfg)

    txt = jax.random.randint(k_txt, (B, S), 0, cfg.vocab_size, dtype=jnp.int32)
    # attention mask: sample 0 full length, sample 1 has 2 trailing pad tokens
    mask = jnp.array([[1] * S, [1] * (S - 2) + [0] * 2], dtype=jnp.int32)
    segment = jax.random.randint(k_seg, (B, S), 0, cfg.type_vocab, dtype=jnp.int32)

    fwd = jax.jit(functools.partial(prunebert_clf_forward, cfg=cfg))
    logits = fwd(params, txt, mask, segment)
    jax.block_until_ready(logits)

    assert logits.shape == (B, cfg.n_classes)
    assert bool(jnp.all(jnp.isfinite(logits)))
    print("KERNEL_OK")
</pallas_src>

<mosaic_0001>
module attributes {stable_mosaic.version = 11 : i64} {
  func.func @_fused_bert_kernel(%arg0: memref<16x32xf32, #tpu.memory_space<vmem>>, %arg1: memref<2x8x8xf32, #tpu.memory_space<vmem>>, %arg2: memref<1x32xf32, #tpu.memory_space<vmem>>, %arg3: memref<1x32xf32, #tpu.memory_space<vmem>>, %arg4: memref<2x32x96xbf16, #tpu.memory_space<vmem>>, %arg5: memref<2x1x96xf32, #tpu.memory_space<vmem>>, %arg6: memref<2x32x32xbf16, #tpu.memory_space<vmem>>, %arg7: memref<2x1x32xf32, #tpu.memory_space<vmem>>, %arg8: memref<2x1x32xf32, #tpu.memory_space<vmem>>, %arg9: memref<2x1x32xf32, #tpu.memory_space<vmem>>, %arg10: memref<2x32x64xbf16, #tpu.memory_space<vmem>>, %arg11: memref<2x1x64xf32, #tpu.memory_space<vmem>>, %arg12: memref<2x64x32xbf16, #tpu.memory_space<vmem>>, %arg13: memref<2x1x32xf32, #tpu.memory_space<vmem>>, %arg14: memref<2x1x32xf32, #tpu.memory_space<vmem>>, %arg15: memref<2x1x32xf32, #tpu.memory_space<vmem>>, %arg16: memref<32x128xbf16, #tpu.memory_space<vmem>>, %arg17: memref<1x128xf32, #tpu.memory_space<vmem>>, %arg18: memref<2x128xf32, #tpu.memory_space<vmem>>) attributes {dimension_semantics = [], scalar_prefetch = 0 : i64, scratch_operands = 0 : i64, tpu.core_type = #tpu.core_type<tc>} {
    %c0 = arith.constant 0 : index
    %c0_0 = arith.constant 0 : index
    %0 = vector.load %arg0[%c0, %c0_0] : memref<16x32xf32, #tpu.memory_space<vmem>>, vector<16x32xf32>
    %c0_1 = arith.constant 0 : index
    %c0_2 = arith.constant 0 : index
    %1 = vector.load %arg2[%c0_1, %c0_2] : memref<1x32xf32, #tpu.memory_space<vmem>>, vector<1x32xf32>
    %c0_3 = arith.constant 0 : index
    %c0_4 = arith.constant 0 : index
    %2 = vector.load %arg3[%c0_3, %c0_4] : memref<1x32xf32, #tpu.memory_space<vmem>>, vector<1x32xf32>
    %cst = arith.constant dense<0.000000e+00> : vector<16xf32>
    %3 = vector.multi_reduction <add>, %0, %cst [1] : vector<16x32xf32> to vector<16xf32>
    %4 = vector.shape_cast %3 : vector<16xf32> to vector<16x1xf32>
    %cst_5 = arith.constant 3.200000e+01 : f32
    %5 = vector.broadcast %cst_5 : f32 to vector<16x1xf32>
    %6 = arith.divf %4, %5 : vector<16x1xf32>
    %7 = vector.broadcast %6 : vector<16x1xf32> to vector<16x32xf32>
    %8 = arith.subf %0, %7 : vector<16x32xf32>
    %9 = arith.mulf %8, %8 : vector<16x32xf32>
    %cst_6 = arith.constant dense<0.000000e+00> : vector<16xf32>
    %10 = vector.multi_reduction <add>, %9, %cst_6 [1] : vector<16x32xf32> to vector<16xf32>
    %11 = vector.shape_cast %10 : vector<16xf32> to vector<16x1xf32>
    %cst_7 = arith.constant 3.200000e+01 : f32
    %12 = vector.broadcast %cst_7 : f32 to vector<16x1xf32>
    %13 = arith.divf %11, %12 : vector<16x1xf32>
    %14 = vector.broadcast %6 : vector<16x1xf32> to vector<16x32xf32>
    %15 = arith.subf %0, %14 : vector<16x32xf32>
    %cst_8 = arith.constant 9.99999996E-13 : f32
    %16 = vector.broadcast %cst_8 : f32 to vector<16x1xf32>
    %17 = arith.addf %13, %16 : vector<16x1xf32>
    %18 = math.rsqrt %17 : vector<16x1xf32>
    %19 = vector.broadcast %18 : vector<16x1xf32> to vector<16x32xf32>
    %20 = arith.mulf %15, %19 : vector<16x32xf32>
    %21 = vector.broadcast %1 : vector<1x32xf32> to vector<16x32xf32>
    %22 = arith.mulf %20, %21 : vector<16x32xf32>
    %23 = vector.broadcast %2 : vector<1x32xf32> to vector<16x32xf32>
    %24 = arith.addf %22, %23 : vector<16x32xf32>
    %c0_9 = arith.constant 0 : index
    %c0_10 = arith.constant 0 : index
    %c0_11 = arith.constant 0 : index
    %25 = vector.load %arg1[%c0_9, %c0_10, %c0_11] : memref<2x8x8xf32, #tpu.memory_space<vmem>>, vector<2x8x8xf32>
    %c0_12 = arith.constant 0 : index
    %c0_13 = arith.constant 0 : index
    %c0_14 = arith.constant 0 : index
    %26 = vector.load %arg4[%c0_12, %c0_13, %c0_14] : memref<2x32x96xbf16, #tpu.memory_space<vmem>>, vector<1x32x96xbf16>
    %27 = vector.shape_cast %26 : vector<1x32x96xbf16> to vector<32x96xbf16>
    %28 = arith.truncf %24 : vector<16x32xf32> to vector<16x32xbf16>
    %cst_15 = arith.constant dense<0.000000e+00> : vector<16x96xf32>
    %29 = tpu.matmul %28, %27, %cst_15 {dimension_numbers = #tpu.dot_dimension_numbers<[1], [0], [0], [1], [0, 0, 1, 1], [], []>} : vector<16x32xbf16>, vector<32x96xbf16>, vector<16x96xf32> -> vector<16x96xf32>
    %c0_16 = arith.constant 0 : index
    %c0_17 = arith.constant 0 : index
    %c0_18 = arith.constant 0 : index
    %30 = vector.load %arg5[%c0_16, %c0_17, %c0_18] : memref<2x1x96xf32, #tpu.memory_space<vmem>>, vector<1x1x96xf32>
    %31 = vector.shape_cast %30 : vector<1x1x96xf32> to vector<1x96xf32>
    %32 = vector.broadcast %31 : vector<1x96xf32> to vector<16x96xf32>
    %33 = arith.addf %29, %32 : vector<16x96xf32>
    %34 = vector.shape_cast %33 : vector<16x96xf32> to vector<2x8x96xf32>
    %35 = vector.extract_strided_slice %34 {offsets = [0, 0, 0], sizes = [2, 8, 8], strides = [1, 1, 1]} : vector<2x8x96xf32> to vector<2x8x8xf32>
    %36 = arith.truncf %35 : vector<2x8x8xf32> to vector<2x8x8xbf16>
    %37 = vector.extract_strided_slice %34 {offsets = [0, 0, 32], sizes = [2, 8, 8], strides = [1, 1, 1]} : vector<2x8x96xf32> to vector<2x8x8xf32>
    %38 = arith.truncf %37 : vector<2x8x8xf32> to vector<2x8x8xbf16>
    %39 = vector.extract_strided_slice %34 {offsets = [0, 0, 64], sizes = [2, 8, 8], strides = [1, 1, 1]} : vector<2x8x96xf32> to vector<2x8x8xf32>
    %40 = arith.truncf %39 : vector<2x8x8xf32> to vector<2x8x8xbf16>
    "tpu.trace_start"() <{level = 10 : i32, message = "bqd,bkd->bqk"}> : () -> ()
    %cst_19 = arith.constant dense<0.000000e+00> : vector<2x8x8xf32>
    %41 = tpu.matmul %36, %38, %cst_19 {dimension_numbers = #tpu.dot_dimension_numbers<[2], [2], [1], [1], [0, 0, 0, 1, 1, 1], [0], [0]>} : vector<2x8x8xbf16>, vector<2x8x8xbf16>, vector<2x8x8xf32> -> vector<2x8x8xf32>
    "tpu.trace_stop"() : () -> ()
    %42 = arith.addf %41, %25 : vector<2x8x8xf32>
    %cst_20 = arith.constant dense<0xFF800000> : vector<2x8xf32>
    %43 = vector.multi_reduction <maximumf>, %42, %cst_20 [2] : vector<2x8x8xf32> to vector<2x8xf32>
    %44 = vector.shape_cast %43 : vector<2x8xf32> to vector<2x8x1xf32>
    %45 = vector.broadcast %44 : vector<2x8x1xf32> to vector<2x8x8xf32>
    %46 = arith.subf %42, %45 : vector<2x8x8xf32>
    %47 = math.exp %46 : vector<2x8x8xf32>
    %cst_21 = arith.constant dense<0.000000e+00> : vector<2x8xf32>
    %48 = vector.multi_reduction <add>, %47, %cst_21 [2] : vector<2x8x8xf32> to vector<2x8xf32>
    %49 = vector.shape_cast %48 : vector<2x8xf32> to vector<2x8x1xf32>
    %50 = arith.truncf %47 : vector<2x8x8xf32> to vector<2x8x8xbf16>
    "tpu.trace_start"() <{level = 10 : i32, message = "bqk,bkd->bqd"}> : () -> ()
    %cst_22 = arith.constant dense<0.000000e+00> : vector<2x8x8xf32>
    %51 = tpu.matmul %50, %40, %cst_22 {dimension_numbers = #tpu.dot_dimension_numbers<[2], [1], [1], [2], [0, 0, 0, 1, 1, 2], [0], [0]>} : vector<2x8x8xbf16>, vector<2x8x8xbf16>, vector<2x8x8xf32> -> vector<2x8x8xf32>
    "tpu.trace_stop"() : () -> ()
    %52 = tpu.reciprocal %49 {approx = true} : vector<2x8x1xf32> -> vector<2x8x1xf32>
    %53 = vector.broadcast %52 : vector<2x8x1xf32> to vector<2x8x8xf32>
    %54 = arith.mulf %51, %53 : vector<2x8x8xf32>
    %55 = vector.extract_strided_slice %34 {offsets = [0, 0, 8], sizes = [2, 8, 8], strides = [1, 1, 1]} : vector<2x8x96xf32> to vector<2x8x8xf32>
    %56 = arith.truncf %55 : vector<2x8x8xf32> to vector<2x8x8xbf16>
    %57 = vector.extract_strided_slice %34 {offsets = [0, 0, 40], sizes = [2, 8, 8], strides = [1, 1, 1]} : vector<2x8x96xf32> to vector<2x8x8xf32>
    %58 = arith.truncf %57 : vector<2x8x8xf32> to vector<2x8x8xbf16>
    %59 = vector.extract_strided_slice %34 {offsets = [0, 0, 72], sizes = [2, 8, 8], strides = [1, 1, 1]} : vector<2x8x96xf32> to vector<2x8x8xf32>
    %60 = arith.truncf %59 : vector<2x8x8xf32> to vector<2x8x8xbf16>
    "tpu.trace_start"() <{level = 10 : i32, message = "bqd,bkd->bqk"}> : () -> ()
    %cst_23 = arith.constant dense<0.000000e+00> : vector<2x8x8xf32>
    %61 = tpu.matmul %56, %58, %cst_23 {dimension_numbers = #tpu.dot_dimension_numbers<[2], [2], [1], [1], [0, 0, 0, 1, 1, 1], [0], [0]>} : vector<2x8x8xbf16>, vector<2x8x8xbf16>, vector<2x8x8xf32> -> vector<2x8x8xf32>
    "tpu.trace_stop"() : () -> ()
    %62 = arith.addf %61, %25 : vector<2x8x8xf32>
    %cst_24 = arith.constant dense<0xFF800000> : vector<2x8xf32>
    %63 = vector.multi_reduction <maximumf>, %62, %cst_24 [2] : vector<2x8x8xf32> to vector<2x8xf32>
    %64 = vector.shape_cast %63 : vector<2x8xf32> to vector<2x8x1xf32>
    %65 = vector.broadcast %64 : vector<2x8x1xf32> to vector<2x8x8xf32>
    %66 = arith.subf %62, %65 : vector<2x8x8xf32>
    %67 = math.exp %66 : vector<2x8x8xf32>
    %cst_25 = arith.constant dense<0.000000e+00> : vector<2x8xf32>
    %68 = vector.multi_reduction <add>, %67, %cst_25 [2] : vector<2x8x8xf32> to vector<2x8xf32>
    %69 = vector.shape_cast %68 : vector<2x8xf32> to vector<2x8x1xf32>
    %70 = arith.truncf %67 : vector<2x8x8xf32> to vector<2x8x8xbf16>
    "tpu.trace_start"() <{level = 10 : i32, message = "bqk,bkd->bqd"}> : () -> ()
    %cst_26 = arith.constant dense<0.000000e+00> : vector<2x8x8xf32>
    %71 = tpu.matmul %70, %60, %cst_26 {dimension_numbers = #tpu.dot_dimension_numbers<[2], [1], [1], [2], [0, 0, 0, 1, 1, 2], [0], [0]>} : vector<2x8x8xbf16>, vector<2x8x8xbf16>, vector<2x8x8xf32> -> vector<2x8x8xf32>
    "tpu.trace_stop"() : () -> ()
    %72 = tpu.reciprocal %69 {approx = true} : vector<2x8x1xf32> -> vector<2x8x1xf32>
    %73 = vector.broadcast %72 : vector<2x8x1xf32> to vector<2x8x8xf32>
    %74 = arith.mulf %71, %73 : vector<2x8x8xf32>
    %75 = vector.extract_strided_slice %34 {offsets = [0, 0, 16], sizes = [2, 8, 8], strides = [1, 1, 1]} : vector<2x8x96xf32> to vector<2x8x8xf32>
    %76 = arith.truncf %75 : vector<2x8x8xf32> to vector<2x8x8xbf16>
    %77 = vector.extract_strided_slice %34 {offsets = [0, 0, 48], sizes = [2, 8, 8], strides = [1, 1, 1]} : vector<2x8x96xf32> to vector<2x8x8xf32>
    %78 = arith.truncf %77 : vector<2x8x8xf32> to vector<2x8x8xbf16>
    %79 = vector.extract_strided_slice %34 {offsets = [0, 0, 80], sizes = [2, 8, 8], strides = [1, 1, 1]} : vector<2x8x96xf32> to vector<2x8x8xf32>
    %80 = arith.truncf %79 : vector<2x8x8xf32> to vector<2x8x8xbf16>
    "tpu.trace_start"() <{level = 10 : i32, message = "bqd,bkd->bqk"}> : () -> ()
    %cst_27 = arith.constant dense<0.000000e+00> : vector<2x8x8xf32>
    %81 = tpu.matmul %76, %78, %cst_27 {dimension_numbers = #tpu.dot_dimension_numbers<[2], [2], [1], [1], [0, 0, 0, 1, 1, 1], [0], [0]>} : vector<2x8x8xbf16>, vector<2x8x8xbf16>, vector<2x8x8xf32> -> vector<2x8x8xf32>
    "tpu.trace_stop"() : () -> ()
    %82 = arith.addf %81, %25 : vector<2x8x8xf32>
    %cst_28 = arith.constant dense<0xFF800000> : vector<2x8xf32>
    %83 = vector.multi_reduction <maximumf>, %82, %cst_28 [2] : vector<2x8x8xf32> to vector<2x8xf32>
    %84 = vector.shape_cast %83 : vector<2x8xf32> to vector<2x8x1xf32>
    %85 = vector.broadcast %84 : vector<2x8x1xf32> to vector<2x8x8xf32>
    %86 = arith.subf %82, %85 : vector<2x8x8xf32>
    %87 = math.exp %86 : vector<2x8x8xf32>
    %cst_29 = arith.constant dense<0.000000e+00> : vector<2x8xf32>
    %88 = vector.multi_reduction <add>, %87, %cst_29 [2] : vector<2x8x8xf32> to vector<2x8xf32>
    %89 = vector.shape_cast %88 : vector<2x8xf32> to vector<2x8x1xf32>
    %90 = arith.truncf %87 : vector<2x8x8xf32> to vector<2x8x8xbf16>
    "tpu.trace_start"() <{level = 10 : i32, message = "bqk,bkd->bqd"}> : () -> ()
    %cst_30 = arith.constant dense<0.000000e+00> : vector<2x8x8xf32>
    %91 = tpu.matmul %90, %80, %cst_30 {dimension_numbers = #tpu.dot_dimension_numbers<[2], [1], [1], [2], [0, 0, 0, 1, 1, 2], [0], [0]>} : vector<2x8x8xbf16>, vector<2x8x8xbf16>, vector<2x8x8xf32> -> vector<2x8x8xf32>
    "tpu.trace_stop"() : () -> ()
    %92 = tpu.reciprocal %89 {approx = true} : vector<2x8x1xf32> -> vector<2x8x1xf32>
    %93 = vector.broadcast %92 : vector<2x8x1xf32> to vector<2x8x8xf32>
    %94 = arith.mulf %91, %93 : vector<2x8x8xf32>
    %95 = vector.extract_strided_slice %34 {offsets = [0, 0, 24], sizes = [2, 8, 8], strides = [1, 1, 1]} : vector<2x8x96xf32> to vector<2x8x8xf32>
    %96 = arith.truncf %95 : vector<2x8x8xf32> to vector<2x8x8xbf16>
    %97 = vector.extract_strided_slice %34 {offsets = [0, 0, 56], sizes = [2, 8, 8], strides = [1, 1, 1]} : vector<2x8x96xf32> to vector<2x8x8xf32>
    %98 = arith.truncf %97 : vector<2x8x8xf32> to vector<2x8x8xbf16>
    %99 = vector.extract_strided_slice %34 {offsets = [0, 0, 88], sizes = [2, 8, 8], strides = [1, 1, 1]} : vector<2x8x96xf32> to vector<2x8x8xf32>
    %100 = arith.truncf %99 : vector<2x8x8xf32> to vector<2x8x8xbf16>
    "tpu.trace_start"() <{level = 10 : i32, message = "bqd,bkd->bqk"}> : () -> ()
    %cst_31 = arith.constant dense<0.000000e+00> : vector<2x8x8xf32>
    %101 = tpu.matmul %96, %98, %cst_31 {dimension_numbers = #tpu.dot_dimension_numbers<[2], [2], [1], [1], [0, 0, 0, 1, 1, 1], [0], [0]>} : vector<2x8x8xbf16>, vector<2x8x8xbf16>, vector<2x8x8xf32> -> vector<2x8x8xf32>
    "tpu.trace_stop"() : () -> ()
    %102 = arith.addf %101, %25 : vector<2x8x8xf32>
    %cst_32 = arith.constant dense<0xFF800000> : vector<2x8xf32>
    %103 = vector.multi_reduction <maximumf>, %102, %cst_32 [2] : vector<2x8x8xf32> to vector<2x8xf32>
    %104 = vector.shape_cast %103 : vector<2x8xf32> to vector<2x8x1xf32>
    %105 = vector.broadcast %104 : vector<2x8x1xf32> to vector<2x8x8xf32>
    %106 = arith.subf %102, %105 : vector<2x8x8xf32>
    %107 = math.exp %106 : vector<2x8x8xf32>
    %cst_33 = arith.constant dense<0.000000e+00> : vector<2x8xf32>
    %108 = vector.multi_reduction <add>, %107, %cst_33 [2] : vector<2x8x8xf32> to vector<2x8xf32>
    %109 = vector.shape_cast %108 : vector<2x8xf32> to vector<2x8x1xf32>
    %110 = arith.truncf %107 : vector<2x8x8xf32> to vector<2x8x8xbf16>
    "tpu.trace_start"() <{level = 10 : i32, message = "bqk,bkd->bqd"}> : () -> ()
    %cst_34 = arith.constant dense<0.000000e+00> : vector<2x8x8xf32>
    %111 = tpu.matmul %110, %100, %cst_34 {dimension_numbers = #tpu.dot_dimension_numbers<[2], [1], [1], [2], [0, 0, 0, 1, 1, 2], [0], [0]>} : vector<2x8x8xbf16>, vector<2x8x8xbf16>, vector<2x8x8xf32> -> vector<2x8x8xf32>
    "tpu.trace_stop"() : () -> ()
    %112 = tpu.reciprocal %109 {approx = true} : vector<2x8x1xf32> -> vector<2x8x1xf32>
    %113 = vector.broadcast %112 : vector<2x8x1xf32> to vector<2x8x8xf32>
    %114 = arith.mulf %111, %113 : vector<2x8x8xf32>
    %115 = tpu.concatenate %54, %74, %94, %114 in 2 : vector<2x8x8xf32>, vector<2x8x8xf32>, vector<2x8x8xf32>, vector<2x8x8xf32> -> vector<2x8x32xf32>
    %116 = vector.shape_cast %115 : vector<2x8x32xf32> to vector<16x32xf32>
    %c0_35 = arith.constant 0 : index
    %c0_36 = arith.constant 0 : index
    %c0_37 = arith.constant 0 : index
    %117 = vector.load %arg6[%c0_35, %c0_36, %c0_37] : memref<2x32x32xbf16, #tpu.memory_space<vmem>>, vector<1x32x32xbf16>
    %118 = vector.shape_cast %117 : vector<1x32x32xbf16> to vector<32x32xbf16>
    %119 = arith.truncf %116 : vector<16x32xf32> to vector<16x32xbf16>
    %cst_38 = arith.constant dense<0.000000e+00> : vector<16x32xf32>
    %120 = tpu.matmul %119, %118, %cst_38 {dimension_numbers = #tpu.dot_dimension_numbers<[1], [0], [0], [1], [0, 0, 1, 1], [], []>} : vector<16x32xbf16>, vector<32x32xbf16>, vector<16x32xf32> -> vector<16x32xf32>
    %c0_39 = arith.constant 0 : index
    %c0_40 = arith.constant 0 : index
    %c0_41 = arith.constant 0 : index
    %121 = vector.load %arg7[%c0_39, %c0_40, %c0_41] : memref<2x1x32xf32, #tpu.memory_space<vmem>>, vector<1x1x32xf32>
    %122 = vector.shape_cast %121 : vector<1x1x32xf32> to vector<1x32xf32>
    %123 = vector.broadcast %122 : vector<1x32xf32> to vector<16x32xf32>
    %124 = arith.addf %120, %123 : vector<16x32xf32>
    %125 = arith.addf %124, %24 : vector<16x32xf32>
    %c0_42 = arith.constant 0 : index
    %c0_43 = arith.constant 0 : index
    %c0_44 = arith.constant 0 : index
    %126 = vector.load %arg8[%c0_42, %c0_43, %c0_44] : memref<2x1x32xf32, #tpu.memory_space<vmem>>, vector<1x1x32xf32>
    %127 = vector.shape_cast %126 : vector<1x1x32xf32> to vector<1x32xf32>
    %c0_45 = arith.constant 0 : index
    %c0_46 = arith.constant 0 : index
    %c0_47 = arith.constant 0 : index
    %128 = vector.load %arg9[%c0_45, %c0_46, %c0_47] : memref<2x1x32xf32, #tpu.memory_space<vmem>>, vector<1x1x32xf32>
    %129 = vector.shape_cast %128 : vector<1x1x32xf32> to vector<1x32xf32>
    %cst_48 = arith.constant dense<0.000000e+00> : vector<16xf32>
    %130 = vector.multi_reduction <add>, %125, %cst_48 [1] : vector<16x32xf32> to vector<16xf32>
    %131 = vector.shape_cast %130 : vector<16xf32> to vector<16x1xf32>
    %cst_49 = arith.constant 3.200000e+01 : f32
    %132 = vector.broadcast %cst_49 : f32 to vector<16x1xf32>
    %133 = arith.divf %131, %132 : vector<16x1xf32>
    %134 = vector.broadcast %133 : vector<16x1xf32> to vector<16x32xf32>
    %135 = arith.subf %125, %134 : vector<16x32xf32>
    %136 = arith.mulf %135, %135 : vector<16x32xf32>
    %cst_50 = arith.constant dense<0.000000e+00> : vector<16xf32>
    %137 = vector.multi_reduction <add>, %136, %cst_50 [1] : vector<16x32xf32> to vector<16xf32>
    %138 = vector.shape_cast %137 : vector<16xf32> to vector<16x1xf32>
    %cst_51 = arith.constant 3.200000e+01 : f32
    %139 = vector.broadcast %cst_51 : f32 to vector<16x1xf32>
    %140 = arith.divf %138, %139 : vector<16x1xf32>
    %141 = vector.broadcast %133 : vector<16x1xf32> to vector<16x32xf32>
    %142 = arith.subf %125, %141 : vector<16x32xf32>
    %cst_52 = arith.constant 9.99999996E-13 : f32
    %143 = vector.broadcast %cst_52 : f32 to vector<16x1xf32>
    %144 = arith.addf %140, %143 : vector<16x1xf32>
    %145 = math.rsqrt %144 : vector<16x1xf32>
    %146 = vector.broadcast %145 : vector<16x1xf32> to vector<16x32xf32>
    %147 = arith.mulf %142, %146 : vector<16x32xf32>
    %148 = vector.broadcast %127 : vector<1x32xf32> to vector<16x32xf32>
    %149 = arith.mulf %147, %148 : vector<16x32xf32>
    %150 = vector.broadcast %129 : vector<1x32xf32> to vector<16x32xf32>
    %151 = arith.addf %149, %150 : vector<16x32xf32>
    %c0_53 = arith.constant 0 : index
    %c0_54 = arith.constant 0 : index
    %c0_55 = arith.constant 0 : index
    %152 = vector.load %arg10[%c0_53, %c0_54, %c0_55] : memref<2x32x64xbf16, #tpu.memory_space<vmem>>, vector<1x32x64xbf16>
    %153 = vector.shape_cast %152 : vector<1x32x64xbf16> to vector<32x64xbf16>
    %154 = arith.truncf %151 : vector<16x32xf32> to vector<16x32xbf16>
    %cst_56 = arith.constant dense<0.000000e+00> : vector<16x64xf32>
    %155 = tpu.matmul %154, %153, %cst_56 {dimension_numbers = #tpu.dot_dimension_numbers<[1], [0], [0], [1], [0, 0, 1, 1], [], []>} : vector<16x32xbf16>, vector<32x64xbf16>, vector<16x64xf32> -> vector<16x64xf32>
    %c0_57 = arith.constant 0 : index
    %c0_58 = arith.constant 0 : index
    %c0_59 = arith.constant 0 : index
    %156 = vector.load %arg11[%c0_57, %c0_58, %c0_59] : memref<2x1x64xf32, #tpu.memory_space<vmem>>, vector<1x1x64xf32>
    %157 = vector.shape_cast %156 : vector<1x1x64xf32> to vector<1x64xf32>
    %158 = vector.broadcast %157 : vector<1x64xf32> to vector<16x64xf32>
    %159 = arith.addf %155, %158 : vector<16x64xf32>
    %cst_60 = arith.constant 5.000000e-01 : f32
    %160 = vector.broadcast %cst_60 : f32 to vector<16x64xf32>
    %161 = arith.mulf %160, %159 : vector<16x64xf32>
    %cst_61 = arith.constant 4.471500e-02 : f32
    %162 = vector.broadcast %cst_61 : f32 to vector<16x64xf32>
    %163 = arith.mulf %162, %159 : vector<16x64xf32>
    %164 = arith.mulf %163, %159 : vector<16x64xf32>
    %165 = arith.mulf %164, %159 : vector<16x64xf32>
    %166 = arith.addf %159, %165 : vector<16x64xf32>
    %cst_62 = arith.constant 0.797884583 : f32
    %167 = vector.broadcast %cst_62 : f32 to vector<16x64xf32>
    %168 = arith.mulf %167, %166 : vector<16x64xf32>
    %169 = math.tanh %168 : vector<16x64xf32>
    %cst_63 = arith.constant 1.000000e+00 : f32
    %170 = vector.broadcast %cst_63 : f32 to vector<16x64xf32>
    %171 = arith.addf %170, %169 : vector<16x64xf32>
    %172 = arith.mulf %161, %171 : vector<16x64xf32>
    %c0_64 = arith.constant 0 : index
    %c0_65 = arith.constant 0 : index
    %c0_66 = arith.constant 0 : index
    %173 = vector.load %arg12[%c0_64, %c0_65, %c0_66] : memref<2x64x32xbf16, #tpu.memory_space<vmem>>, vector<1x64x32xbf16>
    %174 = vector.shape_cast %173 : vector<1x64x32xbf16> to vector<64x32xbf16>
    %175 = arith.truncf %172 : vector<16x64xf32> to vector<16x64xbf16>
    %cst_67 = arith.constant dense<0.000000e+00> : vector<16x32xf32>
    %176 = tpu.matmul %175, %174, %cst_67 {dimension_numbers = #tpu.dot_dimension_numbers<[1], [0], [0], [1], [0, 0, 1, 1], [], []>} : vector<16x64xbf16>, vector<64x32xbf16>, vector<16x32xf32> -> vector<16x32xf32>
    %c0_68 = arith.constant 0 : index
    %c0_69 = arith.constant 0 : index
    %c0_70 = arith.constant 0 : index
    %177 = vector.load %arg13[%c0_68, %c0_69, %c0_70] : memref<2x1x32xf32, #tpu.memory_space<vmem>>, vector<1x1x32xf32>
    %178 = vector.shape_cast %177 : vector<1x1x32xf32> to vector<1x32xf32>
    %179 = vector.broadcast %178 : vector<1x32xf32> to vector<16x32xf32>
    %180 = arith.addf %176, %179 : vector<16x32xf32>
    %181 = arith.addf %180, %151 : vector<16x32xf32>
    %c0_71 = arith.constant 0 : index
    %c0_72 = arith.constant 0 : index
    %c0_73 = arith.constant 0 : index
    %182 = vector.load %arg14[%c0_71, %c0_72, %c0_73] : memref<2x1x32xf32, #tpu.memory_space<vmem>>, vector<1x1x32xf32>
    %183 = vector.shape_cast %182 : vector<1x1x32xf32> to vector<1x32xf32>
    %c0_74 = arith.constant 0 : index
    %c0_75 = arith.constant 0 : index
    %c0_76 = arith.constant 0 : index
    %184 = vector.load %arg15[%c0_74, %c0_75, %c0_76] : memref<2x1x32xf32, #tpu.memory_space<vmem>>, vector<1x1x32xf32>
    %185 = vector.shape_cast %184 : vector<1x1x32xf32> to vector<1x32xf32>
    %cst_77 = arith.constant dense<0.000000e+00> : vector<16xf32>
    %186 = vector.multi_reduction <add>, %181, %cst_77 [1] : vector<16x32xf32> to vector<16xf32>
    %187 = vector.shape_cast %186 : vector<16xf32> to vector<16x1xf32>
    %cst_78 = arith.constant 3.200000e+01 : f32
    %188 = vector.broadcast %cst_78 : f32 to vector<16x1xf32>
    %189 = arith.divf %187, %188 : vector<16x1xf32>
    %190 = vector.broadcast %189 : vector<16x1xf32> to vector<16x32xf32>
    %191 = arith.subf %181, %190 : vector<16x32xf32>
    %192 = arith.mulf %191, %191 : vector<16x32xf32>
    %cst_79 = arith.constant dense<0.000000e+00> : vector<16xf32>
    %193 = vector.multi_reduction <add>, %192, %cst_79 [1] : vector<16x32xf32> to vector<16xf32>
    %194 = vector.shape_cast %193 : vector<16xf32> to vector<16x1xf32>
    %cst_80 = arith.constant 3.200000e+01 : f32
    %195 = vector.broadcast %cst_80 : f32 to vector<16x1xf32>
    %196 = arith.divf %194, %195 : vector<16x1xf32>
    %197 = vector.broadcast %189 : vector<16x1xf32> to vector<16x32xf32>
    %198 = arith.subf %181, %197 : vector<16x32xf32>
    %cst_81 = arith.constant 9.99999996E-13 : f32
    %199 = vector.broadcast %cst_81 : f32 to vector<16x1xf32>
    %200 = arith.addf %196, %199 : vector<16x1xf32>
    %201 = math.rsqrt %200 : vector<16x1xf32>
    %202 = vector.broadcast %201 : vector<16x1xf32> to vector<16x32xf32>
    %203 = arith.mulf %198, %202 : vector<16x32xf32>
    %204 = vector.broadcast %183 : vector<1x32xf32> to vector<16x32xf32>
    %205 = arith.mulf %203, %204 : vector<16x32xf32>
    %206 = vector.broadcast %185 : vector<1x32xf32> to vector<16x32xf32>
    %207 = arith.addf %205, %206 : vector<16x32xf32>
    %c1 = arith.constant 1 : index
    %c0_82 = arith.constant 0 : index
    %c0_83 = arith.constant 0 : index
    %208 = vector.load %arg4[%c1, %c0_82, %c0_83] : memref<2x32x96xbf16, #tpu.memory_space<vmem>>, vector<1x32x96xbf16>
    %209 = vector.shape_cast %208 : vector<1x32x96xbf16> to vector<32x96xbf16>
    %210 = arith.truncf %207 : vector<16x32xf32> to vector<16x32xbf16>
    %cst_84 = arith.constant dense<0.000000e+00> : vector<16x96xf32>
    %211 = tpu.matmul %210, %209, %cst_84 {dimension_numbers = #tpu.dot_dimension_numbers<[1], [0], [0], [1], [0, 0, 1, 1], [], []>} : vector<16x32xbf16>, vector<32x96xbf16>, vector<16x96xf32> -> vector<16x96xf32>
    %c1_85 = arith.constant 1 : index
    %c0_86 = arith.constant 0 : index
    %c0_87 = arith.constant 0 : index
    %212 = vector.load %arg5[%c1_85, %c0_86, %c0_87] : memref<2x1x96xf32, #tpu.memory_space<vmem>>, vector<1x1x96xf32>
    %213 = vector.shape_cast %212 : vector<1x1x96xf32> to vector<1x96xf32>
    %214 = vector.broadcast %213 : vector<1x96xf32> to vector<16x96xf32>
    %215 = arith.addf %211, %214 : vector<16x96xf32>
    %216 = vector.shape_cast %215 : vector<16x96xf32> to vector<2x8x96xf32>
    %217 = vector.extract_strided_slice %216 {offsets = [0, 0, 0], sizes = [2, 8, 8], strides = [1, 1, 1]} : vector<2x8x96xf32> to vector<2x8x8xf32>
    %218 = arith.truncf %217 : vector<2x8x8xf32> to vector<2x8x8xbf16>
    %219 = vector.extract_strided_slice %216 {offsets = [0, 0, 32], sizes = [2, 8, 8], strides = [1, 1, 1]} : vector<2x8x96xf32> to vector<2x8x8xf32>
    %220 = arith.truncf %219 : vector<2x8x8xf32> to vector<2x8x8xbf16>
    %221 = vector.extract_strided_slice %216 {offsets = [0, 0, 64], sizes = [2, 8, 8], strides = [1, 1, 1]} : vector<2x8x96xf32> to vector<2x8x8xf32>
    %222 = arith.truncf %221 : vector<2x8x8xf32> to vector<2x8x8xbf16>
    "tpu.trace_start"() <{level = 10 : i32, message = "bqd,bkd->bqk"}> : () -> ()
    %cst_88 = arith.constant dense<0.000000e+00> : vector<2x8x8xf32>
    %223 = tpu.matmul %218, %220, %cst_88 {dimension_numbers = #tpu.dot_dimension_numbers<[2], [2], [1], [1], [0, 0, 0, 1, 1, 1], [0], [0]>} : vector<2x8x8xbf16>, vector<2x8x8xbf16>, vector<2x8x8xf32> -> vector<2x8x8xf32>
    "tpu.trace_stop"() : () -> ()
    %224 = arith.addf %223, %25 : vector<2x8x8xf32>
    %cst_89 = arith.constant dense<0xFF800000> : vector<2x8xf32>
    %225 = vector.multi_reduction <maximumf>, %224, %cst_89 [2] : vector<2x8x8xf32> to vector<2x8xf32>
    %226 = vector.shape_cast %225 : vector<2x8xf32> to vector<2x8x1xf32>
    %227 = vector.broadcast %226 : vector<2x8x1xf32> to vector<2x8x8xf32>
    %228 = arith.subf %224, %227 : vector<2x8x8xf32>
    %229 = math.exp %228 : vector<2x8x8xf32>
    %cst_90 = arith.constant dense<0.000000e+00> : vector<2x8xf32>
    %230 = vector.multi_reduction <add>, %229, %cst_90 [2] : vector<2x8x8xf32> to vector<2x8xf32>
    %231 = vector.shape_cast %230 : vector<2x8xf32> to vector<2x8x1xf32>
    %232 = arith.truncf %229 : vector<2x8x8xf32> to vector<2x8x8xbf16>
    "tpu.trace_start"() <{level = 10 : i32, message = "bqk,bkd->bqd"}> : () -> ()
    %cst_91 = arith.constant dense<0.000000e+00> : vector<2x8x8xf32>
    %233 = tpu.matmul %232, %222, %cst_91 {dimension_numbers = #tpu.dot_dimension_numbers<[2], [1], [1], [2], [0, 0, 0, 1, 1, 2], [0], [0]>} : vector<2x8x8xbf16>, vector<2x8x8xbf16>, vector<2x8x8xf32> -> vector<2x8x8xf32>
    "tpu.trace_stop"() : () -> ()
    %234 = tpu.reciprocal %231 {approx = true} : vector<2x8x1xf32> -> vector<2x8x1xf32>
    %235 = vector.broadcast %234 : vector<2x8x1xf32> to vector<2x8x8xf32>
    %236 = arith.mulf %233, %235 : vector<2x8x8xf32>
    %237 = vector.extract_strided_slice %216 {offsets = [0, 0, 8], sizes = [2, 8, 8], strides = [1, 1, 1]} : vector<2x8x96xf32> to vector<2x8x8xf32>
    %238 = arith.truncf %237 : vector<2x8x8xf32> to vector<2x8x8xbf16>
    %239 = vector.extract_strided_slice %216 {offsets = [0, 0, 40], sizes = [2, 8, 8], strides = [1, 1, 1]} : vector<2x8x96xf32> to vector<2x8x8xf32>
    %240 = arith.truncf %239 : vector<2x8x8xf32> to vector<2x8x8xbf16>
    %241 = vector.extract_strided_slice %216 {offsets = [0, 0, 72], sizes = [2, 8, 8], strides = [1, 1, 1]} : vector<2x8x96xf32> to vector<2x8x8xf32>
    %242 = arith.truncf %241 : vector<2x8x8xf32> to vector<2x8x8xbf16>
    "tpu.trace_start"() <{level = 10 : i32, message = "bqd,bkd->bqk"}> : () -> ()
    %cst_92 = arith.constant dense<0.000000e+00> : vector<2x8x8xf32>
    %243 = tpu.matmul %238, %240, %cst_92 {dimension_numbers = #tpu.dot_dimension_numbers<[2], [2], [1], [1], [0, 0, 0, 1, 1, 1], [0], [0]>} : vector<2x8x8xbf16>, vector<2x8x8xbf16>, vector<2x8x8xf32> -> vector<2x8x8xf32>
    "tpu.trace_stop"() : () -> ()
    %244 = arith.addf %243, %25 : vector<2x8x8xf32>
    %cst_93 = arith.constant dense<0xFF800000> : vector<2x8xf32>
    %245 = vector.multi_reduction <maximumf>, %244, %cst_93 [2] : vector<2x8x8xf32> to vector<2x8xf32>
    %246 = vector.shape_cast %245 : vector<2x8xf32> to vector<2x8x1xf32>
    %247 = vector.broadcast %246 : vector<2x8x1xf32> to vector<2x8x8xf32>
    %248 = arith.subf %244, %247 : vector<2x8x8xf32>
    %249 = math.exp %248 : vector<2x8x8xf32>
    %cst_94 = arith.constant dense<0.000000e+00> : vector<2x8xf32>
    %250 = vector.multi_reduction <add>, %249, %cst_94 [2] : vector<2x8x8xf32> to vector<2x8xf32>
    %251 = vector.shape_cast %250 : vector<2x8xf32> to vector<2x8x1xf32>
    %252 = arith.truncf %249 : vector<2x8x8xf32> to vector<2x8x8xbf16>
    "tpu.trace_start"() <{level = 10 : i32, message = "bqk,bkd->bqd"}> : () -> ()
    %cst_95 = arith.constant dense<0.000000e+00> : vector<2x8x8xf32>
    %253 = tpu.matmul %252, %242, %cst_95 {dimension_numbers = #tpu.dot_dimension_numbers<[2], [1], [1], [2], [0, 0, 0, 1, 1, 2], [0], [0]>} : vector<2x8x8xbf16>, vector<2x8x8xbf16>, vector<2x8x8xf32> -> vector<2x8x8xf32>
    "tpu.trace_stop"() : () -> ()
    %254 = tpu.reciprocal %251 {approx = true} : vector<2x8x1xf32> -> vector<2x8x1xf32>
    %255 = vector.broadcast %254 : vector<2x8x1xf32> to vector<2x8x8xf32>
    %256 = arith.mulf %253, %255 : vector<2x8x8xf32>
    %257 = vector.extract_strided_slice %216 {offsets = [0, 0, 16], sizes = [2, 8, 8], strides = [1, 1, 1]} : vector<2x8x96xf32> to vector<2x8x8xf32>
    %258 = arith.truncf %257 : vector<2x8x8xf32> to vector<2x8x8xbf16>
    %259 = vector.extract_strided_slice %216 {offsets = [0, 0, 48], sizes = [2, 8, 8], strides = [1, 1, 1]} : vector<2x8x96xf32> to vector<2x8x8xf32>
    %260 = arith.truncf %259 : vector<2x8x8xf32> to vector<2x8x8xbf16>
    %261 = vector.extract_strided_slice %216 {offsets = [0, 0, 80], sizes = [2, 8, 8], strides = [1, 1, 1]} : vector<2x8x96xf32> to vector<2x8x8xf32>
    %262 = arith.truncf %261 : vector<2x8x8xf32> to vector<2x8x8xbf16>
    "tpu.trace_start"() <{level = 10 : i32, message = "bqd,bkd->bqk"}> : () -> ()
    %cst_96 = arith.constant dense<0.000000e+00> : vector<2x8x8xf32>
    %263 = tpu.matmul %258, %260, %cst_96 {dimension_numbers = #tpu.dot_dimension_numbers<[2], [2], [1], [1], [0, 0, 0, 1, 1, 1], [0], [0]>} : vector<2x8x8xbf16>, vector<2x8x8xbf16>, vector<2x8x8xf32> -> vector<2x8x8xf32>
    "tpu.trace_stop"() : () -> ()
    %264 = arith.addf %263, %25 : vector<2x8x8xf32>
    %cst_97 = arith.constant dense<0xFF800000> : vector<2x8xf32>
    %265 = vector.multi_reduction <maximumf>, %264, %cst_97 [2] : vector<2x8x8xf32> to vector<2x8xf32>
    %266 = vector.shape_cast %265 : vector<2x8xf32> to vector<2x8x1xf32>
    %267 = vector.broadcast %266 : vector<2x8x1xf32> to vector<2x8x8xf32>
    %268 = arith.subf %264, %267 : vector<2x8x8xf32>
    %269 = math.exp %268 : vector<2x8x8xf32>
    %cst_98 = arith.constant dense<0.000000e+00> : vector<2x8xf32>
    %270 = vector.multi_reduction <add>, %269, %cst_98 [2] : vector<2x8x8xf32> to vector<2x8xf32>
    %271 = vector.shape_cast %270 : vector<2x8xf32> to vector<2x8x1xf32>
    %272 = arith.truncf %269 : vector<2x8x8xf32> to vector<2x8x8xbf16>
    "tpu.trace_start"() <{level = 10 : i32, message = "bqk,bkd->bqd"}> : () -> ()
    %cst_99 = arith.constant dense<0.000000e+00> : vector<2x8x8xf32>
    %273 = tpu.matmul %272, %262, %cst_99 {dimension_numbers = #tpu.dot_dimension_numbers<[2], [1], [1], [2], [0, 0, 0, 1, 1, 2], [0], [0]>} : vector<2x8x8xbf16>, vector<2x8x8xbf16>, vector<2x8x8xf32> -> vector<2x8x8xf32>
    "tpu.trace_stop"() : () -> ()
    %274 = tpu.reciprocal %271 {approx = true} : vector<2x8x1xf32> -> vector<2x8x1xf32>
    %275 = vector.broadcast %274 : vector<2x8x1xf32> to vector<2x8x8xf32>
    %276 = arith.mulf %273, %275 : vector<2x8x8xf32>
    %277 = vector.extract_strided_slice %216 {offsets = [0, 0, 24], sizes = [2, 8, 8], strides = [1, 1, 1]} : vector<2x8x96xf32> to vector<2x8x8xf32>
    %278 = arith.truncf %277 : vector<2x8x8xf32> to vector<2x8x8xbf16>
    %279 = vector.extract_strided_slice %216 {offsets = [0, 0, 56], sizes = [2, 8, 8], strides = [1, 1, 1]} : vector<2x8x96xf32> to vector<2x8x8xf32>
    %280 = arith.truncf %279 : vector<2x8x8xf32> to vector<2x8x8xbf16>
    %281 = vector.extract_strided_slice %216 {offsets = [0, 0, 88], sizes = [2, 8, 8], strides = [1, 1, 1]} : vector<2x8x96xf32> to vector<2x8x8xf32>
    %282 = arith.truncf %281 : vector<2x8x8xf32> to vector<2x8x8xbf16>
    "tpu.trace_start"() <{level = 10 : i32, message = "bqd,bkd->bqk"}> : () -> ()
    %cst_100 = arith.constant dense<0.000000e+00> : vector<2x8x8xf32>
    %283 = tpu.matmul %278, %280, %cst_100 {dimension_numbers = #tpu.dot_dimension_numbers<[2], [2], [1], [1], [0, 0, 0, 1, 1, 1], [0], [0]>} : vector<2x8x8xbf16>, vector<2x8x8xbf16>, vector<2x8x8xf32> -> vector<2x8x8xf32>
    "tpu.trace_stop"() : () -> ()
    %284 = arith.addf %283, %25 : vector<2x8x8xf32>
    %cst_101 = arith.constant dense<0xFF800000> : vector<2x8xf32>
    %285 = vector.multi_reduction <maximumf>, %284, %cst_101 [2] : vector<2x8x8xf32> to vector<2x8xf32>
    %286 = vector.shape_cast %285 : vector<2x8xf32> to vector<2x8x1xf32>
    %287 = vector.broadcast %286 : vector<2x8x1xf32> to vector<2x8x8xf32>
    %288 = arith.subf %284, %287 : vector<2x8x8xf32>
    %289 = math.exp %288 : vector<2x8x8xf32>
    %cst_102 = arith.constant dense<0.000000e+00> : vector<2x8xf32>
    %290 = vector.multi_reduction <add>, %289, %cst_102 [2] : vector<2x8x8xf32> to vector<2x8xf32>
    %291 = vector.shape_cast %290 : vector<2x8xf32> to vector<2x8x1xf32>
    %292 = arith.truncf %289 : vector<2x8x8xf32> to vector<2x8x8xbf16>
    "tpu.trace_start"() <{level = 10 : i32, message = "bqk,bkd->bqd"}> : () -> ()
    %cst_103 = arith.constant dense<0.000000e+00> : vector<2x8x8xf32>
    %293 = tpu.matmul %292, %282, %cst_103 {dimension_numbers = #tpu.dot_dimension_numbers<[2], [1], [1], [2], [0, 0, 0, 1, 1, 2], [0], [0]>} : vector<2x8x8xbf16>, vector<2x8x8xbf16>, vector<2x8x8xf32> -> vector<2x8x8xf32>
    "tpu.trace_stop"() : () -> ()
    %294 = tpu.reciprocal %291 {approx = true} : vector<2x8x1xf32> -> vector<2x8x1xf32>
    %295 = vector.broadcast %294 : vector<2x8x1xf32> to vector<2x8x8xf32>
    %296 = arith.mulf %293, %295 : vector<2x8x8xf32>
    %297 = tpu.concatenate %236, %256, %276, %296 in 2 : vector<2x8x8xf32>, vector<2x8x8xf32>, vector<2x8x8xf32>, vector<2x8x8xf32> -> vector<2x8x32xf32>
    %298 = vector.shape_cast %297 : vector<2x8x32xf32> to vector<16x32xf32>
    %c1_104 = arith.constant 1 : index
    %c0_105 = arith.constant 0 : index
    %c0_106 = arith.constant 0 : index
    %299 = vector.load %arg6[%c1_104, %c0_105, %c0_106] : memref<2x32x32xbf16, #tpu.memory_space<vmem>>, vector<1x32x32xbf16>
    %300 = vector.shape_cast %299 : vector<1x32x32xbf16> to vector<32x32xbf16>
    %301 = arith.truncf %298 : vector<16x32xf32> to vector<16x32xbf16>
    %cst_107 = arith.constant dense<0.000000e+00> : vector<16x32xf32>
    %302 = tpu.matmul %301, %300, %cst_107 {dimension_numbers = #tpu.dot_dimension_numbers<[1], [0], [0], [1], [0, 0, 1, 1], [], []>} : vector<16x32xbf16>, vector<32x32xbf16>, vector<16x32xf32> -> vector<16x32xf32>
    %c1_108 = arith.constant 1 : index
    %c0_109 = arith.constant 0 : index
    %c0_110 = arith.constant 0 : index
    %303 = vector.load %arg7[%c1_108, %c0_109, %c0_110] : memref<2x1x32xf32, #tpu.memory_space<vmem>>, vector<1x1x32xf32>
    %304 = vector.shape_cast %303 : vector<1x1x32xf32> to vector<1x32xf32>
    %305 = vector.broadcast %304 : vector<1x32xf32> to vector<16x32xf32>
    %306 = arith.addf %302, %305 : vector<16x32xf32>
    %307 = arith.addf %306, %207 : vector<16x32xf32>
    %c1_111 = arith.constant 1 : index
    %c0_112 = arith.constant 0 : index
    %c0_113 = arith.constant 0 : index
    %308 = vector.load %arg8[%c1_111, %c0_112, %c0_113] : memref<2x1x32xf32, #tpu.memory_space<vmem>>, vector<1x1x32xf32>
    %309 = vector.shape_cast %308 : vector<1x1x32xf32> to vector<1x32xf32>
    %c1_114 = arith.constant 1 : index
    %c0_115 = arith.constant 0 : index
    %c0_116 = arith.constant 0 : index
    %310 = vector.load %arg9[%c1_114, %c0_115, %c0_116] : memref<2x1x32xf32, #tpu.memory_space<vmem>>, vector<1x1x32xf32>
    %311 = vector.shape_cast %310 : vector<1x1x32xf32> to vector<1x32xf32>
    %cst_117 = arith.constant dense<0.000000e+00> : vector<16xf32>
    %312 = vector.multi_reduction <add>, %307, %cst_117 [1] : vector<16x32xf32> to vector<16xf32>
    %313 = vector.shape_cast %312 : vector<16xf32> to vector<16x1xf32>
    %cst_118 = arith.constant 3.200000e+01 : f32
    %314 = vector.broadcast %cst_118 : f32 to vector<16x1xf32>
    %315 = arith.divf %313, %314 : vector<16x1xf32>
    %316 = vector.broadcast %315 : vector<16x1xf32> to vector<16x32xf32>
    %317 = arith.subf %307, %316 : vector<16x32xf32>
    %318 = arith.mulf %317, %317 : vector<16x32xf32>
    %cst_119 = arith.constant dense<0.000000e+00> : vector<16xf32>
    %319 = vector.multi_reduction <add>, %318, %cst_119 [1] : vector<16x32xf32> to vector<16xf32>
    %320 = vector.shape_cast %319 : vector<16xf32> to vector<16x1xf32>
    %cst_120 = arith.constant 3.200000e+01 : f32
    %321 = vector.broadcast %cst_120 : f32 to vector<16x1xf32>
    %322 = arith.divf %320, %321 : vector<16x1xf32>
    %323 = vector.broadcast %315 : vector<16x1xf32> to vector<16x32xf32>
    %324 = arith.subf %307, %323 : vector<16x32xf32>
    %cst_121 = arith.constant 9.99999996E-13 : f32
    %325 = vector.broadcast %cst_121 : f32 to vector<16x1xf32>
    %326 = arith.addf %322, %325 : vector<16x1xf32>
    %327 = math.rsqrt %326 : vector<16x1xf32>
    %328 = vector.broadcast %327 : vector<16x1xf32> to vector<16x32xf32>
    %329 = arith.mulf %324, %328 : vector<16x32xf32>
    %330 = vector.broadcast %309 : vector<1x32xf32> to vector<16x32xf32>
    %331 = arith.mulf %329, %330 : vector<16x32xf32>
    %332 = vector.broadcast %311 : vector<1x32xf32> to vector<16x32xf32>
    %333 = arith.addf %331, %332 : vector<16x32xf32>
    %c1_122 = arith.constant 1 : index
    %c0_123 = arith.constant 0 : index
    %c0_124 = arith.constant 0 : index
    %334 = vector.load %arg10[%c1_122, %c0_123, %c0_124] : memref<2x32x64xbf16, #tpu.memory_space<vmem>>, vector<1x32x64xbf16>
    %335 = vector.shape_cast %334 : vector<1x32x64xbf16> to vector<32x64xbf16>
    %336 = arith.truncf %333 : vector<16x32xf32> to vector<16x32xbf16>
    %cst_125 = arith.constant dense<0.000000e+00> : vector<16x64xf32>
    %337 = tpu.matmul %336, %335, %cst_125 {dimension_numbers = #tpu.dot_dimension_numbers<[1], [0], [0], [1], [0, 0, 1, 1], [], []>} : vector<16x32xbf16>, vector<32x64xbf16>, vector<16x64xf32> -> vector<16x64xf32>
    %c1_126 = arith.constant 1 : index
    %c0_127 = arith.constant 0 : index
    %c0_128 = arith.constant 0 : index
    %338 = vector.load %arg11[%c1_126, %c0_127, %c0_128] : memref<2x1x64xf32, #tpu.memory_space<vmem>>, vector<1x1x64xf32>
    %339 = vector.shape_cast %338 : vector<1x1x64xf32> to vector<1x64xf32>
    %340 = vector.broadcast %339 : vector<1x64xf32> to vector<16x64xf32>
    %341 = arith.addf %337, %340 : vector<16x64xf32>
    %cst_129 = arith.constant 5.000000e-01 : f32
    %342 = vector.broadcast %cst_129 : f32 to vector<16x64xf32>
    %343 = arith.mulf %342, %341 : vector<16x64xf32>
    %cst_130 = arith.constant 4.471500e-02 : f32
    %344 = vector.broadcast %cst_130 : f32 to vector<16x64xf32>
    %345 = arith.mulf %344, %341 : vector<16x64xf32>
    %346 = arith.mulf %345, %341 : vector<16x64xf32>
    %347 = arith.mulf %346, %341 : vector<16x64xf32>
    %348 = arith.addf %341, %347 : vector<16x64xf32>
    %cst_131 = arith.constant 0.797884583 : f32
    %349 = vector.broadcast %cst_131 : f32 to vector<16x64xf32>
    %350 = arith.mulf %349, %348 : vector<16x64xf32>
    %351 = math.tanh %350 : vector<16x64xf32>
    %cst_132 = arith.constant 1.000000e+00 : f32
    %352 = vector.broadcast %cst_132 : f32 to vector<16x64xf32>
    %353 = arith.addf %352, %351 : vector<16x64xf32>
    %354 = arith.mulf %343, %353 : vector<16x64xf32>
    %c1_133 = arith.constant 1 : index
    %c0_134 = arith.constant 0 : index
    %c0_135 = arith.constant 0 : index
    %355 = vector.load %arg12[%c1_133, %c0_134, %c0_135] : memref<2x64x32xbf16, #tpu.memory_space<vmem>>, vector<1x64x32xbf16>
    %356 = vector.shape_cast %355 : vector<1x64x32xbf16> to vector<64x32xbf16>
    %357 = arith.truncf %354 : vector<16x64xf32> to vector<16x64xbf16>
    %cst_136 = arith.constant dense<0.000000e+00> : vector<16x32xf32>
    %358 = tpu.matmul %357, %356, %cst_136 {dimension_numbers = #tpu.dot_dimension_numbers<[1], [0], [0], [1], [0, 0, 1, 1], [], []>} : vector<16x64xbf16>, vector<64x32xbf16>, vector<16x32xf32> -> vector<16x32xf32>
    %c1_137 = arith.constant 1 : index
    %c0_138 = arith.constant 0 : index
    %c0_139 = arith.constant 0 : index
    %359 = vector.load %arg13[%c1_137, %c0_138, %c0_139] : memref<2x1x32xf32, #tpu.memory_space<vmem>>, vector<1x1x32xf32>
    %360 = vector.shape_cast %359 : vector<1x1x32xf32> to vector<1x32xf32>
    %361 = vector.broadcast %360 : vector<1x32xf32> to vector<16x32xf32>
    %362 = arith.addf %358, %361 : vector<16x32xf32>
    %363 = arith.addf %362, %333 : vector<16x32xf32>
    %c1_140 = arith.constant 1 : index
    %c0_141 = arith.constant 0 : index
    %c0_142 = arith.constant 0 : index
    %364 = vector.load %arg14[%c1_140, %c0_141, %c0_142] : memref<2x1x32xf32, #tpu.memory_space<vmem>>, vector<1x1x32xf32>
    %365 = vector.shape_cast %364 : vector<1x1x32xf32> to vector<1x32xf32>
    %c1_143 = arith.constant 1 : index
    %c0_144 = arith.constant 0 : index
    %c0_145 = arith.constant 0 : index
    %366 = vector.load %arg15[%c1_143, %c0_144, %c0_145] : memref<2x1x32xf32, #tpu.memory_space<vmem>>, vector<1x1x32xf32>
    %367 = vector.shape_cast %366 : vector<1x1x32xf32> to vector<1x32xf32>
    %cst_146 = arith.constant dense<0.000000e+00> : vector<16xf32>
    %368 = vector.multi_reduction <add>, %363, %cst_146 [1] : vector<16x32xf32> to vector<16xf32>
    %369 = vector.shape_cast %368 : vector<16xf32> to vector<16x1xf32>
    %cst_147 = arith.constant 3.200000e+01 : f32
    %370 = vector.broadcast %cst_147 : f32 to vector<16x1xf32>
    %371 = arith.divf %369, %370 : vector<16x1xf32>
    %372 = vector.broadcast %371 : vector<16x1xf32> to vector<16x32xf32>
    %373 = arith.subf %363, %372 : vector<16x32xf32>
    %374 = arith.mulf %373, %373 : vector<16x32xf32>
    %cst_148 = arith.constant dense<0.000000e+00> : vector<16xf32>
    %375 = vector.multi_reduction <add>, %374, %cst_148 [1] : vector<16x32xf32> to vector<16xf32>
    %376 = vector.shape_cast %375 : vector<16xf32> to vector<16x1xf32>
    %cst_149 = arith.constant 3.200000e+01 : f32
    %377 = vector.broadcast %cst_149 : f32 to vector<16x1xf32>
    %378 = arith.divf %376, %377 : vector<16x1xf32>
    %379 = vector.broadcast %371 : vector<16x1xf32> to vector<16x32xf32>
    %380 = arith.subf %363, %379 : vector<16x32xf32>
    %cst_150 = arith.constant 9.99999996E-13 : f32
    %381 = vector.broadcast %cst_150 : f32 to vector<16x1xf32>
    %382 = arith.addf %378, %381 : vector<16x1xf32>
    %383 = math.rsqrt %382 : vector<16x1xf32>
    %384 = vector.broadcast %383 : vector<16x1xf32> to vector<16x32xf32>
    %385 = arith.mulf %380, %384 : vector<16x32xf32>
    %386 = vector.broadcast %365 : vector<1x32xf32> to vector<16x32xf32>
    %387 = arith.mulf %385, %386 : vector<16x32xf32>
    %388 = vector.broadcast %367 : vector<1x32xf32> to vector<16x32xf32>
    %389 = arith.addf %387, %388 : vector<16x32xf32>
    %390 = vector.extract_strided_slice %389 {offsets = [0, 0], sizes = [1, 32], strides = [1, 1]} : vector<16x32xf32> to vector<1x32xf32>
    %391 = vector.extract_strided_slice %389 {offsets = [8, 0], sizes = [1, 32], strides = [1, 1]} : vector<16x32xf32> to vector<1x32xf32>
    %392 = tpu.concatenate %390, %391 in 0 : vector<1x32xf32>, vector<1x32xf32> -> vector<2x32xf32>
    %c0_151 = arith.constant 0 : index
    %c0_152 = arith.constant 0 : index
    %393 = vector.load %arg16[%c0_151, %c0_152] : memref<32x128xbf16, #tpu.memory_space<vmem>>, vector<32x128xbf16>
    %394 = arith.truncf %392 : vector<2x32xf32> to vector<2x32xbf16>
    %cst_153 = arith.constant dense<0.000000e+00> : vector<2x128xf32>
    %395 = tpu.matmul %394, %393, %cst_153 {dimension_numbers = #tpu.dot_dimension_numbers<[1], [0], [0], [1], [0, 0, 1, 1], [], []>} : vector<2x32xbf16>, vector<32x128xbf16>, vector<2x128xf32> -> vector<2x128xf32>
    %c0_154 = arith.constant 0 : index
    %c0_155 = arith.constant 0 : index
    %396 = vector.load %arg17[%c0_154, %c0_155] : memref<1x128xf32, #tpu.memory_space<vmem>>, vector<1x128xf32>
    %397 = vector.broadcast %396 : vector<1x128xf32> to vector<2x128xf32>
    %398 = arith.addf %395, %397 : vector<2x128xf32>
    %c0_156 = arith.constant 0 : index
    %c0_157 = arith.constant 0 : index
    %399 = vector.load %arg18[%c0_156, %c0_157] : memref<2x128xf32, #tpu.memory_space<vmem>>, vector<2x128xf32>
    tpu.vector_store %arg18[%c0_156, %c0_157], %398 {strides = array<i32>} : memref<2x128xf32, #tpu.memory_space<vmem>>, vector<2x128xf32>,
    return
  }
}

</mosaic_0001>

<llo_original>
// kernel: prunebert_clf_forward.1
$region0: #{prunebert_clf_forward.1}
  #allocation0 [shape = 'u32[]', space=smem, size = 0x4, offset = 0x4, fixed_abs, tag = 'smem constant byte address 0x4 - core index']
  #allocation1 [shape = 'u32[144,128]{1,0:T(1,128)}', space=vmem, size = 0x12000, scoped, tag = 'internal scratch']
  %s0 = inlined_call_operand.vmem [shape: f32[16,32], index: 0, kind: input, shape index: {}]
  %s1 = inlined_call_operand.vmem [shape: f32[2,8,8], index: 1, kind: input, shape index: {}]
  %s2 = inlined_call_operand.vmem [shape: f32[1,32], index: 2, kind: input, shape index: {}]
  %s3 = inlined_call_operand.vmem [shape: f32[1,32], index: 3, kind: input, shape index: {}]
  %s4 = inlined_call_operand.vmem [shape: bf16[2,32,96], index: 4, kind: input, shape index: {}]
  %s5 = inlined_call_operand.vmem [shape: f32[2,1,96], index: 5, kind: input, shape index: {}]
  %s6 = inlined_call_operand.vmem [shape: bf16[2,32,32], index: 6, kind: input, shape index: {}]
  %s7 = inlined_call_operand.vmem [shape: f32[2,1,32], index: 7, kind: input, shape index: {}]
  %s8 = inlined_call_operand.vmem [shape: f32[2,1,32], index: 8, kind: input, shape index: {}]
  %s9 = inlined_call_operand.vmem [shape: f32[2,1,32], index: 9, kind: input, shape index: {}]
  %s10 = inlined_call_operand.vmem [shape: bf16[2,32,64], index: 10, kind: input, shape index: {}]
  %s11 = inlined_call_operand.vmem [shape: f32[2,1,64], index: 11, kind: input, shape index: {}]
  %s12 = inlined_call_operand.vmem [shape: bf16[2,64,32], index: 12, kind: input, shape index: {}]
  %s13 = inlined_call_operand.vmem [shape: f32[2,1,32], index: 13, kind: input, shape index: {}]
  %s14 = inlined_call_operand.vmem [shape: f32[2,1,32], index: 14, kind: input, shape index: {}]
  %s15 = inlined_call_operand.vmem [shape: f32[2,1,32], index: 15, kind: input, shape index: {}]
  %s16 = inlined_call_operand.vmem [shape: bf16[32,128], index: 16, kind: input, shape index: {}]
  %s17 = inlined_call_operand.vmem [shape: f32[1,128], index: 17, kind: input, shape index: {}]
  %s18 = inlined_call_operand.hbm [shape: f32[2,128], index: 18, kind: output, shape index: {}]
  %s19 = sld [smem:[#allocation0]]
  $region82: #{prunebert_clf_forward.1} parent=0
    _
  %s21 = ssub.s32 1, %s19
  %s22 = scalar_select 0, %s21, %s19
  $region1: #{prunebert_clf_forward.1} parent=0
    #allocation2 [shape = 'u8[1024]{0}', space=vmem, size = 0x400, scoped, tag = 'output window, operand 0, single buffered']
    #allocation3 [shape = 's32[1]{0}', space=sflag, size = 0x4, scoped, tag = 'scoped memory for prunebert_clf_forward.1']
    %23 = vsyncpa [#allocation3], 0
    // Predicated region
    $region2: #{prunebert_clf_forward.1} parent=1 // pred_check
      _
    $region3: #{prunebert_clf_forward.1} parent=1 // pred_check_branch
      %25 = sbr.rel (0) target = $region5
    $region4: #{prunebert_clf_forward.1} parent=1 // pred_region
      _
    $region5: #{prunebert_clf_forward.1} parent=1 // pred_fallthru
      _
    // Predicated region
    $region6: #{prunebert_clf_forward.1} parent=1 // pred_check
      _
    $region7: #{prunebert_clf_forward.1} parent=1 // pred_check_branch
      %27 = sbr.rel (0) target = $region9
    $region8: #{prunebert_clf_forward.1} parent=1 // pred_region
      _
    $region9: #{prunebert_clf_forward.1} parent=1 // pred_fallthru
      _
    // Predicated region
    $region10: #{prunebert_clf_forward.1} parent=1 // pred_check
      _
    $region11: #{prunebert_clf_forward.1} parent=1 // pred_check_branch
      %29 = sbr.rel (0) target = $region13
    $region12: #{prunebert_clf_forward.1} parent=1 // pred_region
      _
    $region13: #{prunebert_clf_forward.1} parent=1 // pred_fallthru
      _
    // Predicated region
    $region14: #{prunebert_clf_forward.1} parent=1 // pred_check
      _
    $region15: #{prunebert_clf_forward.1} parent=1 // pred_check_branch
      %31 = sbr.rel (0) target = $region17
    $region16: #{prunebert_clf_forward.1} parent=1 // pred_region
      _
    $region17: #{prunebert_clf_forward.1} parent=1 // pred_fallthru
      _
    // Predicated region
    $region18: #{prunebert_clf_forward.1} parent=1 // pred_check
      _
    $region19: #{prunebert_clf_forward.1} parent=1 // pred_check_branch
      %33 = sbr.rel (0) target = $region21
    $region20: #{prunebert_clf_forward.1} parent=1 // pred_region
      _
    $region21: #{prunebert_clf_forward.1} parent=1 // pred_fallthru
      _
    // Predicated region
    $region22: #{prunebert_clf_forward.1} parent=1 // pred_check
      _
    $region23: #{prunebert_clf_forward.1} parent=1 // pred_check_branch
      %35 = sbr.rel (0) target = $region25
    $region24: #{prunebert_clf_forward.1} parent=1 // pred_region
      _
    $region25: #{prunebert_clf_forward.1} parent=1 // pred_fallthru
      _
    // Predicated region
    $region26: #{prunebert_clf_forward.1} parent=1 // pred_check
      _
    $region27: #{prunebert_clf_forward.1} parent=1 // pred_check_branch
      %37 = sbr.rel (0) target = $region29
    $region28: #{prunebert_clf_forward.1} parent=1 // pred_region
      _
    $region29: #{prunebert_clf_forward.1} parent=1 // pred_fallthru
      _
    // Predicated region
    $region30: #{prunebert_clf_forward.1} parent=1 // pred_check
      _
    $region31: #{prunebert_clf_forward.1} parent=1 // pred_check_branch
      %39 = sbr.rel (0) target = $region33
    $region32: #{prunebert_clf_forward.1} parent=1 // pred_region
      _
    $region33: #{prunebert_clf_forward.1} parent=1 // pred_fallthru
      _
    // Predicated region
    $region34: #{prunebert_clf_forward.1} parent=1 // pred_check
      _
    $region35: #{prunebert_clf_forward.1} parent=1 // pred_check_branch
      %41 = sbr.rel (0) target = $region37
    $region36: #{prunebert_clf_forward.1} parent=1 // pred_region
      _
    $region37: #{prunebert_clf_forward.1} parent=1 // pred_fallthru
      _
    // Predicated region
    $region38: #{prunebert_clf_forward.1} parent=1 // pred_check
      _
    $region39: #{prunebert_clf_forward.1} parent=1 // pred_check_branch
      %43 = sbr.rel (0) target = $region41
    $region40: #{prunebert_clf_forward.1} parent=1 // pred_region
      _
    $region41: #{prunebert_clf_forward.1} parent=1 // pred_fallthru
      _
    // Predicated region
    $region42: #{prunebert_clf_forward.1} parent=1 // pred_check
      _
    $region43: #{prunebert_clf_forward.1} parent=1 // pred_check_branch
      %45 = sbr.rel (0) target = $region45
    $region44: #{prunebert_clf_forward.1} parent=1 // pred_region
      _
    $region45: #{prunebert_clf_forward.1} parent=1 // pred_fallthru
      _
    // Predicated region
    $region46: #{prunebert_clf_forward.1} parent=1 // pred_check
      _
    $region47: #{prunebert_clf_forward.1} parent=1 // pred_check_branch
      %47 = sbr.rel (0) target = $region49
    $region48: #{prunebert_clf_forward.1} parent=1 // pred_region
      _
    $region49: #{prunebert_clf_forward.1} parent=1 // pred_fallthru
      _
    // Predicated region
    $region50: #{prunebert_clf_forward.1} parent=1 // pred_check
      _
    $region51: #{prunebert_clf_forward.1} parent=1 // pred_check_branch
      %49 = sbr.rel (0) target = $region53
    $region52: #{prunebert_clf_forward.1} parent=1 // pred_region
      _
    $region53: #{prunebert_clf_forward.1} parent=1 // pred_fallthru
      _
    // Predicated region
    $region54: #{prunebert_clf_forward.1} parent=1 // pred_check
      _
    $region55: #{prunebert_clf_forward.1} parent=1 // pred_check_branch
      %51 = sbr.rel (0) target = $region57
    $region56: #{prunebert_clf_forward.1} parent=1 // pred_region
      _
    $region57: #{prunebert_clf_forward.1} parent=1 // pred_fallthru
      _
    // Predicated region
    $region58: #{prunebert_clf_forward.1} parent=1 // pred_check
      _
    $region59: #{prunebert_clf_forward.1} parent=1 // pred_check_branch
      %53 = sbr.rel (0) target = $region61
    $region60: #{prunebert_clf_forward.1} parent=1 // pred_region
      _
    $region61: #{prunebert_clf_forward.1} parent=1 // pred_fallthru
      _
    // Predicated region
    $region62: #{prunebert_clf_forward.1} parent=1 // pred_check
      _
    $region63: #{prunebert_clf_forward.1} parent=1 // pred_check_branch
      %55 = sbr.rel (0) target = $region65
    $region64: #{prunebert_clf_forward.1} parent=1 // pred_region
      _
    $region65: #{prunebert_clf_forward.1} parent=1 // pred_fallthru
      _
    // Predicated region
    $region66: #{prunebert_clf_forward.1} parent=1 // pred_check
      _
    $region67: #{prunebert_clf_forward.1} parent=1 // pred_check_branch
      %57 = sbr.rel (0) target = $region69
    $region68: #{prunebert_clf_forward.1} parent=1 // pred_region
      _
    $region69: #{prunebert_clf_forward.1} parent=1 // pred_fallthru
      _
    // Predicated region
    $region70: #{prunebert_clf_forward.1} parent=1 // pred_check
      _
    $region71: #{prunebert_clf_forward.1} parent=1 // pred_check_branch
      %59 = sbr.rel (0) target = $region73
    $region72: #{prunebert_clf_forward.1} parent=1 // pred_region
      _
    $region73: #{prunebert_clf_forward.1} parent=1 // pred_fallthru
      _
    %v61 = vld [vmem:[%s0] sm:$0xff]
    %v62 = vld [vmem:[%s0 + $0x8] sm:$0xff]
    %v63 = vld [vmem:[%s2] sm:$0x1]
    %v64 = vld [vmem:[%s3] sm:$0x1]
    %vm65 = vcmask 261120
    %v66 = vsel %vm65, %v61, 0.0
    %67 = vadd.xlane.f32.xlu0 %v66
    %v68 = vpop.xlane.xlu0 %67
    %v69 = vsel %vm65, %v62, 0.0
    %70 = vadd.xlane.f32.xlu0 %v69
    %v71 = vpop.xlane.xlu0 %70
    %v72 = vrcp.pop 32.0
    %v73 = vmul.f32 %v68, %v72
    %v74 = vmul.f32 %v71, %v72
    %v75 = vsub.f32 %v61, %v73
    %v76 = vsub.f32 %v62, %v74
    %v77 = vmul.f32 %v75, %v75
    %v78 = vmul.f32 %v76, %v76
    %v79 = vsel %vm65, %v77, 0.0
    %80 = vadd.xlane.f32.xlu0 %v79
    %v81 = vpop.xlane.xlu0 %80
    %v82 = vsel %vm65, %v78, 0.0
    %83 = vadd.xlane.f32.xlu0 %v82
    %v84 = vpop.xlane.xlu0 %83
    %v85 = vmul.f32 %v81, %v72
    %v86 = vmul.f32 %v84, %v72
    %v87 = vadd.f32 %v85, 1e-12
    %v88 = vadd.f32 %v86, 1e-12
    %v89 = vrsqrt.pop %v87
    %v90 = vrsqrt.pop %v88
    %v91 = vmul.f32 %v75, %v89
    %v92 = vmul.f32 %v76, %v90
    %v94 = vlaneseq
    %v95 = vshrl.u32 %v94, 7
    %v96 = vsub.s32 0, %v95
    %v97 = vrot.slane %v63, %v96
    %v99 = vmul.f32 %v91, %v97
    %v100 = vmul.f32 %v92, %v97
    %v102 = vlaneseq
    %v103 = vshrl.u32 %v102, 7
    %v104 = vsub.s32 0, %v103
    %v105 = vrot.slane %v64, %v104
    %v107 = vadd.f32 %v99, %v105
    %v108 = vadd.f32 %v100, %v105
    %v109 = vld [vmem:[%s1] sm:$0xff]
    %v110 = vld [vmem:[%s1 + $0x8] sm:$0xff]
    %v111 = vld [vmem:[%s4] sm:$0xf]
    %v112 = vld [vmem:[%s4 + $0x4] sm:$0xf]
    %v113 = vld [vmem:[%s4 + $0x8] sm:$0xf]
    %v114 = vld [vmem:[%s4 + $0xc] sm:$0xf]
    %v115 = vpack.c.bf16 %v108, %v107
    %v116 = vld [vmem:[%s5] sm:$0x1]
    %v118 = vlaneseq
    %v119 = vshrl.u32 %v118, 7
    %v120 = vsub.s32 0, %v119
    %v121 = vrot.slane %v116, %v120
    %v127 = vunpack.c.l.b16 %v111
    %v128 = vunpack.c.l.b16 %v112
    %v129 = vunpack.c.l.b16 %v113
    %v130 = vunpack.c.l.b16 %v114
    %v131 = vpack.c.b16 %v128, %v127
    %v132 = vpack.c.b16 %v130, %v129
    %v136 = vsel %vm65, %v115, 0
    %138 = vmatprep.subr.bf16.mxu0 0
    %139 = vmatpush1.bf16.msra.mxu0 %v131
    %140 = vmatprep.subr.bf16.mxu0 0
    %141 = vmatpush1.bf16.msra.mxu0 %v132
    %142 = vmatprep.subr.bf16.mxu0 0
    %143 = vmatpush1.bf16.msra.mxu0 0
    %144 = vmatprep.subr.bf16.mxu0 0
    %145 = vmatpush1.bf16.msra.mxu0 0
    %146 = vmatprep.subr.bf16.mxu0 0
    %147 = vmatpush1.bf16.msra.mxu0 0
    %148 = vmatprep.subr.bf16.mxu0 0
    %149 = vmatpush1.bf16.msra.mxu0 0
    %150 = vmatprep.subr.bf16.mxu0 0
    %151 = vmatpush1.bf16.msra.mxu0 0
    %152 = vmatprep.subr.bf16.mxu0 0
    %153 = vmatpush1.bf16.msra.mxu0 0
    %154 = vmatprep.subr.bf16.mxu0 0
    %155 = vmatpush1.bf16.msra.mxu0 0
    %156 = vmatprep.subr.bf16.mxu0 0
    %157 = vmatpush1.bf16.msra.mxu0 0
    %158 = vmatprep.subr.bf16.mxu0 0
    %159 = vmatpush1.bf16.msra.mxu0 0
    %160 = vmatprep.subr.bf16.mxu0 0
    %161 = vmatpush1.bf16.msra.mxu0 0
    %162 = vmatprep.subr.bf16.mxu0 0
    %163 = vmatpush1.bf16.msra.mxu0 0
    %164 = vmatprep.subr.bf16.mxu0 0
    %165 = vmatpush1.bf16.msra.mxu0 0
    %166 = vmatprep.subr.bf16.mxu0 0
    %167 = vmatpush1.bf16.msra.mxu0 0
    %168 = vmatprep.subr.bf16.mxu0 0
    %169 = vmatpush1.bf16.msra.mxu0 0
    %170 = vmatprep.mubr.bf16.mxu0 0
    %171 = vmatmul.mubr.bf16.gmra.mrb[0].mxu0 %v136
    %v172 = vpop.f32.mrb[0].mxu0
    %v173 = vadd.f32 %v121, %v172
    %v174 = vpop.f32.mrb[0].mxu0
    %v175 = vpop.f32.mrb[0].mxu0
    %v176 = vadd.f32 %v121, %v175
    %v177 = vpop.f32.mrb[0].mxu0
    %178 = vdwg.mxu0
    %v179 = vpack.c.bf16 %v173, %v173
    %v180 = vpack.c.bf16 %v176, %v176
    %182 = vrot.lane.b32.xlu0 %v179, 96
    %v183 = vpop.permute.xlu0 %182
    %vm184 = vcmask 64512
    %v186 = vsel %vm184, %v179, 0
    %v189 = vsel %vm184, %v183, 0
    %191 = vmatprep.subr.bf16.mxu0 0
    %192 = vmatpush1.bf16.xpose.msra.mxu0 %v189
    %193 = vmatprep.subr.bf16.mxu0 0
    %194 = vmatpush1.bf16.xpose.msra.mxu0 0
    %195 = vmatprep.subr.bf16.mxu0 0
    %196 = vmatpush1.bf16.xpose.msra.mxu0 0
    %197 = vmatprep.subr.bf16.mxu0 0
    %198 = vmatpush1.bf16.xpose.msra.mxu0 0
    %199 = vmatprep.subr.bf16.mxu0 0
    %200 = vmatpush1.bf16.xpose.msra.mxu0 0
    %201 = vmatprep.subr.bf16.mxu0 0
    %202 = vmatpush1.bf16.xpose.msra.mxu0 0
    %203 = vmatprep.subr.bf16.mxu0 0
    %204 = vmatpush1.bf16.xpose.msra.mxu0 0
    %205 = vmatprep.subr.bf16.mxu0 0
    %206 = vmatpush1.bf16.xpose.msra.mxu0 0
    %207 = vmatprep.subr.bf16.mxu0 0
    %208 = vmatpush1.bf16.xpose.msra.mxu0 0
    %209 = vmatprep.subr.bf16.mxu0 0
    %210 = vmatpush1.bf16.xpose.msra.mxu0 0
    %211 = vmatprep.subr.bf16.mxu0 0
    %212 = vmatpush1.bf16.xpose.msra.mxu0 0
    %213 = vmatprep.subr.bf16.mxu0 0
    %214 = vmatpush1.bf16.xpose.msra.mxu0 0
    %215 = vmatprep.subr.bf16.mxu0 0
    %216 = vmatpush1.bf16.xpose.msra.mxu0 0
    %217 = vmatprep.subr.bf16.mxu0 0
    %218 = vmatpush1.bf16.xpose.msra.mxu0 0
    %219 = vmatprep.subr.bf16.mxu0 0
    %220 = vmatpush1.bf16.xpose.msra.mxu0 0
    %221 = vmatprep.subr.bf16.mxu0 0
    %222 = vmatpush1.bf16.xpose.msra.mxu0 0
    %223 = vmatprep.mubr.bf16.mxu0 0
    %224 = vmatmul.mubr.bf16.gmra.mrb[0].mxu0 %v186
    %v225 = vpop.f32.mrb[0].mxu0
    %v226 = vadd.f32 %v109, %v225
    %v227 = vpop.f32.mrb[0].mxu0
    %v228 = vpop.f32.mrb[0].mxu0
    %v229 = vpop.f32.mrb[0].mxu0
    %230 = vdwg.mxu0
    %232 = vrot.lane.b32.xlu0 %v180, 96
    %v233 = vpop.permute.xlu0 %232
    %v235 = vsel %vm184, %v180, 0
    %v238 = vsel %vm184, %v233, 0
    %240 = vmatprep.subr.bf16.mxu0 0
    %241 = vmatpush1.bf16.xpose.msra.mxu0 %v238
    %242 = vmatprep.subr.bf16.mxu0 0
    %243 = vmatpush1.bf16.xpose.msra.mxu0 0
    %244 = vmatprep.subr.bf16.mxu0 0
    %245 = vmatpush1.bf16.xpose.msra.mxu0 0
    %246 = vmatprep.subr.bf16.mxu0 0
    %247 = vmatpush1.bf16.xpose.msra.mxu0 0
    %248 = vmatprep.subr.bf16.mxu0 0
    %249 = vmatpush1.bf16.xpose.msra.mxu0 0
    %250 = vmatprep.subr.bf16.mxu0 0
    %251 = vmatpush1.bf16.xpose.msra.mxu0 0
    %252 = vmatprep.subr.bf16.mxu0 0
    %253 = vmatpush1.bf16.xpose.msra.mxu0 0
    %254 = vmatprep.subr.bf16.mxu0 0
    %255 = vmatpush1.bf16.xpose.msra.mxu0 0
    %256 = vmatprep.subr.bf16.mxu0 0
    %257 = vmatpush1.bf16.xpose.msra.mxu0 0
    %258 = vmatprep.subr.bf16.mxu0 0
    %259 = vmatpush1.bf16.xpose.msra.mxu0 0
    %260 = vmatprep.subr.bf16.mxu0 0
    %261 = vmatpush1.bf16.xpose.msra.mxu0 0
    %262 = vmatprep.subr.bf16.mxu0 0
    %263 = vmatpush1.bf16.xpose.msra.mxu0 0
    %264 = vmatprep.subr.bf16.mxu0 0
    %265 = vmatpush1.bf16.xpose.msra.mxu0 0
    %266 = vmatprep.subr.bf16.mxu0 0
    %267 = vmatpush1.bf16.xpose.msra.mxu0 0
    %268 = vmatprep.subr.bf16.mxu0 0
    %269 = vmatpush1.bf16.xpose.msra.mxu0 0
    %270 = vmatprep.subr.bf16.mxu0 0
    %271 = vmatpush1.bf16.xpose.msra.mxu0 0
    %272 = vmatprep.mubr.bf16.mxu0 0
    %273 = vmatmul.mubr.bf16.gmra.mrb[0].mxu0 %v235
    %v274 = vpop.f32.mrb[0].mxu0
    %v275 = vadd.f32 %v110, %v274
    %v276 = vpop.f32.mrb[0].mxu0
    %v277 = vpop.f32.mrb[0].mxu0
    %v278 = vpop.f32.mrb[0].mxu0
    %279 = vdwg.mxu0
    %v280 = vsel %vm184, %v226, -inf
    %281 = vmax.xlane.f32.xlu0 %v280
    %v282 = vpop.xlane.xlu0 %281
    %v283 = vsel %vm184, %v275, -inf
    %284 = vmax.xlane.f32.xlu0 %v283
    %v285 = vpop.xlane.xlu0 %284
    %v286 = vsub.f32 %v226, %v282
    %v287 = vsub.f32 %v275, %v285
    %v288 = vmul.f32 %v286, 1.442695
    %v289 = vpow.pop %v288
    %v290 = vmul.f32 %v287, 1.442695
    %v291 = vpow.pop %v290
    %v292 = vsel %vm184, %v289, 0.0
    %293 = vadd.xlane.f32.xlu0 %v292
    %v294 = vpop.xlane.xlu0 %293
    %v295 = vsel %vm184, %v291, 0.0
    %296 = vadd.xlane.f32.xlu0 %v295
    %v297 = vpop.xlane.xlu0 %296
    %v298 = vpack.c.bf16 %v289, %v289
    %v299 = vpack.c.bf16 %v291, %v291
    %300 = vrot.lane.b32.xlu0 %v179, 64
    %v301 = vpop.permute.xlu0 %300
    %v303 = vsel %vm184, %v298, 0
    %vm305 = vcmask 1043456
    %v307 = vsel %vm305, %v301, 0
    %309 = vmatprep.subr.bf16.mxu0 0
    %310 = vmatpush1.bf16.msra.mxu0 %v307
    %311 = vmatprep.subr.bf16.mxu0 0
    %312 = vmatpush1.bf16.msra.mxu0 0
    %313 = vmatprep.subr.bf16.mxu0 0
    %314 = vmatpush1.bf16.msra.mxu0 0
    %315 = vmatprep.subr.bf16.mxu0 0
    %316 = vmatpush1.bf16.msra.mxu0 0
    %317 = vmatprep.subr.bf16.mxu0 0
    %318 = vmatpush1.bf16.msra.mxu0 0
    %319 = vmatprep.subr.bf16.mxu0 0
    %320 = vmatpush1.bf16.msra.mxu0 0
    %321 = vmatprep.subr.bf16.mxu0 0
    %322 = vmatpush1.bf16.msra.mxu0 0
    %323 = vmatprep.subr.bf16.mxu0 0
    %324 = vmatpush1.bf16.msra.mxu0 0
    %325 = vmatprep.subr.bf16.mxu0 0
    %326 = vmatpush1.bf16.msra.mxu0 0
    %327 = vmatprep.subr.bf16.mxu0 0
    %328 = vmatpush1.bf16.msra.mxu0 0
    %329 = vmatprep.subr.bf16.mxu0 0
    %330 = vmatpush1.bf16.msra.mxu0 0
    %331 = vmatprep.subr.bf16.mxu0 0
    %332 = vmatpush1.bf16.msra.mxu0 0
    %333 = vmatprep.subr.bf16.mxu0 0
    %334 = vmatpush1.bf16.msra.mxu0 0
    %335 = vmatprep.subr.bf16.mxu0 0
    %336 = vmatpush1.bf16.msra.mxu0 0
    %337 = vmatprep.subr.bf16.mxu0 0
    %338 = vmatpush1.bf16.msra.mxu0 0
    %339 = vmatprep.subr.bf16.mxu0 0
    %340 = vmatpush1.bf16.msra.mxu0 0
    %341 = vmatprep.mubr.bf16.mxu0 0
    %342 = vmatmul.mubr.bf16.gmra.mrb[0].mxu0 %v303
    %v343 = vpop.f32.mrb[0].mxu0
    %v344 = vadd.f32 0.0, %v343
    %v345 = vpop.f32.mrb[0].mxu0
    %v346 = vpop.f32.mrb[0].mxu0
    %v347 = vpop.f32.mrb[0].mxu0
    %348 = vdwg.mxu0
    %349 = vrot.lane.b32.xlu0 %v180, 64
    %v350 = vpop.permute.xlu0 %349
    %v352 = vsel %vm184, %v299, 0
    %v355 = vsel %vm305, %v350, 0
    %357 = vmatprep.subr.bf16.mxu0 0
    %358 = vmatpush1.bf16.msra.mxu0 %v355
    %359 = vmatprep.subr.bf16.mxu0 0
    %360 = vmatpush1.bf16.msra.mxu0 0
    %361 = vmatprep.subr.bf16.mxu0 0
    %362 = vmatpush1.bf16.msra.mxu0 0
    %363 = vmatprep.subr.bf16.mxu0 0
    %364 = vmatpush1.bf16.msra.mxu0 0
    %365 = vmatprep.subr.bf16.mxu0 0
    %366 = vmatpush1.bf16.msra.mxu0 0
    %367 = vmatprep.subr.bf16.mxu0 0
    %368 = vmatpush1.bf16.msra.mxu0 0
    %369 = vmatprep.subr.bf16.mxu0 0
    %370 = vmatpush1.bf16.msra.mxu0 0
    %371 = vmatprep.subr.bf16.mxu0 0
    %372 = vmatpush1.bf16.msra.mxu0 0
    %373 = vmatprep.subr.bf16.mxu0 0
    %374 = vmatpush1.bf16.msra.mxu0 0
    %375 = vmatprep.subr.bf16.mxu0 0
    %376 = vmatpush1.bf16.msra.mxu0 0
    %377 = vmatprep.subr.bf16.mxu0 0
    %378 = vmatpush1.bf16.msra.mxu0 0
    %379 = vmatprep.subr.bf16.mxu0 0
    %380 = vmatpush1.bf16.msra.mxu0 0
    %381 = vmatprep.subr.bf16.mxu0 0
    %382 = vmatpush1.bf16.msra.mxu0 0
    %383 = vmatprep.subr.bf16.mxu0 0
    %384 = vmatpush1.bf16.msra.mxu0 0
    %385 = vmatprep.subr.bf16.mxu0 0
    %386 = vmatpush1.bf16.msra.mxu0 0
    %387 = vmatprep.subr.bf16.mxu0 0
    %388 = vmatpush1.bf16.msra.mxu0 0
    %389 = vmatprep.mubr.bf16.mxu0 0
    %390 = vmatmul.mubr.bf16.gmra.mrb[0].mxu0 %v352
    %v391 = vpop.f32.mrb[0].mxu0
    %v392 = vadd.f32 0.0, %v391
    %v393 = vpop.f32.mrb[0].mxu0
    %v394 = vpop.f32.mrb[0].mxu0
    %v395 = vpop.f32.mrb[0].mxu0
    %396 = vdwg.mxu0
    %v397 = vrcp.pop %v294
    %v398 = vrcp.pop %v297
    %v399 = vmul.f32 %v344, %v397
    %v400 = vmul.f32 %v392, %v398
    %401 = vrot.lane.b32.xlu0 %v179, 120
    %v402 = vpop.permute.xlu0 %401
    %403 = vrot.lane.b32.xlu0 %v179, 88
    %v404 = vpop.permute.xlu0 %403
    %v406 = vsel %vm184, %v402, 0
    %v409 = vsel %vm184, %v404, 0
    %411 = vmatprep.subr.bf16.mxu0 0
    %412 = vmatpush1.bf16.xpose.msra.mxu0 %v409
    %413 = vmatprep.subr.bf16.mxu0 0
    %414 = vmatpush1.bf16.xpose.msra.mxu0 0
    %415 = vmatprep.subr.bf16.mxu0 0
    %416 = vmatpush1.bf16.xpose.msra.mxu0 0
    %417 = vmatprep.subr.bf16.mxu0 0
    %418 = vmatpush1.bf16.xpose.msra.mxu0 0
    %419 = vmatprep.subr.bf16.mxu0 0
    %420 = vmatpush1.bf16.xpose.msra.mxu0 0
    %421 = vmatprep.subr.bf16.mxu0 0
    %422 = vmatpush1.bf16.xpose.msra.mxu0 0
    %423 = vmatprep.subr.bf16.mxu0 0
    %424 = vmatpush1.bf16.xpose.msra.mxu0 0
    %425 = vmatprep.subr.bf16.mxu0 0
    %426 = vmatpush1.bf16.xpose.msra.mxu0 0
    %427 = vmatprep.subr.bf16.mxu0 0
    %428 = vmatpush1.bf16.xpose.msra.mxu0 0
    %429 = vmatprep.subr.bf16.mxu0 0
    %430 = vmatpush1.bf16.xpose.msra.mxu0 0
    %431 = vmatprep.subr.bf16.mxu0 0
    %432 = vmatpush1.bf16.xpose.msra.mxu0 0
    %433 = vmatprep.subr.bf16.mxu0 0
    %434 = vmatpush1.bf16.xpose.msra.mxu0 0
    %435 = vmatprep.subr.bf16.mxu0 0
    %436 = vmatpush1.bf16.xpose.msra.mxu0 0
    %437 = vmatprep.subr.bf16.mxu0 0
    %438 = vmatpush1.bf16.xpose.msra.mxu0 0
    %439 = vmatprep.subr.bf16.mxu0 0
    %440 = vmatpush1.bf16.xpose.msra.mxu0 0
    %441 = vmatprep.subr.bf16.mxu0 0
    %442 = vmatpush1.bf16.xpose.msra.mxu0 0
    %443 = vmatprep.mubr.bf16.mxu0 0
    %444 = vmatmul.mubr.bf16.gmra.mrb[0].mxu0 %v406
    %v445 = vpop.f32.mrb[0].mxu0
    %v446 = vadd.f32 %v109, %v445
    %v447 = vpop.f32.mrb[0].mxu0
    %v448 = vpop.f32.mrb[0].mxu0
    %v449 = vpop.f32.mrb[0].mxu0
    %450 = vdwg.mxu0
    %451 = vrot.lane.b32.xlu0 %v180, 120
    %v452 = vpop.permute.xlu0 %451
    %453 = vrot.lane.b32.xlu0 %v180, 88
    %v454 = vpop.permute.xlu0 %453
    %v456 = vsel %vm184, %v452, 0
    %v459 = vsel %vm184, %v454, 0
    %461 = vmatprep.subr.bf16.mxu0 0
    %462 = vmatpush1.bf16.xpose.msra.mxu0 %v459
    %463 = vmatprep.subr.bf16.mxu0 0
    %464 = vmatpush1.bf16.xpose.msra.mxu0 0
    %465 = vmatprep.subr.bf16.mxu0 0
    %466 = vmatpush1.bf16.xpose.msra.mxu0 0
    %467 = vmatprep.subr.bf16.mxu0 0
    %468 = vmatpush1.bf16.xpose.msra.mxu0 0
    %469 = vmatprep.subr.bf16.mxu0 0
    %470 = vmatpush1.bf16.xpose.msra.mxu0 0
    %471 = vmatprep.subr.bf16.mxu0 0
    %472 = vmatpush1.bf16.xpose.msra.mxu0 0
    %473 = vmatprep.subr.bf16.mxu0 0
    %474 = vmatpush1.bf16.xpose.msra.mxu0 0
    %475 = vmatprep.subr.bf16.mxu0 0
    %476 = vmatpush1.bf16.xpose.msra.mxu0 0
    %477 = vmatprep.subr.bf16.mxu0 0
    %478 = vmatpush1.bf16.xpose.msra.mxu0 0
    %479 = vmatprep.subr.bf16.mxu0 0
    %480 = vmatpush1.bf16.xpose.msra.mxu0 0
    %481 = vmatprep.subr.bf16.mxu0 0
    %482 = vmatpush1.bf16.xpose.msra.mxu0 0
    %483 = vmatprep.subr.bf16.mxu0 0
    %484 = vmatpush1.bf16.xpose.msra.mxu0 0
    %485 = vmatprep.subr.bf16.mxu0 0
    %486 = vmatpush1.bf16.xpose.msra.mxu0 0
    %487 = vmatprep.subr.bf16.mxu0 0
    %488 = vmatpush1.bf16.xpose.msra.mxu0 0
    %489 = vmatprep.subr.bf16.mxu0 0
    %490 = vmatpush1.bf16.xpose.msra.mxu0 0
    %491 = vmatprep.subr.bf16.mxu0 0
    %492 = vmatpush1.bf16.xpose.msra.mxu0 0
    %493 = vmatprep.mubr.bf16.mxu0 0
    %494 = vmatmul.mubr.bf16.gmra.mrb[0].mxu0 %v456
    %v495 = vpop.f32.mrb[0].mxu0
    %v496 = vadd.f32 %v110, %v495
    %v497 = vpop.f32.mrb[0].mxu0
    %v498 = vpop.f32.mrb[0].mxu0
    %v499 = vpop.f32.mrb[0].mxu0
    %500 = vdwg.mxu0
    %v501 = vsel %vm184, %v446, -inf
    %502 = vmax.xlane.f32.xlu0 %v501
    %v503 = vpop.xlane.xlu0 %502
    %v504 = vsel %vm184, %v496, -inf
    %505 = vmax.xlane.f32.xlu0 %v504
    %v506 = vpop.xlane.xlu0 %505
    %v507 = vsub.f32 %v446, %v503
    %v508 = vsub.f32 %v496, %v506
    %v509 = vmul.f32 %v507, 1.442695
    %v510 = vpow.pop %v509
    %v511 = vmul.f32 %v508, 1.442695
    %v512 = vpow.pop %v511
    %v513 = vsel %vm184, %v510, 0.0
    %514 = vadd.xlane.f32.xlu0 %v513
    %v515 = vpop.xlane.xlu0 %514
    %v516 = vsel %vm184, %v512, 0.0
    %517 = vadd.xlane.f32.xlu0 %v516
    %v518 = vpop.xlane.xlu0 %517
    %v519 = vpack.c.bf16 %v510, %v510
    %v520 = vpack.c.bf16 %v512, %v512
    %521 = vrot.lane.b32.xlu0 %v179, 56
    %v522 = vpop.permute.xlu0 %521
    %v524 = vsel %vm184, %v519, 0
    %v527 = vsel %vm305, %v522, 0
    %529 = vmatprep.subr.bf16.mxu0 0
    %530 = vmatpush1.bf16.msra.mxu0 %v527
    %531 = vmatprep.subr.bf16.mxu0 0
    %532 = vmatpush1.bf16.msra.mxu0 0
    %533 = vmatprep.subr.bf16.mxu0 0
    %534 = vmatpush1.bf16.msra.mxu0 0
    %535 = vmatprep.subr.bf16.mxu0 0
    %536 = vmatpush1.bf16.msra.mxu0 0
    %537 = vmatprep.subr.bf16.mxu0 0
    %538 = vmatpush1.bf16.msra.mxu0 0
    %539 = vmatprep.subr.bf16.mxu0 0
    %540 = vmatpush1.bf16.msra.mxu0 0
    %541 = vmatprep.subr.bf16.mxu0 0
    %542 = vmatpush1.bf16.msra.mxu0 0
    %543 = vmatprep.subr.bf16.mxu0 0
    %544 = vmatpush1.bf16.msra.mxu0 0
    %545 = vmatprep.subr.bf16.mxu0 0
    %546 = vmatpush1.bf16.msra.mxu0 0
    %547 = vmatprep.subr.bf16.mxu0 0
    %548 = vmatpush1.bf16.msra.mxu0 0
    %549 = vmatprep.subr.bf16.mxu0 0
    %550 = vmatpush1.bf16.msra.mxu0 0
    %551 = vmatprep.subr.bf16.mxu0 0
    %552 = vmatpush1.bf16.msra.mxu0 0
    %553 = vmatprep.subr.bf16.mxu0 0
    %554 = vmatpush1.bf16.msra.mxu0 0
    %555 = vmatprep.subr.bf16.mxu0 0
    %556 = vmatpush1.bf16.msra.mxu0 0
    %557 = vmatprep.subr.bf16.mxu0 0
    %558 = vmatpush1.bf16.msra.mxu0 0
    %559 = vmatprep.subr.bf16.mxu0 0
    %560 = vmatpush1.bf16.msra.mxu0 0
    %561 = vmatprep.mubr.bf16.mxu0 0
    %562 = vmatmul.mubr.bf16.gmra.mrb[0].mxu0 %v524
    %v563 = vpop.f32.mrb[0].mxu0
    %v564 = vadd.f32 0.0, %v563
    %v565 = vpop.f32.mrb[0].mxu0
    %v566 = vpop.f32.mrb[0].mxu0
    %v567 = vpop.f32.mrb[0].mxu0
    %568 = vdwg.mxu0
    %569 = vrot.lane.b32.xlu0 %v180, 56
    %v570 = vpop.permute.xlu0 %569
    %v572 = vsel %vm184, %v520, 0
    %v575 = vsel %vm305, %v570, 0
    %577 = vmatprep.subr.bf16.mxu0 0
    %578 = vmatpush1.bf16.msra.mxu0 %v575
    %579 = vmatprep.subr.bf16.mxu0 0
    %580 = vmatpush1.bf16.msra.mxu0 0
    %581 = vmatprep.subr.bf16.mxu0 0
    %582 = vmatpush1.bf16.msra.mxu0 0
    %583 = vmatprep.subr.bf16.mxu0 0
    %584 = vmatpush1.bf16.msra.mxu0 0
    %585 = vmatprep.subr.bf16.mxu0 0
    %586 = vmatpush1.bf16.msra.mxu0 0
    %587 = vmatprep.subr.bf16.mxu0 0
    %588 = vmatpush1.bf16.msra.mxu0 0
    %589 = vmatprep.subr.bf16.mxu0 0
    %590 = vmatpush1.bf16.msra.mxu0 0
    %591 = vmatprep.subr.bf16.mxu0 0
    %592 = vmatpush1.bf16.msra.mxu0 0
    %593 = vmatprep.subr.bf16.mxu0 0
    %594 = vmatpush1.bf16.msra.mxu0 0
    %595 = vmatprep.subr.bf16.mxu0 0
    %596 = vmatpush1.bf16.msra.mxu0 0
    %597 = vmatprep.subr.bf16.mxu0 0
    %598 = vmatpush1.bf16.msra.mxu0 0
    %599 = vmatprep.subr.bf16.mxu0 0
    %600 = vmatpush1.bf16.msra.mxu0 0
    %601 = vmatprep.subr.bf16.mxu0 0
    %602 = vmatpush1.bf16.msra.mxu0 0
    %603 = vmatprep.subr.bf16.mxu0 0
    %604 = vmatpush1.bf16.msra.mxu0 0
    %605 = vmatprep.subr.bf16.mxu0 0
    %606 = vmatpush1.bf16.msra.mxu0 0
    %607 = vmatprep.subr.bf16.mxu0 0
    %608 = vmatpush1.bf16.msra.mxu0 0
    %609 = vmatprep.mubr.bf16.mxu0 0
    %610 = vmatmul.mubr.bf16.gmra.mrb[0].mxu0 %v572
    %v611 = vpop.f32.mrb[0].mxu0
    %v612 = vadd.f32 0.0, %v611
    %v613 = vpop.f32.mrb[0].mxu0
    %v614 = vpop.f32.mrb[0].mxu0
    %v615 = vpop.f32.mrb[0].mxu0
    %616 = vdwg.mxu0
    %v617 = vrcp.pop %v515
    %v618 = vrcp.pop %v518
    %v619 = vmul.f32 %v564, %v617
    %v620 = vmul.f32 %v612, %v618
    %621 = vrot.lane.b32.xlu0 %v179, 112
    %v622 = vpop.permute.xlu0 %621
    %623 = vrot.lane.b32.xlu0 %v179, 80
    %v624 = vpop.permute.xlu0 %623
    %v626 = vsel %vm184, %v622, 0
    %v629 = vsel %vm184, %v624, 0
    %631 = vmatprep.subr.bf16.mxu0 0
    %632 = vmatpush1.bf16.xpose.msra.mxu0 %v629
    %633 = vmatprep.subr.bf16.mxu0 0
    %634 = vmatpush1.bf16.xpose.msra.mxu0 0
    %635 = vmatprep.subr.bf16.mxu0 0
    %636 = vmatpush1.bf16.xpose.msra.mxu0 0
    %637 = vmatprep.subr.bf16.mxu0 0
    %638 = vmatpush1.bf16.xpose.msra.mxu0 0
    %639 = vmatprep.subr.bf16.mxu0 0
    %640 = vmatpush1.bf16.xpose.msra.mxu0 0
    %641 = vmatprep.subr.bf16.mxu0 0
    %642 = vmatpush1.bf16.xpose.msra.mxu0 0
    %643 = vmatprep.subr.bf16.mxu0 0
    %644 = vmatpush1.bf16.xpose.msra.mxu0 0
    %645 = vmatprep.subr.bf16.mxu0 0
    %646 = vmatpush1.bf16.xpose.msra.mxu0 0
    %647 = vmatprep.subr.bf16.mxu0 0
    %648 = vmatpush1.bf16.xpose.msra.mxu0 0
    %649 = vmatprep.subr.bf16.mxu0 0
    %650 = vmatpush1.bf16.xpose.msra.mxu0 0
    %651 = vmatprep.subr.bf16.mxu0 0
    %652 = vmatpush1.bf16.xpose.msra.mxu0 0
    %653 = vmatprep.subr.bf16.mxu0 0
    %654 = vmatpush1.bf16.xpose.msra.mxu0 0
    %655 = vmatprep.subr.bf16.mxu0 0
    %656 = vmatpush1.bf16.xpose.msra.mxu0 0
    %657 = vmatprep.subr.bf16.mxu0 0
    %658 = vmatpush1.bf16.xpose.msra.mxu0 0
    %659 = vmatprep.subr.bf16.mxu0 0
    %660 = vmatpush1.bf16.xpose.msra.mxu0 0
    %661 = vmatprep.subr.bf16.mxu0 0
    %662 = vmatpush1.bf16.xpose.msra.mxu0 0
    %663 = vmatprep.mubr.bf16.mxu0 0
    %664 = vmatmul.mubr.bf16.gmra.mrb[0].mxu0 %v626
    %v665 = vpop.f32.mrb[0].mxu0
    %v666 = vadd.f32 %v109, %v665
    %v667 = vpop.f32.mrb[0].mxu0
    %v668 = vpop.f32.mrb[0].mxu0
    %v669 = vpop.f32.mrb[0].mxu0
    %670 = vdwg.mxu0
    %671 = vrot.lane.b32.xlu0 %v180, 112
    %v672 = vpop.permute.xlu0 %671
    %673 = vrot.lane.b32.xlu0 %v180, 80
    %v674 = vpop.permute.xlu0 %673
    %v676 = vsel %vm184, %v672, 0
    %v679 = vsel %vm184, %v674, 0
    %681 = vmatprep.subr.bf16.mxu0 0
    %682 = vmatpush1.bf16.xpose.msra.mxu0 %v679
    %683 = vmatprep.subr.bf16.mxu0 0
    %684 = vmatpush1.bf16.xpose.msra.mxu0 0
    %685 = vmatprep.subr.bf16.mxu0 0
    %686 = vmatpush1.bf16.xpose.msra.mxu0 0
    %687 = vmatprep.subr.bf16.mxu0 0
    %688 = vmatpush1.bf16.xpose.msra.mxu0 0
    %689 = vmatprep.subr.bf16.mxu0 0
    %690 = vmatpush1.bf16.xpose.msra.mxu0 0
    %691 = vmatprep.subr.bf16.mxu0 0
    %692 = vmatpush1.bf16.xpose.msra.mxu0 0
    %693 = vmatprep.subr.bf16.mxu0 0
    %694 = vmatpush1.bf16.xpose.msra.mxu0 0
    %695 = vmatprep.subr.bf16.mxu0 0
    %696 = vmatpush1.bf16.xpose.msra.mxu0 0
    %697 = vmatprep.subr.bf16.mxu0 0
    %698 = vmatpush1.bf16.xpose.msra.mxu0 0
    %699 = vmatprep.subr.bf16.mxu0 0
    %700 = vmatpush1.bf16.xpose.msra.mxu0 0
    %701 = vmatprep.subr.bf16.mxu0 0
    %702 = vmatpush1.bf16.xpose.msra.mxu0 0
    %703 = vmatprep.subr.bf16.mxu0 0
    %704 = vmatpush1.bf16.xpose.msra.mxu0 0
    %705 = vmatprep.subr.bf16.mxu0 0
    %706 = vmatpush1.bf16.xpose.msra.mxu0 0
    %707 = vmatprep.subr.bf16.mxu0 0
    %708 = vmatpush1.bf16.xpose.msra.mxu0 0
    %709 = vmatprep.subr.bf16.mxu0 0
    %710 = vmatpush1.bf16.xpose.msra.mxu0 0
    %711 = vmatprep.subr.bf16.mxu0 0
    %712 = vmatpush1.bf16.xpose.msra.mxu0 0
    %713 = vmatprep.mubr.bf16.mxu0 0
    %714 = vmatmul.mubr.bf16.gmra.mrb[0].mxu0 %v676
    %v715 = vpop.f32.mrb[0].mxu0
    %v716 = vadd.f32 %v110, %v715
    %v717 = vpop.f32.mrb[0].mxu0
    %v718 = vpop.f32.mrb[0].mxu0
    %v719 = vpop.f32.mrb[0].mxu0
    %720 = vdwg.mxu0
    %v721 = vsel %vm184, %v666, -inf
    %722 = vmax.xlane.f32.xlu0 %v721
    %v723 = vpop.xlane.xlu0 %722
    %v724 = vsel %vm184, %v716, -inf
    %725 = vmax.xlane.f32.xlu0 %v724
    %v726 = vpop.xlane.xlu0 %725
    %v727 = vsub.f32 %v666, %v723
    %v728 = vsub.f32 %v716, %v726
    %v729 = vmul.f32 %v727, 1.442695
    %v730 = vpow.pop %v729
    %v731 = vmul.f32 %v728, 1.442695
    %v732 = vpow.pop %v731
    %v733 = vsel %vm184, %v730, 0.0
    %734 = vadd.xlane.f32.xlu0 %v733
    %v735 = vpop.xlane.xlu0 %734
    %v736 = vsel %vm184, %v732, 0.0
    %737 = vadd.xlane.f32.xlu0 %v736
    %v738 = vpop.xlane.xlu0 %737
    %v739 = vpack.c.bf16 %v730, %v730
    %v740 = vpack.c.bf16 %v732, %v732
    %741 = vrot.lane.b32.xlu0 %v179, 48
    %v742 = vpop.permute.xlu0 %741
    %v744 = vsel %vm184, %v739, 0
    %v747 = vsel %vm305, %v742, 0
    %749 = vmatprep.subr.bf16.mxu0 0
    %750 = vmatpush1.bf16.msra.mxu0 %v747
    %751 = vmatprep.subr.bf16.mxu0 0
    %752 = vmatpush1.bf16.msra.mxu0 0
    %753 = vmatprep.subr.bf16.mxu0 0
    %754 = vmatpush1.bf16.msra.mxu0 0
    %755 = vmatprep.subr.bf16.mxu0 0
    %756 = vmatpush1.bf16.msra.mxu0 0
    %757 = vmatprep.subr.bf16.mxu0 0
    %758 = vmatpush1.bf16.msra.mxu0 0
    %759 = vmatprep.subr.bf16.mxu0 0
    %760 = vmatpush1.bf16.msra.mxu0 0
    %761 = vmatprep.subr.bf16.mxu0 0
    %762 = vmatpush1.bf16.msra.mxu0 0
    %763 = vmatprep.subr.bf16.mxu0 0
    %764 = vmatpush1.bf16.msra.mxu0 0
    %765 = vmatprep.subr.bf16.mxu0 0
    %766 = vmatpush1.bf16.msra.mxu0 0
    %767 = vmatprep.subr.bf16.mxu0 0
    %768 = vmatpush1.bf16.msra.mxu0 0
    %769 = vmatprep.subr.bf16.mxu0 0
    %770 = vmatpush1.bf16.msra.mxu0 0
    %771 = vmatprep.subr.bf16.mxu0 0
    %772 = vmatpush1.bf16.msra.mxu0 0
    %773 = vmatprep.subr.bf16.mxu0 0
    %774 = vmatpush1.bf16.msra.mxu0 0
    %775 = vmatprep.subr.bf16.mxu0 0
    %776 = vmatpush1.bf16.msra.mxu0 0
    %777 = vmatprep.subr.bf16.mxu0 0
    %778 = vmatpush1.bf16.msra.mxu0 0
    %779 = vmatprep.subr.bf16.mxu0 0
    %780 = vmatpush1.bf16.msra.mxu0 0
    %781 = vmatprep.mubr.bf16.mxu0 0
    %782 = vmatmul.mubr.bf16.gmra.mrb[0].mxu0 %v744
    %v783 = vpop.f32.mrb[0].mxu0
    %v784 = vadd.f32 0.0, %v783
    %v785 = vpop.f32.mrb[0].mxu0
    %v786 = vpop.f32.mrb[0].mxu0
    %v787 = vpop.f32.mrb[0].mxu0
    %788 = vdwg.mxu0
    %789 = vrot.lane.b32.xlu0 %v180, 48
    %v790 = vpop.permute.xlu0 %789
    %v792 = vsel %vm184, %v740, 0
    %v795 = vsel %vm305, %v790, 0
    %797 = vmatprep.subr.bf16.mxu0 0
    %798 = vmatpush1.bf16.msra.mxu0 %v795
    %799 = vmatprep.subr.bf16.mxu0 0
    %800 = vmatpush1.bf16.msra.mxu0 0
    %801 = vmatprep.subr.bf16.mxu0 0
    %802 = vmatpush1.bf16.msra.mxu0 0
    %803 = vmatprep.subr.bf16.mxu0 0
    %804 = vmatpush1.bf16.msra.mxu0 0
    %805 = vmatprep.subr.bf16.mxu0 0
    %806 = vmatpush1.bf16.msra.mxu0 0
    %807 = vmatprep.subr.bf16.mxu0 0
    %808 = vmatpush1.bf16.msra.mxu0 0
    %809 = vmatprep.subr.bf16.mxu0 0
    %810 = vmatpush1.bf16.msra.mxu0 0
    %811 = vmatprep.subr.bf16.mxu0 0
    %812 = vmatpush1.bf16.msra.mxu0 0
    %813 = vmatprep.subr.bf16.mxu0 0
    %814 = vmatpush1.bf16.msra.mxu0 0
    %815 = vmatprep.subr.bf16.mxu0 0
    %816 = vmatpush1.bf16.msra.mxu0 0
    %817 = vmatprep.subr.bf16.mxu0 0
    %818 = vmatpush1.bf16.msra.mxu0 0
    %819 = vmatprep.subr.bf16.mxu0 0
    %820 = vmatpush1.bf16.msra.mxu0 0
    %821 = vmatprep.subr.bf16.mxu0 0
    %822 = vmatpush1.bf16.msra.mxu0 0
    %823 = vmatprep.subr.bf16.mxu0 0
    %824 = vmatpush1.bf16.msra.mxu0 0
    %825 = vmatprep.subr.bf16.mxu0 0
    %826 = vmatpush1.bf16.msra.mxu0 0
    %827 = vmatprep.subr.bf16.mxu0 0
    %828 = vmatpush1.bf16.msra.mxu0 0
    %829 = vmatprep.mubr.bf16.mxu0 0
    %830 = vmatmul.mubr.bf16.gmra.mrb[0].mxu0 %v792
    %v831 = vpop.f32.mrb[0].mxu0
    %v832 = vadd.f32 0.0, %v831
    %v833 = vpop.f32.mrb[0].mxu0
    %v834 = vpop.f32.mrb[0].mxu0
    %v835 = vpop.f32.mrb[0].mxu0
    %836 = vdwg.mxu0
    %v837 = vrcp.pop %v735
    %v838 = vrcp.pop %v738
    %v839 = vmul.f32 %v784, %v837
    %v840 = vmul.f32 %v832, %v838
    %841 = vrot.lane.b32.xlu0 %v179, 104
    %v842 = vpop.permute.xlu0 %841
    %843 = vrot.lane.b32.xlu0 %v179, 72
    %v844 = vpop.permute.xlu0 %843
    %v846 = vsel %vm184, %v842, 0
    %v849 = vsel %vm184, %v844, 0
    %851 = vmatprep.subr.bf16.mxu0 0
    %852 = vmatpush1.bf16.xpose.msra.mxu0 %v849
    %853 = vmatprep.subr.bf16.mxu0 0
    %854 = vmatpush1.bf16.xpose.msra.mxu0 0
    %855 = vmatprep.subr.bf16.mxu0 0
    %856 = vmatpush1.bf16.xpose.msra.mxu0 0
    %857 = vmatprep.subr.bf16.mxu0 0
    %858 = vmatpush1.bf16.xpose.msra.mxu0 0
    %859 = vmatprep.subr.bf16.mxu0 0
    %860 = vmatpush1.bf16.xpose.msra.mxu0 0
    %861 = vmatprep.subr.bf16.mxu0 0
    %862 = vmatpush1.bf16.xpose.msra.mxu0 0
    %863 = vmatprep.subr.bf16.mxu0 0
    %864 = vmatpush1.bf16.xpose.msra.mxu0 0
    %865 = vmatprep.subr.bf16.mxu0 0
    %866 = vmatpush1.bf16.xpose.msra.mxu0 0
    %867 = vmatprep.subr.bf16.mxu0 0
    %868 = vmatpush1.bf16.xpose.msra.mxu0 0
    %869 = vmatprep.subr.bf16.mxu0 0
    %870 = vmatpush1.bf16.xpose.msra.mxu0 0
    %871 = vmatprep.subr.bf16.mxu0 0
    %872 = vmatpush1.bf16.xpose.msra.mxu0 0
    %873 = vmatprep.subr.bf16.mxu0 0
    %874 = vmatpush1.bf16.xpose.msra.mxu0 0
    %875 = vmatprep.subr.bf16.mxu0 0
    %876 = vmatpush1.bf16.xpose.msra.mxu0 0
    %877 = vmatprep.subr.bf16.mxu0 0
    %878 = vmatpush1.bf16.xpose.msra.mxu0 0
    %879 = vmatprep.subr.bf16.mxu0 0
    %880 = vmatpush1.bf16.xpose.msra.mxu0 0
    %881 = vmatprep.subr.bf16.mxu0 0
    %882 = vmatpush1.bf16.xpose.msra.mxu0 0
    %883 = vmatprep.mubr.bf16.mxu0 0
    %884 = vmatmul.mubr.bf16.gmra.mrb[0].mxu0 %v846
    %v885 = vpop.f32.mrb[0].mxu0
    %v886 = vadd.f32 %v109, %v885
    %v887 = vpop.f32.mrb[0].mxu0
    %v888 = vpop.f32.mrb[0].mxu0
    %v889 = vpop.f32.mrb[0].mxu0
    %890 = vdwg.mxu0
    %891 = vrot.lane.b32.xlu0 %v180, 104
    %v892 = vpop.permute.xlu0 %891
    %893 = vrot.lane.b32.xlu0 %v180, 72
    %v894 = vpop.permute.xlu0 %893
    %v896 = vsel %vm184, %v892, 0
    %v899 = vsel %vm184, %v894, 0
    %901 = vmatprep.subr.bf16.mxu0 0
    %902 = vmatpush1.bf16.xpose.msra.mxu0 %v899
    %903 = vmatprep.subr.bf16.mxu0 0
    %904 = vmatpush1.bf16.xpose.msra.mxu0 0
    %905 = vmatprep.subr.bf16.mxu0 0
    %906 = vmatpush1.bf16.xpose.msra.mxu0 0
    %907 = vmatprep.subr.bf16.mxu0 0
    %908 = vmatpush1.bf16.xpose.msra.mxu0 0
    %909 = vmatprep.subr.bf16.mxu0 0
    %910 = vmatpush1.bf16.xpose.msra.mxu0 0
    %911 = vmatprep.subr.bf16.mxu0 0
    %912 = vmatpush1.bf16.xpose.msra.mxu0 0
    %913 = vmatprep.subr.bf16.mxu0 0
    %914 = vmatpush1.bf16.xpose.msra.mxu0 0
    %915 = vmatprep.subr.bf16.mxu0 0
    %916 = vmatpush1.bf16.xpose.msra.mxu0 0
    %917 = vmatprep.subr.bf16.mxu0 0
    %918 = vmatpush1.bf16.xpose.msra.mxu0 0
    %919 = vmatprep.subr.bf16.mxu0 0
    %920 = vmatpush1.bf16.xpose.msra.mxu0 0
    %921 = vmatprep.subr.bf16.mxu0 0
    %922 = vmatpush1.bf16.xpose.msra.mxu0 0
    %923 = vmatprep.subr.bf16.mxu0 0
    %924 = vmatpush1.bf16.xpose.msra.mxu0 0
    %925 = vmatprep.subr.bf16.mxu0 0
    %926 = vmatpush1.bf16.xpose.msra.mxu0 0
    %927 = vmatprep.subr.bf16.mxu0 0
    %928 = vmatpush1.bf16.xpose.msra.mxu0 0
    %929 = vmatprep.subr.bf16.mxu0 0
    %930 = vmatpush1.bf16.xpose.msra.mxu0 0
    %931 = vmatprep.subr.bf16.mxu0 0
    %932 = vmatpush1.bf16.xpose.msra.mxu0 0
    %933 = vmatprep.mubr.bf16.mxu0 0
    %934 = vmatmul.mubr.bf16.gmra.mrb[0].mxu0 %v896
    %v935 = vpop.f32.mrb[0].mxu0
    %v936 = vadd.f32 %v110, %v935
    %v937 = vpop.f32.mrb[0].mxu0
    %v938 = vpop.f32.mrb[0].mxu0
    %v939 = vpop.f32.mrb[0].mxu0
    %940 = vdwg.mxu0
    %v941 = vsel %vm184, %v886, -inf
    %942 = vmax.xlane.f32.xlu0 %v941
    %v943 = vpop.xlane.xlu0 %942
    %v944 = vsel %vm184, %v936, -inf
    %945 = vmax.xlane.f32.xlu0 %v944
    %v946 = vpop.xlane.xlu0 %945
    %v947 = vsub.f32 %v886, %v943
    %v948 = vsub.f32 %v936, %v946
    %v949 = vmul.f32 %v947, 1.442695
    %v950 = vpow.pop %v949
    %v951 = vmul.f32 %v948, 1.442695
    %v952 = vpow.pop %v951
    %v953 = vsel %vm184, %v950, 0.0
    %954 = vadd.xlane.f32.xlu0 %v953
    %v955 = vpop.xlane.xlu0 %954
    %v956 = vsel %vm184, %v952, 0.0
    %957 = vadd.xlane.f32.xlu0 %v956
    %v958 = vpop.xlane.xlu0 %957
    %v959 = vpack.c.bf16 %v950, %v950
    %v960 = vpack.c.bf16 %v952, %v952
    %961 = vrot.lane.b32.xlu0 %v179, 40
    %v962 = vpop.permute.xlu0 %961
    %v964 = vsel %vm184, %v959, 0
    %v967 = vsel %vm305, %v962, 0
    %969 = vmatprep.subr.bf16.mxu0 0
    %970 = vmatpush1.bf16.msra.mxu0 %v967
    %971 = vmatprep.subr.bf16.mxu0 0
    %972 = vmatpush1.bf16.msra.mxu0 0
    %973 = vmatprep.subr.bf16.mxu0 0
    %974 = vmatpush1.bf16.msra.mxu0 0
    %975 = vmatprep.subr.bf16.mxu0 0
    %976 = vmatpush1.bf16.msra.mxu0 0
    %977 = vmatprep.subr.bf16.mxu0 0
    %978 = vmatpush1.bf16.msra.mxu0 0
    %979 = vmatprep.subr.bf16.mxu0 0
    %980 = vmatpush1.bf16.msra.mxu0 0
    %981 = vmatprep.subr.bf16.mxu0 0
    %982 = vmatpush1.bf16.msra.mxu0 0
    %983 = vmatprep.subr.bf16.mxu0 0
    %984 = vmatpush1.bf16.msra.mxu0 0
    %985 = vmatprep.subr.bf16.mxu0 0
    %986 = vmatpush1.bf16.msra.mxu0 0
    %987 = vmatprep.subr.bf16.mxu0 0
    %988 = vmatpush1.bf16.msra.mxu0 0
    %989 = vmatprep.subr.bf16.mxu0 0
    %990 = vmatpush1.bf16.msra.mxu0 0
    %991 = vmatprep.subr.bf16.mxu0 0
    %992 = vmatpush1.bf16.msra.mxu0 0
    %993 = vmatprep.subr.bf16.mxu0 0
    %994 = vmatpush1.bf16.msra.mxu0 0
    %995 = vmatprep.subr.bf16.mxu0 0
    %996 = vmatpush1.bf16.msra.mxu0 0
    %997 = vmatprep.subr.bf16.mxu0 0
    %998 = vmatpush1.bf16.msra.mxu0 0
    %999 = vmatprep.subr.bf16.mxu0 0
    %1000 = vmatpush1.bf16.msra.mxu0 0
    %1001 = vmatprep.mubr.bf16.mxu0 0
    %1002 = vmatmul.mubr.bf16.gmra.mrb[0].mxu0 %v964
    %v1003 = vpop.f32.mrb[0].mxu0
    %v1004 = vadd.f32 0.0, %v1003
    %v1005 = vpop.f32.mrb[0].mxu0
    %v1006 = vpop.f32.mrb[0].mxu0
    %v1007 = vpop.f32.mrb[0].mxu0
    %1008 = vdwg.mxu0
    %1009 = vrot.lane.b32.xlu0 %v180, 40
    %v1010 = vpop.permute.xlu0 %1009
    %v1012 = vsel %vm184, %v960, 0
    %v1015 = vsel %vm305, %v1010, 0
    %1017 = vmatprep.subr.bf16.mxu0 0
    %1018 = vmatpush1.bf16.msra.mxu0 %v1015
    %1019 = vmatprep.subr.bf16.mxu0 0
    %1020 = vmatpush1.bf16.msra.mxu0 0
    %1021 = vmatprep.subr.bf16.mxu0 0
    %1022 = vmatpush1.bf16.msra.mxu0 0
    %1023 = vmatprep.subr.bf16.mxu0 0
    %1024 = vmatpush1.bf16.msra.mxu0 0
    %1025 = vmatprep.subr.bf16.mxu0 0
    %1026 = vmatpush1.bf16.msra.mxu0 0
    %1027 = vmatprep.subr.bf16.mxu0 0
    %1028 = vmatpush1.bf16.msra.mxu0 0
    %1029 = vmatprep.subr.bf16.mxu0 0
    %1030 = vmatpush1.bf16.msra.mxu0 0
    %1031 = vmatprep.subr.bf16.mxu0 0
    %1032 = vmatpush1.bf16.msra.mxu0 0
    %1033 = vmatprep.subr.bf16.mxu0 0
    %1034 = vmatpush1.bf16.msra.mxu0 0
    %1035 = vmatprep.subr.bf16.mxu0 0
    %1036 = vmatpush1.bf16.msra.mxu0 0
    %1037 = vmatprep.subr.bf16.mxu0 0
    %1038 = vmatpush1.bf16.msra.mxu0 0
    %1039 = vmatprep.subr.bf16.mxu0 0
    %1040 = vmatpush1.bf16.msra.mxu0 0
    %1041 = vmatprep.subr.bf16.mxu0 0
    %1042 = vmatpush1.bf16.msra.mxu0 0
    %1043 = vmatprep.subr.bf16.mxu0 0
    %1044 = vmatpush1.bf16.msra.mxu0 0
    %1045 = vmatprep.subr.bf16.mxu0 0
    %1046 = vmatpush1.bf16.msra.mxu0 0
    %1047 = vmatprep.subr.bf16.mxu0 0
    %1048 = vmatpush1.bf16.msra.mxu0 0
    %1049 = vmatprep.mubr.bf16.mxu0 0
    %1050 = vmatmul.mubr.bf16.gmra.mrb[0].mxu0 %v1012
    %v1051 = vpop.f32.mrb[0].mxu0
    %v1052 = vadd.f32 0.0, %v1051
    %v1053 = vpop.f32.mrb[0].mxu0
    %v1054 = vpop.f32.mrb[0].mxu0
    %v1055 = vpop.f32.mrb[0].mxu0
    %1056 = vdwg.mxu0
    %v1057 = vrcp.pop %v955
    %v1058 = vrcp.pop %v958
    %v1059 = vmul.f32 %v1004, %v1057
    %v1060 = vmul.f32 %v1052, %v1058
    %1063 = vrot.lane.b32.xlu0 %v619, 8
    %v1064 = vpop.permute.xlu0 %1063
    %1065 = vrot.lane.b32.xlu0 %v620, 8
    %v1066 = vpop.permute.xlu0 %1065
    %1071 = vrot.lane.b32.xlu0 %v839, 16
    %v1072 = vpop.permute.xlu0 %1071
    %1073 = vrot.lane.b32.xlu0 %v840, 16
    %v1074 = vpop.permute.xlu0 %1073
    %1079 = vrot.lane.b32.xlu0 %v1059, 24
    %v1080 = vpop.permute.xlu0 %1079
    %1081 = vrot.lane.b32.xlu0 %v1060, 24
    %v1082 = vpop.permute.xlu0 %1081
    %v1085 = vsel %vm184, %v399, %v1064
    %v1086 = vsel %vm184, %v400, %v1066
    %vm1087 = vcmask 130048
    %v1088 = vsel %vm1087, %v1085, %v1072
    %v1089 = vsel %vm1087, %v1086, %v1074
    %vm1090 = vcmask 195584
    %v1091 = vsel %vm1090, %v1088, %v1080
    %v1092 = vsel %vm1090, %v1089, %v1082
    %v1093 = vld [vmem:[%s6] sm:$0xf]
    %v1094 = vld [vmem:[%s6 + $0x4] sm:$0xf]
    %v1095 = vld [vmem:[%s6 + $0x8] sm:$0xf]
    %v1096 = vld [vmem:[%s6 + $0xc] sm:$0xf]
    %v1097 = vpack.c.bf16 %v1092, %v1091
    %v1098 = vld [vmem:[%s7] sm:$0x1]
    %v1100 = vlaneseq
    %v1101 = vshrl.u32 %v1100, 7
    %v1102 = vsub.s32 0, %v1101
    %v1103 = vrot.slane %v1098, %v1102
    %v1109 = vunpack.c.l.b16 %v1093
    %v1110 = vunpack.c.l.b16 %v1094
    %v1111 = vunpack.c.l.b16 %v1095
    %v1112 = vunpack.c.l.b16 %v1096
    %v1113 = vpack.c.b16 %v1110, %v1109
    %v1114 = vpack.c.b16 %v1112, %v1111
    %v1118 = vsel %vm65, %v1097, 0
    %1120 = vmatprep.subr.bf16.mxu0 0
    %1121 = vmatpush1.bf16.msra.mxu0 %v1113
    %1122 = vmatprep.subr.bf16.mxu0 0
    %1123 = vmatpush1.bf16.msra.mxu0 %v1114
    %1124 = vmatprep.subr.bf16.mxu0 0
    %1125 = vmatpush1.bf16.msra.mxu0 0
    %1126 = vmatprep.subr.bf16.mxu0 0
    %1127 = vmatpush1.bf16.msra.mxu0 0
    %1128 = vmatprep.subr.bf16.mxu0 0
    %1129 = vmatpush1.bf16.msra.mxu0 0
    %1130 = vmatprep.subr.bf16.mxu0 0
    %1131 = vmatpush1.bf16.msra.mxu0 0
    %1132 = vmatprep.subr.bf16.mxu0 0
    %1133 = vmatpush1.bf16.msra.mxu0 0
    %1134 = vmatprep.subr.bf16.mxu0 0
    %1135 = vmatpush1.bf16.msra.mxu0 0
    %1136 = vmatprep.subr.bf16.mxu0 0
    %1137 = vmatpush1.bf16.msra.mxu0 0
    %1138 = vmatprep.subr.bf16.mxu0 0
    %1139 = vmatpush1.bf16.msra.mxu0 0
    %1140 = vmatprep.subr.bf16.mxu0 0
    %1141 = vmatpush1.bf16.msra.mxu0 0
    %1142 = vmatprep.subr.bf16.mxu0 0
    %1143 = vmatpush1.bf16.msra.mxu0 0
    %1144 = vmatprep.subr.bf16.mxu0 0
    %1145 = vmatpush1.bf16.msra.mxu0 0
    %1146 = vmatprep.subr.bf16.mxu0 0
    %1147 = vmatpush1.bf16.msra.mxu0 0
    %1148 = vmatprep.subr.bf16.mxu0 0
    %1149 = vmatpush1.bf16.msra.mxu0 0
    %1150 = vmatprep.subr.bf16.mxu0 0
    %1151 = vmatpush1.bf16.msra.mxu0 0
    %1152 = vmatprep.mubr.bf16.mxu0 0
    %1153 = vmatmul.mubr.bf16.gmra.mrb[0].mxu0 %v1118
    %v1154 = vpop.f32.mrb[0].mxu0
    %v1155 = vadd.f32 %v1103, %v1154
    %v1156 = vpop.f32.mrb[0].mxu0
    %v1157 = vpop.f32.mrb[0].mxu0
    %v1158 = vadd.f32 %v1103, %v1157
    %v1159 = vpop.f32.mrb[0].mxu0
    %1160 = vdwg.mxu0
    %v1161 = vadd.f32 %v1155, %v107
    %v1162 = vadd.f32 %v1158, %v108
    %v1163 = vld [vmem:[%s8] sm:$0x1]
    %v1164 = vld [vmem:[%s9] sm:$0x1]
    %v1165 = vsel %vm65, %v1161, 0.0
    %1166 = vadd.xlane.f32.xlu0 %v1165
    %v1167 = vpop.xlane.xlu0 %1166
    %v1168 = vsel %vm65, %v1162, 0.0
    %1169 = vadd.xlane.f32.xlu0 %v1168
    %v1170 = vpop.xlane.xlu0 %1169
    %v1171 = vmul.f32 %v1167, %v72
    %v1172 = vmul.f32 %v1170, %v72
    %v1173 = vsub.f32 %v1161, %v1171
    %v1174 = vsub.f32 %v1162, %v1172
    %v1175 = vmul.f32 %v1173, %v1173
    %v1176 = vmul.f32 %v1174, %v1174
    %v1177 = vsel %vm65, %v1175, 0.0
    %1178 = vadd.xlane.f32.xlu0 %v1177
    %v1179 = vpop.xlane.xlu0 %1178
    %v1180 = vsel %vm65, %v1176, 0.0
    %1181 = vadd.xlane.f32.xlu0 %v1180
    %v1182 = vpop.xlane.xlu0 %1181
    %v1183 = vmul.f32 %v1179, %v72
    %v1184 = vmul.f32 %v1182, %v72
    %v1185 = vadd.f32 %v1183, 1e-12
    %v1186 = vadd.f32 %v1184, 1e-12
    %v1187 = vrsqrt.pop %v1185
    %v1188 = vrsqrt.pop %v1186
    %v1189 = vmul.f32 %v1173, %v1187
    %v1190 = vmul.f32 %v1174, %v1188
    %v1192 = vlaneseq
    %v1193 = vshrl.u32 %v1192, 7
    %v1194 = vsub.s32 0, %v1193
    %v1195 = vrot.slane %v1163, %v1194
    %v1197 = vmul.f32 %v1189, %v1195
    %v1198 = vmul.f32 %v1190, %v1195
    %v1200 = vlaneseq
    %v1201 = vshrl.u32 %v1200, 7
    %v1202 = vsub.s32 0, %v1201
    %v1203 = vrot.slane %v1164, %v1202
    %v1205 = vadd.f32 %v1197, %v1203
    %v1206 = vadd.f32 %v1198, %v1203
    %v1207 = vld [vmem:[%s10] sm:$0xf]
    %v1208 = vld [vmem:[%s10 + $0x4] sm:$0xf]
    %v1209 = vld [vmem:[%s10 + $0x8] sm:$0xf]
    %v1210 = vld [vmem:[%s10 + $0xc] sm:$0xf]
    %v1211 = vpack.c.bf16 %v1206, %v1205
    %v1212 = vld [vmem:[%s11] sm:$0x1]
    %v1214 = vlaneseq
    %v1215 = vshrl.u32 %v1214, 7
    %v1216 = vsub.s32 0, %v1215
    %v1217 = vrot.slane %v1212, %v1216
    %v1223 = vunpack.c.l.b16 %v1207
    %v1224 = vunpack.c.l.b16 %v1208
    %v1225 = vunpack.c.l.b16 %v1209
    %v1226 = vunpack.c.l.b16 %v1210
    %v1227 = vpack.c.b16 %v1224, %v1223
    %v1228 = vpack.c.b16 %v1226, %v1225
    %v1232 = vsel %vm65, %v1211, 0
    %1234 = vmatprep.subr.bf16.mxu0 0
    %1235 = vmatpush1.bf16.msra.mxu0 %v1227
    %1236 = vmatprep.subr.bf16.mxu0 0
    %1237 = vmatpush1.bf16.msra.mxu0 %v1228
    %1238 = vmatprep.subr.bf16.mxu0 0
    %1239 = vmatpush1.bf16.msra.mxu0 0
    %1240 = vmatprep.subr.bf16.mxu0 0
    %1241 = vmatpush1.bf16.msra.mxu0 0
    %1242 = vmatprep.subr.bf16.mxu0 0
    %1243 = vmatpush1.bf16.msra.mxu0 0
    %1244 = vmatprep.subr.bf16.mxu0 0
    %1245 = vmatpush1.bf16.msra.mxu0 0
    %1246 = vmatprep.subr.bf16.mxu0 0
    %1247 = vmatpush1.bf16.msra.mxu0 0
    %1248 = vmatprep.subr.bf16.mxu0 0
    %1249 = vmatpush1.bf16.msra.mxu0 0
    %1250 = vmatprep.subr.bf16.mxu0 0
    %1251 = vmatpush1.bf16.msra.mxu0 0
    %1252 = vmatprep.subr.bf16.mxu0 0
    %1253 = vmatpush1.bf16.msra.mxu0 0
    %1254 = vmatprep.subr.bf16.mxu0 0
    %1255 = vmatpush1.bf16.msra.mxu0 0
    %1256 = vmatprep.subr.bf16.mxu0 0
    %1257 = vmatpush1.bf16.msra.mxu0 0
    %1258 = vmatprep.subr.bf16.mxu0 0
    %1259 = vmatpush1.bf16.msra.mxu0 0
    %1260 = vmatprep.subr.bf16.mxu0 0
    %1261 = vmatpush1.bf16.msra.mxu0 0
    %1262 = vmatprep.subr.bf16.mxu0 0
    %1263 = vmatpush1.bf16.msra.mxu0 0
    %1264 = vmatprep.subr.bf16.mxu0 0
    %1265 = vmatpush1.bf16.msra.mxu0 0
    %1266 = vmatprep.mubr.bf16.mxu0 0
    %1267 = vmatmul.mubr.bf16.gmra.mrb[0].mxu0 %v1232
    %v1268 = vpop.f32.mrb[0].mxu0
    %v1269 = vadd.f32 %v1217, %v1268
    %v1270 = vpop.f32.mrb[0].mxu0
    %v1271 = vpop.f32.mrb[0].mxu0
    %v1272 = vadd.f32 %v1217, %v1271
    %v1273 = vpop.f32.mrb[0].mxu0
    %1274 = vdwg.mxu0
    %v1275 = vmul.f32 %v1269, 0.5
    %v1276 = vmul.f32 %v1272, 0.5
    %v1277 = vmul.f32 %v1269, 0.044715
    %v1278 = vmul.f32 %v1272, 0.044715
    %v1279 = vmul.f32 %v1277, %v1269
    %v1280 = vmul.f32 %v1278, %v1272
    %v1281 = vmul.f32 %v1279, %v1269
    %v1282 = vmul.f32 %v1280, %v1272
    %v1283 = vadd.f32 %v1269, %v1281
    %v1284 = vadd.f32 %v1272, %v1282
    %v1285 = vmul.f32 %v1283, 0.7978846
    %v1286 = vmul.f32 %v1284, 0.7978846
    %v1287 = vtanh.pop %v1285
    %v1288 = vtanh.pop %v1286
    %v1289 = vadd.f32 %v1287, 1.0
    %v1290 = vadd.f32 %v1288, 1.0
    %v1291 = vmul.f32 %v1275, %v1289
    %v1292 = vmul.f32 %v1276, %v1290
    %v1293 = vld [vmem:[%s12] sm:$0xf]
    %v1294 = vld [vmem:[%s12 + $0x4] sm:$0xf]
    %v1295 = vld [vmem:[%s12 + $0x8] sm:$0xf]
    %v1296 = vld [vmem:[%s12 + $0xc] sm:$0xf]
    %v1297 = vld [vmem:[%s12 + $0x10] sm:$0xf]
    %v1298 = vld [vmem:[%s12 + $0x14] sm:$0xf]
    %v1299 = vld [vmem:[%s12 + $0x18] sm:$0xf]
    %v1300 = vld [vmem:[%s12 + $0x1c] sm:$0xf]
    %v1301 = vpack.c.bf16 %v1292, %v1291
    %v1302 = vld [vmem:[%s13] sm:$0x1]
    %v1304 = vlaneseq
    %v1305 = vshrl.u32 %v1304, 7
    %v1306 = vsub.s32 0, %v1305
    %v1307 = vrot.slane %v1302, %v1306
    %v1317 = vunpack.c.l.b16 %v1293
    %v1318 = vunpack.c.l.b16 %v1294
    %v1319 = vunpack.c.l.b16 %v1295
    %v1320 = vunpack.c.l.b16 %v1296
    %v1321 = vunpack.c.l.b16 %v1297
    %v1322 = vunpack.c.l.b16 %v1298
    %v1323 = vunpack.c.l.b16 %v1299
    %v1324 = vunpack.c.l.b16 %v1300
    %v1325 = vpack.c.b16 %v1318, %v1317
    %v1326 = vpack.c.b16 %v1320, %v1319
    %v1327 = vpack.c.b16 %v1322, %v1321
    %v1328 = vpack.c.b16 %v1324, %v1323
    %vm1333 = vcmask 523264
    %v1335 = vsel %vm1333, %v1301, 0
    %1337 = vmatprep.subr.bf16.mxu0 0
    %1338 = vmatpush1.bf16.msra.mxu0 %v1325
    %1339 = vmatprep.subr.bf16.mxu0 0
    %1340 = vmatpush1.bf16.msra.mxu0 %v1326
    %1341 = vmatprep.subr.bf16.mxu0 0
    %1342 = vmatpush1.bf16.msra.mxu0 %v1327
    %1343 = vmatprep.subr.bf16.mxu0 0
    %1344 = vmatpush1.bf16.msra.mxu0 %v1328
    %1345 = vmatprep.subr.bf16.mxu0 0
    %1346 = vmatpush1.bf16.msra.mxu0 0
    %1347 = vmatprep.subr.bf16.mxu0 0
    %1348 = vmatpush1.bf16.msra.mxu0 0
    %1349 = vmatprep.subr.bf16.mxu0 0
    %1350 = vmatpush1.bf16.msra.mxu0 0
    %1351 = vmatprep.subr.bf16.mxu0 0
    %1352 = vmatpush1.bf16.msra.mxu0 0
    %1353 = vmatprep.subr.bf16.mxu0 0
    %1354 = vmatpush1.bf16.msra.mxu0 0
    %1355 = vmatprep.subr.bf16.mxu0 0
    %1356 = vmatpush1.bf16.msra.mxu0 0
    %1357 = vmatprep.subr.bf16.mxu0 0
    %1358 = vmatpush1.bf16.msra.mxu0 0
    %1359 = vmatprep.subr.bf16.mxu0 0
    %1360 = vmatpush1.bf16.msra.mxu0 0
    %1361 = vmatprep.subr.bf16.mxu0 0
    %1362 = vmatpush1.bf16.msra.mxu0 0
    %1363 = vmatprep.subr.bf16.mxu0 0
    %1364 = vmatpush1.bf16.msra.mxu0 0
    %1365 = vmatprep.subr.bf16.mxu0 0
    %1366 = vmatpush1.bf16.msra.mxu0 0
    %1367 = vmatprep.subr.bf16.mxu0 0
    %1368 = vmatpush1.bf16.msra.mxu0 0
    %1369 = vmatprep.mubr.bf16.mxu0 0
    %1370 = vmatmul.mubr.bf16.gmra.mrb[0].mxu0 %v1335
    %v1371 = vpop.f32.mrb[0].mxu0
    %v1372 = vadd.f32 %v1307, %v1371
    %v1373 = vpop.f32.mrb[0].mxu0
    %v1374 = vpop.f32.mrb[0].mxu0
    %v1375 = vadd.f32 %v1307, %v1374
    %v1376 = vpop.f32.mrb[0].mxu0
    %1377 = vdwg.mxu0
    %v1378 = vadd.f32 %v1372, %v1205
    %v1379 = vadd.f32 %v1375, %v1206
    %v1380 = vld [vmem:[%s14] sm:$0x1]
    %v1381 = vld [vmem:[%s15] sm:$0x1]
    %v1382 = vsel %vm65, %v1378, 0.0
    %1383 = vadd.xlane.f32.xlu0 %v1382
    %v1384 = vpop.xlane.xlu0 %1383
    %v1385 = vsel %vm65, %v1379, 0.0
    %1386 = vadd.xlane.f32.xlu0 %v1385
    %v1387 = vpop.xlane.xlu0 %1386
    %v1388 = vmul.f32 %v1384, %v72
    %v1389 = vmul.f32 %v1387, %v72
    %v1390 = vsub.f32 %v1378, %v1388
    %v1391 = vsub.f32 %v1379, %v1389
    %v1392 = vmul.f32 %v1390, %v1390
    %v1393 = vmul.f32 %v1391, %v1391
    %v1394 = vsel %vm65, %v1392, 0.0
    %1395 = vadd.xlane.f32.xlu0 %v1394
    %v1396 = vpop.xlane.xlu0 %1395
    %v1397 = vsel %vm65, %v1393, 0.0
    %1398 = vadd.xlane.f32.xlu0 %v1397
    %v1399 = vpop.xlane.xlu0 %1398
    %v1400 = vmul.f32 %v1396, %v72
    %v1401 = vmul.f32 %v1399, %v72
    %v1402 = vadd.f32 %v1400, 1e-12
    %v1403 = vadd.f32 %v1401, 1e-12
    %v1404 = vrsqrt.pop %v1402
    %v1405 = vrsqrt.pop %v1403
    %v1406 = vmul.f32 %v1390, %v1404
    %v1407 = vmul.f32 %v1391, %v1405
    %v1409 = vlaneseq
    %v1410 = vshrl.u32 %v1409, 7
    %v1411 = vsub.s32 0, %v1410
    %v1412 = vrot.slane %v1380, %v1411
    %v1414 = vmul.f32 %v1406, %v1412
    %v1415 = vmul.f32 %v1407, %v1412
    %v1417 = vlaneseq
    %v1418 = vshrl.u32 %v1417, 7
    %v1419 = vsub.s32 0, %v1418
    %v1420 = vrot.slane %v1381, %v1419
    %v1422 = vadd.f32 %v1414, %v1420
    %v1423 = vadd.f32 %v1415, %v1420
    %s1424 = scalar_lea.vmem %s4, 16
    %v1425 = vld [vmem:[%s1424] sm:$0xf]
    %v1426 = vld [vmem:[%s1424 + $0x4] sm:$0xf]
    %v1427 = vld [vmem:[%s1424 + $0x8] sm:$0xf]
    %v1428 = vld [vmem:[%s1424 + $0xc] sm:$0xf]
    %v1429 = vpack.c.bf16 %v1423, %v1422
    %s1430 = scalar_lea.vmem %s5, 1
    %v1431 = vld [vmem:[%s1430] sm:$0x1]
    %v1433 = vlaneseq
    %v1434 = vshrl.u32 %v1433, 7
    %v1435 = vsub.s32 0, %v1434
    %v1436 = vrot.slane %v1431, %v1435
    %v1442 = vunpack.c.l.b16 %v1425
    %v1443 = vunpack.c.l.b16 %v1426
    %v1444 = vunpack.c.l.b16 %v1427
    %v1445 = vunpack.c.l.b16 %v1428
    %v1446 = vpack.c.b16 %v1443, %v1442
    %v1447 = vpack.c.b16 %v1445, %v1444
    %v1451 = vsel %vm65, %v1429, 0
    %1453 = vmatprep.subr.bf16.mxu0 0
    %1454 = vmatpush1.bf16.msra.mxu0 %v1446
    %1455 = vmatprep.subr.bf16.mxu0 0
    %1456 = vmatpush1.bf16.msra.mxu0 %v1447
    %1457 = vmatprep.subr.bf16.mxu0 0
    %1458 = vmatpush1.bf16.msra.mxu0 0
    %1459 = vmatprep.subr.bf16.mxu0 0
    %1460 = vmatpush1.bf16.msra.mxu0 0
    %1461 = vmatprep.subr.bf16.mxu0 0
    %1462 = vmatpush1.bf16.msra.mxu0 0
    %1463 = vmatprep.subr.bf16.mxu0 0
    %1464 = vmatpush1.bf16.msra.mxu0 0
    %1465 = vmatprep.subr.bf16.mxu0 0
    %1466 = vmatpush1.bf16.msra.mxu0 0
    %1467 = vmatprep.subr.bf16.mxu0 0
    %1468 = vmatpush1.bf16.msra.mxu0 0
    %1469 = vmatprep.subr.bf16.mxu0 0
    %1470 = vmatpush1.bf16.msra.mxu0 0
    %1471 = vmatprep.subr.bf16.mxu0 0
    %1472 = vmatpush1.bf16.msra.mxu0 0
    %1473 = vmatprep.subr.bf16.mxu0 0
    %1474 = vmatpush1.bf16.msra.mxu0 0
    %1475 = vmatprep.subr.bf16.mxu0 0
    %1476 = vmatpush1.bf16.msra.mxu0 0
    %1477 = vmatprep.subr.bf16.mxu0 0
    %1478 = vmatpush1.bf16.msra.mxu0 0
    %1479 = vmatprep.subr.bf16.mxu0 0
    %1480 = vmatpush1.bf16.msra.mxu0 0
    %1481 = vmatprep.subr.bf16.mxu0 0
    %1482 = vmatpush1.bf16.msra.mxu0 0
    %1483 = vmatprep.subr.bf16.mxu0 0
    %1484 = vmatpush1.bf16.msra.mxu0 0
    %1485 = vmatprep.mubr.bf16.mxu0 0
    %1486 = vmatmul.mubr.bf16.gmra.mrb[0].mxu0 %v1451
    %v1487 = vpop.f32.mrb[0].mxu0
    %v1488 = vadd.f32 %v1436, %v1487
    %v1489 = vpop.f32.mrb[0].mxu0
    %v1490 = vpop.f32.mrb[0].mxu0
    %v1491 = vadd.f32 %v1436, %v1490
    %v1492 = vpop.f32.mrb[0].mxu0
    %1493 = vdwg.mxu0
    %v1494 = vpack.c.bf16 %v1488, %v1488
    %v1495 = vpack.c.bf16 %v1491, %v1491
    %1497 = vrot.lane.b32.xlu0 %v1494, 96
    %v1498 = vpop.permute.xlu0 %1497
    %v1500 = vsel %vm184, %v1494, 0
    %v1503 = vsel %vm184, %v1498, 0
    %1505 = vmatprep.subr.bf16.mxu0 0
    %1506 = vmatpush1.bf16.xpose.msra.mxu0 %v1503
    %1507 = vmatprep.subr.bf16.mxu0 0
    %1508 = vmatpush1.bf16.xpose.msra.mxu0 0
    %1509 = vmatprep.subr.bf16.mxu0 0
    %1510 = vmatpush1.bf16.xpose.msra.mxu0 0
    %1511 = vmatprep.subr.bf16.mxu0 0
    %1512 = vmatpush1.bf16.xpose.msra.mxu0 0
    %1513 = vmatprep.subr.bf16.mxu0 0
    %1514 = vmatpush1.bf16.xpose.msra.mxu0 0
    %1515 = vmatprep.subr.bf16.mxu0 0
    %1516 = vmatpush1.bf16.xpose.msra.mxu0 0
    %1517 = vmatprep.subr.bf16.mxu0 0
    %1518 = vmatpush1.bf16.xpose.msra.mxu0 0
    %1519 = vmatprep.subr.bf16.mxu0 0
    %1520 = vmatpush1.bf16.xpose.msra.mxu0 0
    %1521 = vmatprep.subr.bf16.mxu0 0
    %1522 = vmatpush1.bf16.xpose.msra.mxu0 0
    %1523 = vmatprep.subr.bf16.mxu0 0
    %1524 = vmatpush1.bf16.xpose.msra.mxu0 0
    %1525 = vmatprep.subr.bf16.mxu0 0
    %1526 = vmatpush1.bf16.xpose.msra.mxu0 0
    %1527 = vmatprep.subr.bf16.mxu0 0
    %1528 = vmatpush1.bf16.xpose.msra.mxu0 0
    %1529 = vmatprep.subr.bf16.mxu0 0
    %1530 = vmatpush1.bf16.xpose.msra.mxu0 0
    %1531 = vmatprep.subr.bf16.mxu0 0
    %1532 = vmatpush1.bf16.xpose.msra.mxu0 0
    %1533 = vmatprep.subr.bf16.mxu0 0
    %1534 = vmatpush1.bf16.xpose.msra.mxu0 0
    %1535 = vmatprep.subr.bf16.mxu0 0
    %1536 = vmatpush1.bf16.xpose.msra.mxu0 0
    %1537 = vmatprep.mubr.bf16.mxu0 0
    %1538 = vmatmul.mubr.bf16.gmra.mrb[0].mxu0 %v1500
    %v1539 = vpop.f32.mrb[0].mxu0
    %v1540 = vadd.f32 %v109, %v1539
    %v1541 = vpop.f32.mrb[0].mxu0
    %v1542 = vpop.f32.mrb[0].mxu0
    %v1543 = vpop.f32.mrb[0].mxu0
    %1544 = vdwg.mxu0
    %1546 = vrot.lane.b32.xlu0 %v1495, 96
    %v1547 = vpop.permute.xlu0 %1546
    %v1549 = vsel %vm184, %v1495, 0
    %v1552 = vsel %vm184, %v1547, 0
    %1554 = vmatprep.subr.bf16.mxu0 0
    %1555 = vmatpush1.bf16.xpose.msra.mxu0 %v1552
    %1556 = vmatprep.subr.bf16.mxu0 0
    %1557 = vmatpush1.bf16.xpose.msra.mxu0 0
    %1558 = vmatprep.subr.bf16.mxu0 0
    %1559 = vmatpush1.bf16.xpose.msra.mxu0 0
    %1560 = vmatprep.subr.bf16.mxu0 0
    %1561 = vmatpush1.bf16.xpose.msra.mxu0 0
    %1562 = vmatprep.subr.bf16.mxu0 0
    %1563 = vmatpush1.bf16.xpose.msra.mxu0 0
    %1564 = vmatprep.subr.bf16.mxu0 0
    %1565 = vmatpush1.bf16.xpose.msra.mxu0 0
    %1566 = vmatprep.subr.bf16.mxu0 0
    %1567 = vmatpush1.bf16.xpose.msra.mxu0 0
    %1568 = vmatprep.subr.bf16.mxu0 0
    %1569 = vmatpush1.bf16.xpose.msra.mxu0 0
    %1570 = vmatprep.subr.bf16.mxu0 0
    %1571 = vmatpush1.bf16.xpose.msra.mxu0 0
    %1572 = vmatprep.subr.bf16.mxu0 0
    %1573 = vmatpush1.bf16.xpose.msra.mxu0 0
    %1574 = vmatprep.subr.bf16.mxu0 0
    %1575 = vmatpush1.bf16.xpose.msra.mxu0 0
    %1576 = vmatprep.subr.bf16.mxu0 0
    %1577 = vmatpush1.bf16.xpose.msra.mxu0 0
    %1578 = vmatprep.subr.bf16.mxu0 0
    %1579 = vmatpush1.bf16.xpose.msra.mxu0 0
    %1580 = vmatprep.subr.bf16.mxu0 0
    %1581 = vmatpush1.bf16.xpose.msra.mxu0 0
    %1582 = vmatprep.subr.bf16.mxu0 0
    %1583 = vmatpush1.bf16.xpose.msra.mxu0 0
    %1584 = vmatprep.subr.bf16.mxu0 0
    %1585 = vmatpush1.bf16.xpose.msra.mxu0 0
    %1586 = vmatprep.mubr.bf16.mxu0 0
    %1587 = vmatmul.mubr.bf16.gmra.mrb[0].mxu0 %v1549
    %v1588 = vpop.f32.mrb[0].mxu0
    %v1589 = vadd.f32 %v110, %v1588
    %v1590 = vpop.f32.mrb[0].mxu0
    %v1591 = vpop.f32.mrb[0].mxu0
    %v1592 = vpop.f32.mrb[0].mxu0
    %1593 = vdwg.mxu0
    %v1594 = vsel %vm184, %v1540, -inf
    %1595 = vmax.xlane.f32.xlu0 %v1594
    %v1596 = vpop.xlane.xlu0 %1595
    %v1597 = vsel %vm184, %v1589, -inf
    %1598 = vmax.xlane.f32.xlu0 %v1597
    %v1599 = vpop.xlane.xlu0 %1598
    %v1600 = vsub.f32 %v1540, %v1596
    %v1601 = vsub.f32 %v1589, %v1599
    %v1602 = vmul.f32 %v1600, 1.442695
    %v1603 = vpow.pop %v1602
    %v1604 = vmul.f32 %v1601, 1.442695
    %v1605 = vpow.pop %v1604
    %v1606 = vsel %vm184, %v1603, 0.0
    %1607 = vadd.xlane.f32.xlu0 %v1606
    %v1608 = vpop.xlane.xlu0 %1607
    %v1609 = vsel %vm184, %v1605, 0.0
    %1610 = vadd.xlane.f32.xlu0 %v1609
    %v1611 = vpop.xlane.xlu0 %1610
    %v1612 = vpack.c.bf16 %v1603, %v1603
    %v1613 = vpack.c.bf16 %v1605, %v1605
    %1614 = vrot.lane.b32.xlu0 %v1494, 64
    %v1615 = vpop.permute.xlu0 %1614
    %v1617 = vsel %vm184, %v1612, 0
    %v1620 = vsel %vm305, %v1615, 0
    %1622 = vmatprep.subr.bf16.mxu0 0
    %1623 = vmatpush1.bf16.msra.mxu0 %v1620
    %1624 = vmatprep.subr.bf16.mxu0 0
    %1625 = vmatpush1.bf16.msra.mxu0 0
    %1626 = vmatprep.subr.bf16.mxu0 0
    %1627 = vmatpush1.bf16.msra.mxu0 0
    %1628 = vmatprep.subr.bf16.mxu0 0
    %1629 = vmatpush1.bf16.msra.mxu0 0
    %1630 = vmatprep.subr.bf16.mxu0 0
    %1631 = vmatpush1.bf16.msra.mxu0 0
    %1632 = vmatprep.subr.bf16.mxu0 0
    %1633 = vmatpush1.bf16.msra.mxu0 0
    %1634 = vmatprep.subr.bf16.mxu0 0
    %1635 = vmatpush1.bf16.msra.mxu0 0
    %1636 = vmatprep.subr.bf16.mxu0 0
    %1637 = vmatpush1.bf16.msra.mxu0 0
    %1638 = vmatprep.subr.bf16.mxu0 0
    %1639 = vmatpush1.bf16.msra.mxu0 0
    %1640 = vmatprep.subr.bf16.mxu0 0
    %1641 = vmatpush1.bf16.msra.mxu0 0
    %1642 = vmatprep.subr.bf16.mxu0 0
    %1643 = vmatpush1.bf16.msra.mxu0 0
    %1644 = vmatprep.subr.bf16.mxu0 0
    %1645 = vmatpush1.bf16.msra.mxu0 0
    %1646 = vmatprep.subr.bf16.mxu0 0
    %1647 = vmatpush1.bf16.msra.mxu0 0
    %1648 = vmatprep.subr.bf16.mxu0 0
    %1649 = vmatpush1.bf16.msra.mxu0 0
    %1650 = vmatprep.subr.bf16.mxu0 0
    %1651 = vmatpush1.bf16.msra.mxu0 0
    %1652 = vmatprep.subr.bf16.mxu0 0
    %1653 = vmatpush1.bf16.msra.mxu0 0
    %1654 = vmatprep.mubr.bf16.mxu0 0
    %1655 = vmatmul.mubr.bf16.gmra.mrb[0].mxu0 %v1617
    %v1656 = vpop.f32.mrb[0].mxu0
    %v1657 = vadd.f32 0.0, %v1656
    %v1658 = vpop.f32.mrb[0].mxu0
    %v1659 = vpop.f32.mrb[0].mxu0
    %v1660 = vpop.f32.mrb[0].mxu0
    %1661 = vdwg.mxu0
    %1662 = vrot.lane.b32.xlu0 %v1495, 64
    %v1663 = vpop.permute.xlu0 %1662
    %v1665 = vsel %vm184, %v1613, 0
    %v1668 = vsel %vm305, %v1663, 0
    %1670 = vmatprep.subr.bf16.mxu0 0
    %1671 = vmatpush1.bf16.msra.mxu0 %v1668
    %1672 = vmatprep.subr.bf16.mxu0 0
    %1673 = vmatpush1.bf16.msra.mxu0 0
    %1674 = vmatprep.subr.bf16.mxu0 0
    %1675 = vmatpush1.bf16.msra.mxu0 0
    %1676 = vmatprep.subr.bf16.mxu0 0
    %1677 = vmatpush1.bf16.msra.mxu0 0
    %1678 = vmatprep.subr.bf16.mxu0 0
    %1679 = vmatpush1.bf16.msra.mxu0 0
    %1680 = vmatprep.subr.bf16.mxu0 0
    %1681 = vmatpush1.bf16.msra.mxu0 0
    %1682 = vmatprep.subr.bf16.mxu0 0
    %1683 = vmatpush1.bf16.msra.mxu0 0
    %1684 = vmatprep.subr.bf16.mxu0 0
    %1685 = vmatpush1.bf16.msra.mxu0 0
    %1686 = vmatprep.subr.bf16.mxu0 0
    %1687 = vmatpush1.bf16.msra.mxu0 0
    %1688 = vmatprep.subr.bf16.mxu0 0
    %1689 = vmatpush1.bf16.msra.mxu0 0
    %1690 = vmatprep.subr.bf16.mxu0 0
    %1691 = vmatpush1.bf16.msra.mxu0 0
    %1692 = vmatprep.subr.bf16.mxu0 0
    %1693 = vmatpush1.bf16.msra.mxu0 0
    %1694 = vmatprep.subr.bf16.mxu0 0
    %1695 = vmatpush1.bf16.msra.mxu0 0
    %1696 = vmatprep.subr.bf16.mxu0 0
    %1697 = vmatpush1.bf16.msra.mxu0 0
    %1698 = vmatprep.subr.bf16.mxu0 0
    %1699 = vmatpush1.bf16.msra.mxu0 0
    %1700 = vmatprep.subr.bf16.mxu0 0
    %1701 = vmatpush1.bf16.msra.mxu0 0
    %1702 = vmatprep.mubr.bf16.mxu0 0
    %1703 = vmatmul.mubr.bf16.gmra.mrb[0].mxu0 %v1665
    %v1704 = vpop.f32.mrb[0].mxu0
    %v1705 = vadd.f32 0.0, %v1704
    %v1706 = vpop.f32.mrb[0].mxu0
    %v1707 = vpop.f32.mrb[0].mxu0
    %v1708 = vpop.f32.mrb[0].mxu0
    %1709 = vdwg.mxu0
    %v1710 = vrcp.pop %v1608
    %v1711 = vrcp.pop %v1611
    %v1712 = vmul.f32 %v1657, %v1710
    %v1713 = vmul.f32 %v1705, %v1711
    %1714 = vrot.lane.b32.xlu0 %v1494, 120
    %v1715 = vpop.permute.xlu0 %1714
    %1716 = vrot.lane.b32.xlu0 %v1494, 88
    %v1717 = vpop.permute.xlu0 %1716
    %v1719 = vsel %vm184, %v1715, 0
    %v1722 = vsel %vm184, %v1717, 0
    %1724 = vmatprep.subr.bf16.mxu0 0
    %1725 = vmatpush1.bf16.xpose.msra.mxu0 %v1722
    %1726 = vmatprep.subr.bf16.mxu0 0
    %1727 = vmatpush1.bf16.xpose.msra.mxu0 0
    %1728 = vmatprep.subr.bf16.mxu0 0
    %1729 = vmatpush1.bf16.xpose.msra.mxu0 0
    %1730 = vmatprep.subr.bf16.mxu0 0
    %1731 = vmatpush1.bf16.xpose.msra.mxu0 0
    %1732 = vmatprep.subr.bf16.mxu0 0
    %1733 = vmatpush1.bf16.xpose.msra.mxu0 0
    %1734 = vmatprep.subr.bf16.mxu0 0
    %1735 = vmatpush1.bf16.xpose.msra.mxu0 0
    %1736 = vmatprep.subr.bf16.mxu0 0
    %1737 = vmatpush1.bf16.xpose.msra.mxu0 0
    %1738 = vmatprep.subr.bf16.mxu0 0
    %1739 = vmatpush1.bf16.xpose.msra.mxu0 0
    %1740 = vmatprep.subr.bf16.mxu0 0
    %1741 = vmatpush1.bf16.xpose.msra.mxu0 0
    %1742 = vmatprep.subr.bf16.mxu0 0
    %1743 = vmatpush1.bf16.xpose.msra.mxu0 0
    %1744 = vmatprep.subr.bf16.mxu0 0
    %1745 = vmatpush1.bf16.xpose.msra.mxu0 0
    %1746 = vmatprep.subr.bf16.mxu0 0
    %1747 = vmatpush1.bf16.xpose.msra.mxu0 0
    %1748 = vmatprep.subr.bf16.mxu0 0
    %1749 = vmatpush1.bf16.xpose.msra.mxu0 0
    %1750 = vmatprep.subr.bf16.mxu0 0
    %1751 = vmatpush1.bf16.xpose.msra.mxu0 0
    %1752 = vmatprep.subr.bf16.mxu0 0
    %1753 = vmatpush1.bf16.xpose.msra.mxu0 0
    %1754 = vmatprep.subr.bf16.mxu0 0
    %1755 = vmatpush1.bf16.xpose.msra.mxu0 0
    %1756 = vmatprep.mubr.bf16.mxu0 0
    %1757 = vmatmul.mubr.bf16.gmra.mrb[0].mxu0 %v1719
    %v1758 = vpop.f32.mrb[0].mxu0
    %v1759 = vadd.f32 %v109, %v1758
    %v1760 = vpop.f32.mrb[0].mxu0
    %v1761 = vpop.f32.mrb[0].mxu0
    %v1762 = vpop.f32.mrb[0].mxu0
    %1763 = vdwg.mxu0
    %1764 = vrot.lane.b32.xlu0 %v1495, 120
    %v1765 = vpop.permute.xlu0 %1764
    %1766 = vrot.lane.b32.xlu0 %v1495, 88
    %v1767 = vpop.permute.xlu0 %1766
    %v1769 = vsel %vm184, %v1765, 0
    %v1772 = vsel %vm184, %v1767, 0
    %1774 = vmatprep.subr.bf16.mxu0 0
    %1775 = vmatpush1.bf16.xpose.msra.mxu0 %v1772
    %1776 = vmatprep.subr.bf16.mxu0 0
    %1777 = vmatpush1.bf16.xpose.msra.mxu0 0
    %1778 = vmatprep.subr.bf16.mxu0 0
    %1779 = vmatpush1.bf16.xpose.msra.mxu0 0
    %1780 = vmatprep.subr.bf16.mxu0 0
    %1781 = vmatpush1.bf16.xpose.msra.mxu0 0
    %1782 = vmatprep.subr.bf16.mxu0 0
    %1783 = vmatpush1.bf16.xpose.msra.mxu0 0
    %1784 = vmatprep.subr.bf16.mxu0 0
    %1785 = vmatpush1.bf16.xpose.msra.mxu0 0
    %1786 = vmatprep.subr.bf16.mxu0 0
    %1787 = vmatpush1.bf16.xpose.msra.mxu0 0
    %1788 = vmatprep.subr.bf16.mxu0 0
    %1789 = vmatpush1.bf16.xpose.msra.mxu0 0
    %1790 = vmatprep.subr.bf16.mxu0 0
    %1791 = vmatpush1.bf16.xpose.msra.mxu0 0
    %1792 = vmatprep.subr.bf16.mxu0 0
    %1793 = vmatpush1.bf16.xpose.msra.mxu0 0
    %1794 = vmatprep.subr.bf16.mxu0 0
    %1795 = vmatpush1.bf16.xpose.msra.mxu0 0
    %1796 = vmatprep.subr.bf16.mxu0 0
    %1797 = vmatpush1.bf16.xpose.msra.mxu0 0
    %1798 = vmatprep.subr.bf16.mxu0 0
    %1799 = vmatpush1.bf16.xpose.msra.mxu0 0
    %1800 = vmatprep.subr.bf16.mxu0 0
    %1801 = vmatpush1.bf16.xpose.msra.mxu0 0
    %1802 = vmatprep.subr.bf16.mxu0 0
    %1803 = vmatpush1.bf16.xpose.msra.mxu0 0
    %1804 = vmatprep.subr.bf16.mxu0 0
    %1805 = vmatpush1.bf16.xpose.msra.mxu0 0
    %1806 = vmatprep.mubr.bf16.mxu0 0
    %1807 = vmatmul.mubr.bf16.gmra.mrb[0].mxu0 %v1769
    %v1808 = vpop.f32.mrb[0].mxu0
    %v1809 = vadd.f32 %v110, %v1808
    %v1810 = vpop.f32.mrb[0].mxu0
    %v1811 = vpop.f32.mrb[0].mxu0
    %v1812 = vpop.f32.mrb[0].mxu0
    %1813 = vdwg.mxu0
    %v1814 = vsel %vm184, %v1759, -inf
    %1815 = vmax.xlane.f32.xlu0 %v1814
    %v1816 = vpop.xlane.xlu0 %1815
    %v1817 = vsel %vm184, %v1809, -inf
    %1818 = vmax.xlane.f32.xlu0 %v1817
    %v1819 = vpop.xlane.xlu0 %1818
    %v1820 = vsub.f32 %v1759, %v1816
    %v1821 = vsub.f32 %v1809, %v1819
    %v1822 = vmul.f32 %v1820, 1.442695
    %v1823 = vpow.pop %v1822
    %v1824 = vmul.f32 %v1821, 1.442695
    %v1825 = vpow.pop %v1824
    %v1826 = vsel %vm184, %v1823, 0.0
    %1827 = vadd.xlane.f32.xlu0 %v1826
    %v1828 = vpop.xlane.xlu0 %1827
    %v1829 = vsel %vm184, %v1825, 0.0
    %1830 = vadd.xlane.f32.xlu0 %v1829
    %v1831 = vpop.xlane.xlu0 %1830
    %v1832 = vpack.c.bf16 %v1823, %v1823
    %v1833 = vpack.c.bf16 %v1825, %v1825
    %1834 = vrot.lane.b32.xlu0 %v1494, 56
    %v1835 = vpop.permute.xlu0 %1834
    %v1837 = vsel %vm184, %v1832, 0
    %v1840 = vsel %vm305, %v1835, 0
    %1842 = vmatprep.subr.bf16.mxu0 0
    %1843 = vmatpush1.bf16.msra.mxu0 %v1840
    %1844 = vmatprep.subr.bf16.mxu0 0
    %1845 = vmatpush1.bf16.msra.mxu0 0
    %1846 = vmatprep.subr.bf16.mxu0 0
    %1847 = vmatpush1.bf16.msra.mxu0 0
    %1848 = vmatprep.subr.bf16.mxu0 0
    %1849 = vmatpush1.bf16.msra.mxu0 0
    %1850 = vmatprep.subr.bf16.mxu0 0
    %1851 = vmatpush1.bf16.msra.mxu0 0
    %1852 = vmatprep.subr.bf16.mxu0 0
    %1853 = vmatpush1.bf16.msra.mxu0 0
    %1854 = vmatprep.subr.bf16.mxu0 0
    %1855 = vmatpush1.bf16.msra.mxu0 0
    %1856 = vmatprep.subr.bf16.mxu0 0
    %1857 = vmatpush1.bf16.msra.mxu0 0
    %1858 = vmatprep.subr.bf16.mxu0 0
    %1859 = vmatpush1.bf16.msra.mxu0 0
    %1860 = vmatprep.subr.bf16.mxu0 0
    %1861 = vmatpush1.bf16.msra.mxu0 0
    %1862 = vmatprep.subr.bf16.mxu0 0
    %1863 = vmatpush1.bf16.msra.mxu0 0
    %1864 = vmatprep.subr.bf16.mxu0 0
    %1865 = vmatpush1.bf16.msra.mxu0 0
    %1866 = vmatprep.subr.bf16.mxu0 0
    %1867 = vmatpush1.bf16.msra.mxu0 0
    %1868 = vmatprep.subr.bf16.mxu0 0
    %1869 = vmatpush1.bf16.msra.mxu0 0
    %1870 = vmatprep.subr.bf16.mxu0 0
    %1871 = vmatpush1.bf16.msra.mxu0 0
    %1872 = vmatprep.subr.bf16.mxu0 0
    %1873 = vmatpush1.bf16.msra.mxu0 0
    %1874 = vmatprep.mubr.bf16.mxu0 0
    %1875 = vmatmul.mubr.bf16.gmra.mrb[0].mxu0 %v1837
    %v1876 = vpop.f32.mrb[0].mxu0
    %v1877 = vadd.f32 0.0, %v1876
    %v1878 = vpop.f32.mrb[0].mxu0
    %v1879 = vpop.f32.mrb[0].mxu0
    %v1880 = vpop.f32.mrb[0].mxu0
    %1881 = vdwg.mxu0
    %1882 = vrot.lane.b32.xlu0 %v1495, 56
    %v1883 = vpop.permute.xlu0 %1882
    %v1885 = vsel %vm184, %v1833, 0
    %v1888 = vsel %vm305, %v1883, 0
    %1890 = vmatprep.subr.bf16.mxu0 0
    %1891 = vmatpush1.bf16.msra.mxu0 %v1888
    %1892 = vmatprep.subr.bf16.mxu0 0
    %1893 = vmatpush1.bf16.msra.mxu0 0
    %1894 = vmatprep.subr.bf16.mxu0 0
    %1895 = vmatpush1.bf16.msra.mxu0 0
    %1896 = vmatprep.subr.bf16.mxu0 0
    %1897 = vmatpush1.bf16.msra.mxu0 0
    %1898 = vmatprep.subr.bf16.mxu0 0
    %1899 = vmatpush1.bf16.msra.mxu0 0
    %1900 = vmatprep.subr.bf16.mxu0 0
    %1901 = vmatpush1.bf16.msra.mxu0 0
    %1902 = vmatprep.subr.bf16.mxu0 0
    %1903 = vmatpush1.bf16.msra.mxu0 0
    %1904 = vmatprep.subr.bf16.mxu0 0
    %1905 = vmatpush1.bf16.msra.mxu0 0
    %1906 = vmatprep.subr.bf16.mxu0 0
    %1907 = vmatpush1.bf16.msra.mxu0 0
    %1908 = vmatprep.subr.bf16.mxu0 0
    %1909 = vmatpush1.bf16.msra.mxu0 0
    %1910 = vmatprep.subr.bf16.mxu0 0
    %1911 = vmatpush1.bf16.msra.mxu0 0
    %1912 = vmatprep.subr.bf16.mxu0 0
    %1913 = vmatpush1.bf16.msra.mxu0 0
    %1914 = vmatprep.subr.bf16.mxu0 0
    %1915 = vmatpush1.bf16.msra.mxu0 0
    %1916 = vmatprep.subr.bf16.mxu0 0
    %1917 = vmatpush1.bf16.msra.mxu0 0
    %1918 = vmatprep.subr.bf16.mxu0 0
    %1919 = vmatpush1.bf16.msra.mxu0 0
    %1920 = vmatprep.subr.bf16.mxu0 0
    %1921 = vmatpush1.bf16.msra.mxu0 0
    %1922 = vmatprep.mubr.bf16.mxu0 0
    %1923 = vmatmul.mubr.bf16.gmra.mrb[0].mxu0 %v1885
    %v1924 = vpop.f32.mrb[0].mxu0
    %v1925 = vadd.f32 0.0, %v1924
    %v1926 = vpop.f32.mrb[0].mxu0
    %v1927 = vpop.f32.mrb[0].mxu0
    %v1928 = vpop.f32.mrb[0].mxu0
    %1929 = vdwg.mxu0
    %v1930 = vrcp.pop %v1828
    %v1931 = vrcp.pop %v1831
    %v1932 = vmul.f32 %v1877, %v1930
    %v1933 = vmul.f32 %v1925, %v1931
    %1934 = vrot.lane.b32.xlu0 %v1494, 112
    %v1935 = vpop.permute.xlu0 %1934
    %1936 = vrot.lane.b32.xlu0 %v1494, 80
    %v1937 = vpop.permute.xlu0 %1936
    %v1939 = vsel %vm184, %v1935, 0
    %v1942 = vsel %vm184, %v1937, 0
    %1944 = vmatprep.subr.bf16.mxu0 0
    %1945 = vmatpush1.bf16.xpose.msra.mxu0 %v1942
    %1946 = vmatprep.subr.bf16.mxu0 0
    %1947 = vmatpush1.bf16.xpose.msra.mxu0 0
    %1948 = vmatprep.subr.bf16.mxu0 0
    %1949 = vmatpush1.bf16.xpose.msra.mxu0 0
    %1950 = vmatprep.subr.bf16.mxu0 0
    %1951 = vmatpush1.bf16.xpose.msra.mxu0 0
    %1952 = vmatprep.subr.bf16.mxu0 0
    %1953 = vmatpush1.bf16.xpose.msra.mxu0 0
    %1954 = vmatprep.subr.bf16.mxu0 0
    %1955 = vmatpush1.bf16.xpose.msra.mxu0 0
    %1956 = vmatprep.subr.bf16.mxu0 0
    %1957 = vmatpush1.bf16.xpose.msra.mxu0 0
    %1958 = vmatprep.subr.bf16.mxu0 0
    %1959 = vmatpush1.bf16.xpose.msra.mxu0 0
    %1960 = vmatprep.subr.bf16.mxu0 0
    %1961 = vmatpush1.bf16.xpose.msra.mxu0 0
    %1962 = vmatprep.subr.bf16.mxu0 0
    %1963 = vmatpush1.bf16.xpose.msra.mxu0 0
    %1964 = vmatprep.subr.bf16.mxu0 0
    %1965 = vmatpush1.bf16.xpose.msra.mxu0 0
    %1966 = vmatprep.subr.bf16.mxu0 0
    %1967 = vmatpush1.bf16.xpose.msra.mxu0 0
    %1968 = vmatprep.subr.bf16.mxu0 0
    %1969 = vmatpush1.bf16.xpose.msra.mxu0 0
    %1970 = vmatprep.subr.bf16.mxu0 0
    %1971 = vmatpush1.bf16.xpose.msra.mxu0 0
    %1972 = vmatprep.subr.bf16.mxu0 0
    %1973 = vmatpush1.bf16.xpose.msra.mxu0 0
    %1974 = vmatprep.subr.bf16.mxu0 0
    %1975 = vmatpush1.bf16.xpose.msra.mxu0 0
    %1976 = vmatprep.mubr.bf16.mxu0 0
    %1977 = vmatmul.mubr.bf16.gmra.mrb[0].mxu0 %v1939
    %v1978 = vpop.f32.mrb[0].mxu0
    %v1979 = vadd.f32 %v109, %v1978
    %v1980 = vpop.f32.mrb[0].mxu0
    %v1981 = vpop.f32.mrb[0].mxu0
    %v1982 = vpop.f32.mrb[0].mxu0
    %1983 = vdwg.mxu0
    %1984 = vrot.lane.b32.xlu0 %v1495, 112
    %v1985 = vpop.permute.xlu0 %1984
    %1986 = vrot.lane.b32.xlu0 %v1495, 80
    %v1987 = vpop.permute.xlu0 %1986
    %v1989 = vsel %vm184, %v1985, 0
    %v1992 = vsel %vm184, %v1987, 0
    %1994 = vmatprep.subr.bf16.mxu0 0
    %1995 = vmatpush1.bf16.xpose.msra.mxu0 %v1992
    %1996 = vmatprep.subr.bf16.mxu0 0
    %1997 = vmatpush1.bf16.xpose.msra.mxu0 0
    %1998 = vmatprep.subr.bf16.mxu0 0
    %1999 = vmatpush1.bf16.xpose.msra.mxu0 0
    %2000 = vmatprep.subr.bf16.mxu0 0
    %2001 = vmatpush1.bf16.xpose.msra.mxu0 0
    %2002 = vmatprep.subr.bf16.mxu0 0
    %2003 = vmatpush1.bf16.xpose.msra.mxu0 0
    %2004 = vmatprep.subr.bf16.mxu0 0
    %2005 = vmatpush1.bf16.xpose.msra.mxu0 0
    %2006 = vmatprep.subr.bf16.mxu0 0
    %2007 = vmatpush1.bf16.xpose.msra.mxu0 0
    %2008 = vmatprep.subr.bf16.mxu0 0
    %2009 = vmatpush1.bf16.xpose.msra.mxu0 0
    %2010 = vmatprep.subr.bf16.mxu0 0
    %2011 = vmatpush1.bf16.xpose.msra.mxu0 0
    %2012 = vmatprep.subr.bf16.mxu0 0
    %2013 = vmatpush1.bf16.xpose.msra.mxu0 0
    %2014 = vmatprep.subr.bf16.mxu0 0
    %2015 = vmatpush1.bf16.xpose.msra.mxu0 0
    %2016 = vmatprep.subr.bf16.mxu0 0
    %2017 = vmatpush1.bf16.xpose.msra.mxu0 0
    %2018 = vmatprep.subr.bf16.mxu0 0
    %2019 = vmatpush1.bf16.xpose.msra.mxu0 0
    %2020 = vmatprep.subr.bf16.mxu0 0
    %2021 = vmatpush1.bf16.xpose.msra.mxu0 0
    %2022 = vmatprep.subr.bf16.mxu0 0
    %2023 = vmatpush1.bf16.xpose.msra.mxu0 0
    %2024 = vmatprep.subr.bf16.mxu0 0
    %2025 = vmatpush1.bf16.xpose.msra.mxu0 0
    %2026 = vmatprep.mubr.bf16.mxu0 0
    %2027 = vmatmul.mubr.bf16.gmra.mrb[0].mxu0 %v1989
    %v2028 = vpop.f32.mrb[0].mxu0
    %v2029 = vadd.f32 %v110, %v2028
    %v2030 = vpop.f32.mrb[0].mxu0
    %v2031 = vpop.f32.mrb[0].mxu0
    %v2032 = vpop.f32.mrb[0].mxu0
    %2033 = vdwg.mxu0
    %v2034 = vsel %vm184, %v1979, -inf
    %2035 = vmax.xlane.f32.xlu0 %v2034
    %v2036 = vpop.xlane.xlu0 %2035
    %v2037 = vsel %vm184, %v2029, -inf
    %2038 = vmax.xlane.f32.xlu0 %v2037
    %v2039 = vpop.xlane.xlu0 %2038
    %v2040 = vsub.f32 %v1979, %v2036
    %v2041 = vsub.f32 %v2029, %v2039
    %v2042 = vmul.f32 %v2040, 1.442695
    %v2043 = vpow.pop %v2042
    %v2044 = vmul.f32 %v2041, 1.442695
    %v2045 = vpow.pop %v2044
    %v2046 = vsel %vm184, %v2043, 0.0
    %2047 = vadd.xlane.f32.xlu0 %v2046
    %v2048 = vpop.xlane.xlu0 %2047
    %v2049 = vsel %vm184, %v2045, 0.0
    %2050 = vadd.xlane.f32.xlu0 %v2049
    %v2051 = vpop.xlane.xlu0 %2050
    %v2052 = vpack.c.bf16 %v2043, %v2043
    %v2053 = vpack.c.bf16 %v2045, %v2045
    %2054 = vrot.lane.b32.xlu0 %v1494, 48
    %v2055 = vpop.permute.xlu0 %2054
    %v2057 = vsel %vm184, %v2052, 0
    %v2060 = vsel %vm305, %v2055, 0
    %2062 = vmatprep.subr.bf16.mxu0 0
    %2063 = vmatpush1.bf16.msra.mxu0 %v2060
    %2064 = vmatprep.subr.bf16.mxu0 0
    %2065 = vmatpush1.bf16.msra.mxu0 0
    %2066 = vmatprep.subr.bf16.mxu0 0
    %2067 = vmatpush1.bf16.msra.mxu0 0
    %2068 = vmatprep.subr.bf16.mxu0 0
    %2069 = vmatpush1.bf16.msra.mxu0 0
    %2070 = vmatprep.subr.bf16.mxu0 0
    %2071 = vmatpush1.bf16.msra.mxu0 0
    %2072 = vmatprep.subr.bf16.mxu0 0
    %2073 = vmatpush1.bf16.msra.mxu0 0
    %2074 = vmatprep.subr.bf16.mxu0 0
    %2075 = vmatpush1.bf16.msra.mxu0 0
    %2076 = vmatprep.subr.bf16.mxu0 0
    %2077 = vmatpush1.bf16.msra.mxu0 0
    %2078 = vmatprep.subr.bf16.mxu0 0
    %2079 = vmatpush1.bf16.msra.mxu0 0
    %2080 = vmatprep.subr.bf16.mxu0 0
    %2081 = vmatpush1.bf16.msra.mxu0 0
    %2082 = vmatprep.subr.bf16.mxu0 0
    %2083 = vmatpush1.bf16.msra.mxu0 0
    %2084 = vmatprep.subr.bf16.mxu0 0
    %2085 = vmatpush1.bf16.msra.mxu0 0
    %2086 = vmatprep.subr.bf16.mxu0 0
    %2087 = vmatpush1.bf16.msra.mxu0 0
    %2088 = vmatprep.subr.bf16.mxu0 0
    %2089 = vmatpush1.bf16.msra.mxu0 0
    %2090 = vmatprep.subr.bf16.mxu0 0
    %2091 = vmatpush1.bf16.msra.mxu0 0
    %2092 = vmatprep.subr.bf16.mxu0 0
    %2093 = vmatpush1.bf16.msra.mxu0 0
    %2094 = vmatprep.mubr.bf16.mxu0 0
    %2095 = vmatmul.mubr.bf16.gmra.mrb[0].mxu0 %v2057
    %v2096 = vpop.f32.mrb[0].mxu0
    %v2097 = vadd.f32 0.0, %v2096
    %v2098 = vpop.f32.mrb[0].mxu0
    %v2099 = vpop.f32.mrb[0].mxu0
    %v2100 = vpop.f32.mrb[0].mxu0
    %2101 = vdwg.mxu0
    %2102 = vrot.lane.b32.xlu0 %v1495, 48
    %v2103 = vpop.permute.xlu0 %2102
    %v2105 = vsel %vm184, %v2053, 0
    %v2108 = vsel %vm305, %v2103, 0
    %2110 = vmatprep.subr.bf16.mxu0 0
    %2111 = vmatpush1.bf16.msra.mxu0 %v2108
    %2112 = vmatprep.subr.bf16.mxu0 0
    %2113 = vmatpush1.bf16.msra.mxu0 0
    %2114 = vmatprep.subr.bf16.mxu0 0
    %2115 = vmatpush1.bf16.msra.mxu0 0
    %2116 = vmatprep.subr.bf16.mxu0 0
    %2117 = vmatpush1.bf16.msra.mxu0 0
    %2118 = vmatprep.subr.bf16.mxu0 0
    %2119 = vmatpush1.bf16.msra.mxu0 0
    %2120 = vmatprep.subr.bf16.mxu0 0
    %2121 = vmatpush1.bf16.msra.mxu0 0
    %2122 = vmatprep.subr.bf16.mxu0 0
    %2123 = vmatpush1.bf16.msra.mxu0 0
    %2124 = vmatprep.subr.bf16.mxu0 0
    %2125 = vmatpush1.bf16.msra.mxu0 0
    %2126 = vmatprep.subr.bf16.mxu0 0
    %2127 = vmatpush1.bf16.msra.mxu0 0
    %2128 = vmatprep.subr.bf16.mxu0 0
    %2129 = vmatpush1.bf16.msra.mxu0 0
    %2130 = vmatprep.subr.bf16.mxu0 0
    %2131 = vmatpush1.bf16.msra.mxu0 0
    %2132 = vmatprep.subr.bf16.mxu0 0
    %2133 = vmatpush1.bf16.msra.mxu0 0
    %2134 = vmatprep.subr.bf16.mxu0 0
    %2135 = vmatpush1.bf16.msra.mxu0 0
    %2136 = vmatprep.subr.bf16.mxu0 0
    %2137 = vmatpush1.bf16.msra.mxu0 0
    %2138 = vmatprep.subr.bf16.mxu0 0
    %2139 = vmatpush1.bf16.msra.mxu0 0
    %2140 = vmatprep.subr.bf16.mxu0 0
    %2141 = vmatpush1.bf16.msra.mxu0 0
    %2142 = vmatprep.mubr.bf16.mxu0 0
    %2143 = vmatmul.mubr.bf16.gmra.mrb[0].mxu0 %v2105
    %v2144 = vpop.f32.mrb[0].mxu0
    %v2145 = vadd.f32 0.0, %v2144
    %v2146 = vpop.f32.mrb[0].mxu0
    %v2147 = vpop.f32.mrb[0].mxu0
    %v2148 = vpop.f32.mrb[0].mxu0
    %2149 = vdwg.mxu0
    %v2150 = vrcp.pop %v2048
    %v2151 = vrcp.pop %v2051
    %v2152 = vmul.f32 %v2097, %v2150
    %v2153 = vmul.f32 %v2145, %v2151
    %2154 = vrot.lane.b32.xlu0 %v1494, 104
    %v2155 = vpop.permute.xlu0 %2154
    %2156 = vrot.lane.b32.xlu0 %v1494, 72
    %v2157 = vpop.permute.xlu0 %2156
    %v2159 = vsel %vm184, %v2155, 0
    %v2162 = vsel %vm184, %v2157, 0
    %2164 = vmatprep.subr.bf16.mxu0 0
    %2165 = vmatpush1.bf16.xpose.msra.mxu0 %v2162
    %2166 = vmatprep.subr.bf16.mxu0 0
    %2167 = vmatpush1.bf16.xpose.msra.mxu0 0
    %2168 = vmatprep.subr.bf16.mxu0 0
    %2169 = vmatpush1.bf16.xpose.msra.mxu0 0
    %2170 = vmatprep.subr.bf16.mxu0 0
    %2171 = vmatpush1.bf16.xpose.msra.mxu0 0
    %2172 = vmatprep.subr.bf16.mxu0 0
    %2173 = vmatpush1.bf16.xpose.msra.mxu0 0
    %2174 = vmatprep.subr.bf16.mxu0 0
    %2175 = vmatpush1.bf16.xpose.msra.mxu0 0
    %2176 = vmatprep.subr.bf16.mxu0 0
    %2177 = vmatpush1.bf16.xpose.msra.mxu0 0
    %2178 = vmatprep.subr.bf16.mxu0 0
    %2179 = vmatpush1.bf16.xpose.msra.mxu0 0
    %2180 = vmatprep.subr.bf16.mxu0 0
    %2181 = vmatpush1.bf16.xpose.msra.mxu0 0
    %2182 = vmatprep.subr.bf16.mxu0 0
    %2183 = vmatpush1.bf16.xpose.msra.mxu0 0
    %2184 = vmatprep.subr.bf16.mxu0 0
    %2185 = vmatpush1.bf16.xpose.msra.mxu0 0
    %2186 = vmatprep.subr.bf16.mxu0 0
    %2187 = vmatpush1.bf16.xpose.msra.mxu0 0
    %2188 = vmatprep.subr.bf16.mxu0 0
    %2189 = vmatpush1.bf16.xpose.msra.mxu0 0
    %2190 = vmatprep.subr.bf16.mxu0 0
    %2191 = vmatpush1.bf16.xpose.msra.mxu0 0
    %2192 = vmatprep.subr.bf16.mxu0 0
    %2193 = vmatpush1.bf16.xpose.msra.mxu0 0
    %2194 = vmatprep.subr.bf16.mxu0 0
    %2195 = vmatpush1.bf16.xpose.msra.mxu0 0
    %2196 = vmatprep.mubr.bf16.mxu0 0
    %2197 = vmatmul.mubr.bf16.gmra.mrb[0].mxu0 %v2159
    %v2198 = vpop.f32.mrb[0].mxu0
    %v2199 = vadd.f32 %v109, %v2198
    %v2200 = vpop.f32.mrb[0].mxu0
    %v2201 = vpop.f32.mrb[0].mxu0
    %v2202 = vpop.f32.mrb[0].mxu0
    %2203 = vdwg.mxu0
    %2204 = vrot.lane.b32.xlu0 %v1495, 104
    %v2205 = vpop.permute.xlu0 %2204
    %2206 = vrot.lane.b32.xlu0 %v1495, 72
    %v2207 = vpop.permute.xlu0 %2206
    %v2209 = vsel %vm184, %v2205, 0
    %v2212 = vsel %vm184, %v2207, 0
    %2214 = vmatprep.subr.bf16.mxu0 0
    %2215 = vmatpush1.bf16.xpose.msra.mxu0 %v2212
    %2216 = vmatprep.subr.bf16.mxu0 0
    %2217 = vmatpush1.bf16.xpose.msra.mxu0 0
    %2218 = vmatprep.subr.bf16.mxu0 0
    %2219 = vmatpush1.bf16.xpose.msra.mxu0 0
    %2220 = vmatprep.subr.bf16.mxu0 0
    %2221 = vmatpush1.bf16.xpose.msra.mxu0 0
    %2222 = vmatprep.subr.bf16.mxu0 0
    %2223 = vmatpush1.bf16.xpose.msra.mxu0 0
    %2224 = vmatprep.subr.bf16.mxu0 0
    %2225 = vmatpush1.bf16.xpose.msra.mxu0 0
    %2226 = vmatprep.subr.bf16.mxu0 0
    %2227 = vmatpush1.bf16.xpose.msra.mxu0 0
    %2228 = vmatprep.subr.bf16.mxu0 0
    %2229 = vmatpush1.bf16.xpose.msra.mxu0 0
    %2230 = vmatprep.subr.bf16.mxu0 0
    %2231 = vmatpush1.bf16.xpose.msra.mxu0 0
    %2232 = vmatprep.subr.bf16.mxu0 0
    %2233 = vmatpush1.bf16.xpose.msra.mxu0 0
    %2234 = vmatprep.subr.bf16.mxu0 0
    %2235 = vmatpush1.bf16.xpose.msra.mxu0 0
    %2236 = vmatprep.subr.bf16.mxu0 0
    %2237 = vmatpush1.bf16.xpose.msra.mxu0 0
    %2238 = vmatprep.subr.bf16.mxu0 0
    %2239 = vmatpush1.bf16.xpose.msra.mxu0 0
    %2240 = vmatprep.subr.bf16.mxu0 0
    %2241 = vmatpush1.bf16.xpose.msra.mxu0 0
    %2242 = vmatprep.subr.bf16.mxu0 0
    %2243 = vmatpush1.bf16.xpose.msra.mxu0 0
    %2244 = vmatprep.subr.bf16.mxu0 0
    %2245 = vmatpush1.bf16.xpose.msra.mxu0 0
    %2246 = vmatprep.mubr.bf16.mxu0 0
    %2247 = vmatmul.mubr.bf16.gmra.mrb[0].mxu0 %v2209
    %v2248 = vpop.f32.mrb[0].mxu0
    %v2249 = vadd.f32 %v110, %v2248
    %v2250 = vpop.f32.mrb[0].mxu0
    %v2251 = vpop.f32.mrb[0].mxu0
    %v2252 = vpop.f32.mrb[0].mxu0
    %2253 = vdwg.mxu0
    %v2254 = vsel %vm184, %v2199, -inf
    %2255 = vmax.xlane.f32.xlu0 %v2254
    %v2256 = vpop.xlane.xlu0 %2255
    %v2257 = vsel %vm184, %v2249, -inf
    %2258 = vmax.xlane.f32.xlu0 %v2257
    %v2259 = vpop.xlane.xlu0 %2258
    %v2260 = vsub.f32 %v2199, %v2256
    %v2261 = vsub.f32 %v2249, %v2259
    %v2262 = vmul.f32 %v2260, 1.442695
    %v2263 = vpow.pop %v2262
    %v2264 = vmul.f32 %v2261, 1.442695
    %v2265 = vpow.pop %v2264
    %v2266 = vsel %vm184, %v2263, 0.0
    %2267 = vadd.xlane.f32.xlu0 %v2266
    %v2268 = vpop.xlane.xlu0 %2267
    %v2269 = vsel %vm184, %v2265, 0.0
    %2270 = vadd.xlane.f32.xlu0 %v2269
    %v2271 = vpop.xlane.xlu0 %2270
    %v2272 = vpack.c.bf16 %v2263, %v2263
    %v2273 = vpack.c.bf16 %v2265, %v2265
    %2274 = vrot.lane.b32.xlu0 %v1494, 40
    %v2275 = vpop.permute.xlu0 %2274
    %v2277 = vsel %vm184, %v2272, 0
    %v2280 = vsel %vm305, %v2275, 0
    %2282 = vmatprep.subr.bf16.mxu0 0
    %2283 = vmatpush1.bf16.msra.mxu0 %v2280
    %2284 = vmatprep.subr.bf16.mxu0 0
    %2285 = vmatpush1.bf16.msra.mxu0 0
    %2286 = vmatprep.subr.bf16.mxu0 0
    %2287 = vmatpush1.bf16.msra.mxu0 0
    %2288 = vmatprep.subr.bf16.mxu0 0
    %2289 = vmatpush1.bf16.msra.mxu0 0
    %2290 = vmatprep.subr.bf16.mxu0 0
    %2291 = vmatpush1.bf16.msra.mxu0 0
    %2292 = vmatprep.subr.bf16.mxu0 0
    %2293 = vmatpush1.bf16.msra.mxu0 0
    %2294 = vmatprep.subr.bf16.mxu0 0
    %2295 = vmatpush1.bf16.msra.mxu0 0
    %2296 = vmatprep.subr.bf16.mxu0 0
    %2297 = vmatpush1.bf16.msra.mxu0 0
    %2298 = vmatprep.subr.bf16.mxu0 0
    %2299 = vmatpush1.bf16.msra.mxu0 0
    %2300 = vmatprep.subr.bf16.mxu0 0
    %2301 = vmatpush1.bf16.msra.mxu0 0
    %2302 = vmatprep.subr.bf16.mxu0 0
    %2303 = vmatpush1.bf16.msra.mxu0 0
    %2304 = vmatprep.subr.bf16.mxu0 0
    %2305 = vmatpush1.bf16.msra.mxu0 0
    %2306 = vmatprep.subr.bf16.mxu0 0
    %2307 = vmatpush1.bf16.msra.mxu0 0
    %2308 = vmatprep.subr.bf16.mxu0 0
    %2309 = vmatpush1.bf16.msra.mxu0 0
    %2310 = vmatprep.subr.bf16.mxu0 0
    %2311 = vmatpush1.bf16.msra.mxu0 0
    %2312 = vmatprep.subr.bf16.mxu0 0
    %2313 = vmatpush1.bf16.msra.mxu0 0
    %2314 = vmatprep.mubr.bf16.mxu0 0
    %2315 = vmatmul.mubr.bf16.gmra.mrb[0].mxu0 %v2277
    %v2316 = vpop.f32.mrb[0].mxu0
    %v2317 = vadd.f32 0.0, %v2316
    %v2318 = vpop.f32.mrb[0].mxu0
    %v2319 = vpop.f32.mrb[0].mxu0
    %v2320 = vpop.f32.mrb[0].mxu0
    %2321 = vdwg.mxu0
    %2322 = vrot.lane.b32.xlu0 %v1495, 40
    %v2323 = vpop.permute.xlu0 %2322
    %v2325 = vsel %vm184, %v2273, 0
    %v2328 = vsel %vm305, %v2323, 0
    %2330 = vmatprep.subr.bf16.mxu0 0
    %2331 = vmatpush1.bf16.msra.mxu0 %v2328
    %2332 = vmatprep.subr.bf16.mxu0 0
    %2333 = vmatpush1.bf16.msra.mxu0 0
    %2334 = vmatprep.subr.bf16.mxu0 0
    %2335 = vmatpush1.bf16.msra.mxu0 0
    %2336 = vmatprep.subr.bf16.mxu0 0
    %2337 = vmatpush1.bf16.msra.mxu0 0
    %2338 = vmatprep.subr.bf16.mxu0 0
    %2339 = vmatpush1.bf16.msra.mxu0 0
    %2340 = vmatprep.subr.bf16.mxu0 0
    %2341 = vmatpush1.bf16.msra.mxu0 0
    %2342 = vmatprep.subr.bf16.mxu0 0
    %2343 = vmatpush1.bf16.msra.mxu0 0
    %2344 = vmatprep.subr.bf16.mxu0 0
    %2345 = vmatpush1.bf16.msra.mxu0 0
    %2346 = vmatprep.subr.bf16.mxu0 0
    %2347 = vmatpush1.bf16.msra.mxu0 0
    %2348 = vmatprep.subr.bf16.mxu0 0
    %2349 = vmatpush1.bf16.msra.mxu0 0
    %2350 = vmatprep.subr.bf16.mxu0 0
    %2351 = vmatpush1.bf16.msra.mxu0 0
    %2352 = vmatprep.subr.bf16.mxu0 0
    %2353 = vmatpush1.bf16.msra.mxu0 0
    %2354 = vmatprep.subr.bf16.mxu0 0
    %2355 = vmatpush1.bf16.msra.mxu0 0
    %2356 = vmatprep.subr.bf16.mxu0 0
    %2357 = vmatpush1.bf16.msra.mxu0 0
    %2358 = vmatprep.subr.bf16.mxu0 0
    %2359 = vmatpush1.bf16.msra.mxu0 0
    %2360 = vmatprep.subr.bf16.mxu0 0
    %2361 = vmatpush1.bf16.msra.mxu0 0
    %2362 = vmatprep.mubr.bf16.mxu0 0
    %2363 = vmatmul.mubr.bf16.gmra.mrb[0].mxu0 %v2325
    %v2364 = vpop.f32.mrb[0].mxu0
    %v2365 = vadd.f32 0.0, %v2364
    %v2366 = vpop.f32.mrb[0].mxu0
    %v2367 = vpop.f32.mrb[0].mxu0
    %v2368 = vpop.f32.mrb[0].mxu0
    %2369 = vdwg.mxu0
    %v2370 = vrcp.pop %v2268
    %v2371 = vrcp.pop %v2271
    %v2372 = vmul.f32 %v2317, %v2370
    %v2373 = vmul.f32 %v2365, %v2371
    %2376 = vrot.lane.b32.xlu0 %v1932, 8
    %v2377 = vpop.permute.xlu0 %2376
    %2378 = vrot.lane.b32.xlu0 %v1933, 8
    %v2379 = vpop.permute.xlu0 %2378
    %2384 = vrot.lane.b32.xlu0 %v2152, 16
    %v2385 = vpop.permute.xlu0 %2384
    %2386 = vrot.lane.b32.xlu0 %v2153, 16
    %v2387 = vpop.permute.xlu0 %2386
    %2392 = vrot.lane.b32.xlu0 %v2372, 24
    %v2393 = vpop.permute.xlu0 %2392
    %2394 = vrot.lane.b32.xlu0 %v2373, 24
    %v2395 = vpop.permute.xlu0 %2394
    %v2398 = vsel %vm184, %v1712, %v2377
    %v2399 = vsel %vm184, %v1713, %v2379
    %v2400 = vsel %vm1087, %v2398, %v2385
    %v2401 = vsel %vm1087, %v2399, %v2387
    %v2402 = vsel %vm1090, %v2400, %v2393
    %v2403 = vsel %vm1090, %v2401, %v2395
    %s2404 = scalar_lea.vmem %s6, 16
    %v2405 = vld [vmem:[%s2404] sm:$0xf]
    %v2406 = vld [vmem:[%s2404 + $0x4] sm:$0xf]
    %v2407 = vld [vmem:[%s2404 + $0x8] sm:$0xf]
    %v2408 = vld [vmem:[%s2404 + $0xc] sm:$0xf]
    %v2409 = vpack.c.bf16 %v2403, %v2402
    %s2410 = scalar_lea.vmem %s7, 1
    %v2411 = vld [vmem:[%s2410] sm:$0x1]
    %v2413 = vlaneseq
    %v2414 = vshrl.u32 %v2413, 7
    %v2415 = vsub.s32 0, %v2414
    %v2416 = vrot.slane %v2411, %v2415
    %v2422 = vunpack.c.l.b16 %v2405
    %v2423 = vunpack.c.l.b16 %v2406
    %v2424 = vunpack.c.l.b16 %v2407
    %v2425 = vunpack.c.l.b16 %v2408
    %v2426 = vpack.c.b16 %v2423, %v2422
    %v2427 = vpack.c.b16 %v2425, %v2424
    %v2431 = vsel %vm65, %v2409, 0
    %2433 = vmatprep.subr.bf16.mxu0 0
    %2434 = vmatpush1.bf16.msra.mxu0 %v2426
    %2435 = vmatprep.subr.bf16.mxu0 0
    %2436 = vmatpush1.bf16.msra.mxu0 %v2427
    %2437 = vmatprep.subr.bf16.mxu0 0
    %2438 = vmatpush1.bf16.msra.mxu0 0
    %2439 = vmatprep.subr.bf16.mxu0 0
    %2440 = vmatpush1.bf16.msra.mxu0 0
    %2441 = vmatprep.subr.bf16.mxu0 0
    %2442 = vmatpush1.bf16.msra.mxu0 0
    %2443 = vmatprep.subr.bf16.mxu0 0
    %2444 = vmatpush1.bf16.msra.mxu0 0
    %2445 = vmatprep.subr.bf16.mxu0 0
    %2446 = vmatpush1.bf16.msra.mxu0 0
    %2447 = vmatprep.subr.bf16.mxu0 0
    %2448 = vmatpush1.bf16.msra.mxu0 0
    %2449 = vmatprep.subr.bf16.mxu0 0
    %2450 = vmatpush1.bf16.msra.mxu0 0
    %2451 = vmatprep.subr.bf16.mxu0 0
    %2452 = vmatpush1.bf16.msra.mxu0 0
    %2453 = vmatprep.subr.bf16.mxu0 0
    %2454 = vmatpush1.bf16.msra.mxu0 0
    %2455 = vmatprep.subr.bf16.mxu0 0
    %2456 = vmatpush1.bf16.msra.mxu0 0
    %2457 = vmatprep.subr.bf16.mxu0 0
    %2458 = vmatpush1.bf16.msra.mxu0 0
    %2459 = vmatprep.subr.bf16.mxu0 0
    %2460 = vmatpush1.bf16.msra.mxu0 0
    %2461 = vmatprep.subr.bf16.mxu0 0
    %2462 = vmatpush1.bf16.msra.mxu0 0
    %2463 = vmatprep.subr.bf16.mxu0 0
    %2464 = vmatpush1.bf16.msra.mxu0 0
    %2465 = vmatprep.mubr.bf16.mxu0 0
    %2466 = vmatmul.mubr.bf16.gmra.mrb[0].mxu0 %v2431
    %v2467 = vpop.f32.mrb[0].mxu0
    %v2468 = vadd.f32 %v2416, %v2467
    %v2469 = vpop.f32.mrb[0].mxu0
    %v2470 = vpop.f32.mrb[0].mxu0
    %v2471 = vadd.f32 %v2416, %v2470
    %v2472 = vpop.f32.mrb[0].mxu0
    %2473 = vdwg.mxu0
    %v2474 = vadd.f32 %v2468, %v1422
    %v2475 = vadd.f32 %v2471, %v1423
    %s2476 = scalar_lea.vmem %s8, 1
    %v2477 = vld [vmem:[%s2476] sm:$0x1]
    %s2478 = scalar_lea.vmem %s9, 1
    %v2479 = vld [vmem:[%s2478] sm:$0x1]
    %v2480 = vsel %vm65, %v2474, 0.0
    %2481 = vadd.xlane.f32.xlu0 %v2480
    %v2482 = vpop.xlane.xlu0 %2481
    %v2483 = vsel %vm65, %v2475, 0.0
    %2484 = vadd.xlane.f32.xlu0 %v2483
    %v2485 = vpop.xlane.xlu0 %2484
    %v2486 = vmul.f32 %v2482, %v72
    %v2487 = vmul.f32 %v2485, %v72
    %v2488 = vsub.f32 %v2474, %v2486
    %v2489 = vsub.f32 %v2475, %v2487
    %v2490 = vmul.f32 %v2488, %v2488
    %v2491 = vmul.f32 %v2489, %v2489
    %v2492 = vsel %vm65, %v2490, 0.0
    %2493 = vadd.xlane.f32.xlu0 %v2492
    %v2494 = vpop.xlane.xlu0 %2493
    %v2495 = vsel %vm65, %v2491, 0.0
    %2496 = vadd.xlane.f32.xlu0 %v2495
    %v2497 = vpop.xlane.xlu0 %2496
    %v2498 = vmul.f32 %v2494, %v72
    %v2499 = vmul.f32 %v2497, %v72
    %v2500 = vadd.f32 %v2498, 1e-12
    %v2501 = vadd.f32 %v2499, 1e-12
    %v2502 = vrsqrt.pop %v2500
    %v2503 = vrsqrt.pop %v2501
    %v2504 = vmul.f32 %v2488, %v2502
    %v2505 = vmul.f32 %v2489, %v2503
    %v2507 = vlaneseq
    %v2508 = vshrl.u32 %v2507, 7
    %v2509 = vsub.s32 0, %v2508
    %v2510 = vrot.slane %v2477, %v2509
    %v2512 = vmul.f32 %v2504, %v2510
    %v2513 = vmul.f32 %v2505, %v2510
    %v2515 = vlaneseq
    %v2516 = vshrl.u32 %v2515, 7
    %v2517 = vsub.s32 0, %v2516
    %v2518 = vrot.slane %v2479, %v2517
    %v2520 = vadd.f32 %v2512, %v2518
    %v2521 = vadd.f32 %v2513, %v2518
    %s2522 = scalar_lea.vmem %s10, 16
    %v2523 = vld [vmem:[%s2522] sm:$0xf]
    %v2524 = vld [vmem:[%s2522 + $0x4] sm:$0xf]
    %v2525 = vld [vmem:[%s2522 + $0x8] sm:$0xf]
    %v2526 = vld [vmem:[%s2522 + $0xc] sm:$0xf]
    %v2527 = vpack.c.bf16 %v2521, %v2520
    %s2528 = scalar_lea.vmem %s11, 1
    %v2529 = vld [vmem:[%s2528] sm:$0x1]
    %v2531 = vlaneseq
    %v2532 = vshrl.u32 %v2531, 7
    %v2533 = vsub.s32 0, %v2532
    %v2534 = vrot.slane %v2529, %v2533
    %v2540 = vunpack.c.l.b16 %v2523
    %v2541 = vunpack.c.l.b16 %v2524
    %v2542 = vunpack.c.l.b16 %v2525
    %v2543 = vunpack.c.l.b16 %v2526
    %v2544 = vpack.c.b16 %v2541, %v2540
    %v2545 = vpack.c.b16 %v2543, %v2542
    %v2549 = vsel %vm65, %v2527, 0
    %2551 = vmatprep.subr.bf16.mxu0 0
    %2552 = vmatpush1.bf16.msra.mxu0 %v2544
    %2553 = vmatprep.subr.bf16.mxu0 0
    %2554 = vmatpush1.bf16.msra.mxu0 %v2545
    %2555 = vmatprep.subr.bf16.mxu0 0
    %2556 = vmatpush1.bf16.msra.mxu0 0
    %2557 = vmatprep.subr.bf16.mxu0 0
    %2558 = vmatpush1.bf16.msra.mxu0 0
    %2559 = vmatprep.subr.bf16.mxu0 0
    %2560 = vmatpush1.bf16.msra.mxu0 0
    %2561 = vmatprep.subr.bf16.mxu0 0
    %2562 = vmatpush1.bf16.msra.mxu0 0
    %2563 = vmatprep.subr.bf16.mxu0 0
    %2564 = vmatpush1.bf16.msra.mxu0 0
    %2565 = vmatprep.subr.bf16.mxu0 0
    %2566 = vmatpush1.bf16.msra.mxu0 0
    %2567 = vmatprep.subr.bf16.mxu0 0
    %2568 = vmatpush1.bf16.msra.mxu0 0
    %2569 = vmatprep.subr.bf16.mxu0 0
    %2570 = vmatpush1.bf16.msra.mxu0 0
    %2571 = vmatprep.subr.bf16.mxu0 0
    %2572 = vmatpush1.bf16.msra.mxu0 0
    %2573 = vmatprep.subr.bf16.mxu0 0
    %2574 = vmatpush1.bf16.msra.mxu0 0
    %2575 = vmatprep.subr.bf16.mxu0 0
    %2576 = vmatpush1.bf16.msra.mxu0 0
    %2577 = vmatprep.subr.bf16.mxu0 0
    %2578 = vmatpush1.bf16.msra.mxu0 0
    %2579 = vmatprep.subr.bf16.mxu0 0
    %2580 = vmatpush1.bf16.msra.mxu0 0
    %2581 = vmatprep.subr.bf16.mxu0 0
    %2582 = vmatpush1.bf16.msra.mxu0 0
    %2583 = vmatprep.mubr.bf16.mxu0 0
    %2584 = vmatmul.mubr.bf16.gmra.mrb[0].mxu0 %v2549
    %v2585 = vpop.f32.mrb[0].mxu0
    %v2586 = vadd.f32 %v2534, %v2585
    %v2587 = vpop.f32.mrb[0].mxu0
    %v2588 = vpop.f32.mrb[0].mxu0
    %v2589 = vadd.f32 %v2534, %v2588
    %v2590 = vpop.f32.mrb[0].mxu0
    %2591 = vdwg.mxu0
    %v2592 = vmul.f32 %v2586, 0.5
    %v2593 = vmul.f32 %v2589, 0.5
    %v2594 = vmul.f32 %v2586, 0.044715
    %v2595 = vmul.f32 %v2589, 0.044715
    %v2596 = vmul.f32 %v2594, %v2586
    %v2597 = vmul.f32 %v2595, %v2589
    %v2598 = vmul.f32 %v2596, %v2586
    %v2599 = vmul.f32 %v2597, %v2589
    %v2600 = vadd.f32 %v2586, %v2598
    %v2601 = vadd.f32 %v2589, %v2599
    %v2602 = vmul.f32 %v2600, 0.7978846
    %v2603 = vmul.f32 %v2601, 0.7978846
    %v2604 = vtanh.pop %v2602
    %v2605 = vtanh.pop %v2603
    %v2606 = vadd.f32 %v2604, 1.0
    %v2607 = vadd.f32 %v2605, 1.0
    %v2608 = vmul.f32 %v2592, %v2606
    %v2609 = vmul.f32 %v2593, %v2607
    %s2610 = scalar_lea.vmem %s12, 32
    %v2611 = vld [vmem:[%s2610] sm:$0xf]
    %v2612 = vld [vmem:[%s2610 + $0x4] sm:$0xf]
    %v2613 = vld [vmem:[%s2610 + $0x8] sm:$0xf]
    %v2614 = vld [vmem:[%s2610 + $0xc] sm:$0xf]
    %v2615 = vld [vmem:[%s2610 + $0x10] sm:$0xf]
    %v2616 = vld [vmem:[%s2610 + $0x14] sm:$0xf]
    %v2617 = vld [vmem:[%s2610 + $0x18] sm:$0xf]
    %v2618 = vld [vmem:[%s2610 + $0x1c] sm:$0xf]
    %v2619 = vpack.c.bf16 %v2609, %v2608
    %s2620 = scalar_lea.vmem %s13, 1
    %v2621 = vld [vmem:[%s2620] sm:$0x1]
    %v2623 = vlaneseq
    %v2624 = vshrl.u32 %v2623, 7
    %v2625 = vsub.s32 0, %v2624
    %v2626 = vrot.slane %v2621, %v2625
    %v2636 = vunpack.c.l.b16 %v2611
    %v2637 = vunpack.c.l.b16 %v2612
    %v2638 = vunpack.c.l.b16 %v2613
    %v2639 = vunpack.c.l.b16 %v2614
    %v2640 = vunpack.c.l.b16 %v2615
    %v2641 = vunpack.c.l.b16 %v2616
    %v2642 = vunpack.c.l.b16 %v2617
    %v2643 = vunpack.c.l.b16 %v2618
    %v2644 = vpack.c.b16 %v2637, %v2636
    %v2645 = vpack.c.b16 %v2639, %v2638
    %v2646 = vpack.c.b16 %v2641, %v2640
    %v2647 = vpack.c.b16 %v2643, %v2642
    %v2653 = vsel %vm1333, %v2619, 0
    %2655 = vmatprep.subr.bf16.mxu0 0
    %2656 = vmatpush1.bf16.msra.mxu0 %v2644
    %2657 = vmatprep.subr.bf16.mxu0 0
    %2658 = vmatpush1.bf16.msra.mxu0 %v2645
    %2659 = vmatprep.subr.bf16.mxu0 0
    %2660 = vmatpush1.bf16.msra.mxu0 %v2646
    %2661 = vmatprep.subr.bf16.mxu0 0
    %2662 = vmatpush1.bf16.msra.mxu0 %v2647
    %2663 = vmatprep.subr.bf16.mxu0 0
    %2664 = vmatpush1.bf16.msra.mxu0 0
    %2665 = vmatprep.subr.bf16.mxu0 0
    %2666 = vmatpush1.bf16.msra.mxu0 0
    %2667 = vmatprep.subr.bf16.mxu0 0
    %2668 = vmatpush1.bf16.msra.mxu0 0
    %2669 = vmatprep.subr.bf16.mxu0 0
    %2670 = vmatpush1.bf16.msra.mxu0 0
    %2671 = vmatprep.subr.bf16.mxu0 0
    %2672 = vmatpush1.bf16.msra.mxu0 0
    %2673 = vmatprep.subr.bf16.mxu0 0
    %2674 = vmatpush1.bf16.msra.mxu0 0
    %2675 = vmatprep.subr.bf16.mxu0 0
    %2676 = vmatpush1.bf16.msra.mxu0 0
    %2677 = vmatprep.subr.bf16.mxu0 0
    %2678 = vmatpush1.bf16.msra.mxu0 0
    %2679 = vmatprep.subr.bf16.mxu0 0
    %2680 = vmatpush1.bf16.msra.mxu0 0
    %2681 = vmatprep.subr.bf16.mxu0 0
    %2682 = vmatpush1.bf16.msra.mxu0 0
    %2683 = vmatprep.subr.bf16.mxu0 0
    %2684 = vmatpush1.bf16.msra.mxu0 0
    %2685 = vmatprep.subr.bf16.mxu0 0
    %2686 = vmatpush1.bf16.msra.mxu0 0
    %2687 = vmatprep.mubr.bf16.mxu0 0
    %2688 = vmatmul.mubr.bf16.gmra.mrb[0].mxu0 %v2653
    %v2689 = vpop.f32.mrb[0].mxu0
    %v2690 = vadd.f32 %v2626, %v2689
    %v2691 = vpop.f32.mrb[0].mxu0
    %v2692 = vpop.f32.mrb[0].mxu0
    %v2693 = vadd.f32 %v2626, %v2692
    %v2694 = vpop.f32.mrb[0].mxu0
    %2695 = vdwg.mxu0
    %v2696 = vadd.f32 %v2690, %v2520
    %v2697 = vadd.f32 %v2693, %v2521
    %s2698 = scalar_lea.vmem %s14, 1
    %v2699 = vld [vmem:[%s2698] sm:$0x1]
    %s2700 = scalar_lea.vmem %s15, 1
    %v2701 = vld [vmem:[%s2700] sm:$0x1]
    %v2702 = vsel %vm65, %v2696, 0.0
    %2703 = vadd.xlane.f32.xlu0 %v2702
    %v2704 = vpop.xlane.xlu0 %2703
    %v2705 = vsel %vm65, %v2697, 0.0
    %2706 = vadd.xlane.f32.xlu0 %v2705
    %v2707 = vpop.xlane.xlu0 %2706
    %v2708 = vmul.f32 %v2704, %v72
    %v2709 = vmul.f32 %v2707, %v72
    %v2710 = vsub.f32 %v2696, %v2708
    %v2711 = vsub.f32 %v2697, %v2709
    %v2712 = vmul.f32 %v2710, %v2710
    %v2713 = vmul.f32 %v2711, %v2711
    %v2714 = vsel %vm65, %v2712, 0.0
    %2715 = vadd.xlane.f32.xlu0 %v2714
    %v2716 = vpop.xlane.xlu0 %2715
    %v2717 = vsel %vm65, %v2713, 0.0
    %2718 = vadd.xlane.f32.xlu0 %v2717
    %v2719 = vpop.xlane.xlu0 %2718
    %v2720 = vmul.f32 %v2716, %v72
    %v2721 = vmul.f32 %v2719, %v72
    %v2722 = vadd.f32 %v2720, 1e-12
    %v2723 = vadd.f32 %v2721, 1e-12
    %v2724 = vrsqrt.pop %v2722
    %v2725 = vrsqrt.pop %v2723
    %v2726 = vmul.f32 %v2710, %v2724
    %v2727 = vmul.f32 %v2711, %v2725
    %v2729 = vlaneseq
    %v2730 = vshrl.u32 %v2729, 7
    %v2731 = vsub.s32 0, %v2730
    %v2732 = vrot.slane %v2699, %v2731
    %v2734 = vmul.f32 %v2726, %v2732
    %v2735 = vmul.f32 %v2727, %v2732
    %v2737 = vlaneseq
    %v2738 = vshrl.u32 %v2737, 7
    %v2739 = vsub.s32 0, %v2738
    %v2740 = vrot.slane %v2701, %v2739
    %v2742 = vadd.f32 %v2734, %v2740
    %v2743 = vadd.f32 %v2735, %v2740
    %v2745 = vrot.slane %v2743, 7
    %vm2747 = vcmask 1040384
    %v2748 = vsel %vm2747, %v2742, %v2745
    %v2749 = vld [vmem:[%s16] sm:$0xf]
    %v2750 = vld [vmem:[%s16 + $0x4] sm:$0xf]
    %v2751 = vld [vmem:[%s16 + $0x8] sm:$0xf]
    %v2752 = vld [vmem:[%s16 + $0xc] sm:$0xf]
    %v2753 = vpack.c.bf16 %v2748, %v2748
    %v2754 = vld [vmem:[%s17] sm:$0x1]
    %v2756 = vlaneseq
    %v2757 = vshrl.u32 %v2756, 7
    %v2758 = vsub.s32 0, %v2757
    %v2759 = vrot.slane %v2754, %v2758
    %v2765 = vunpack.c.l.b16 %v2749
    %v2766 = vunpack.c.l.b16 %v2750
    %v2767 = vunpack.c.l.b16 %v2751
    %v2768 = vunpack.c.l.b16 %v2752
    %v2769 = vpack.c.b16 %v2766, %v2765
    %v2770 = vpack.c.b16 %v2768, %v2767
    %v2774 = vsel %vm65, %v2753, 0
    %2776 = vmatprep.subr.bf16.mxu0 0
    %2777 = vmatpush1.bf16.msra.mxu0 %v2769
    %2778 = vmatprep.subr.bf16.mxu0 0
    %2779 = vmatpush1.bf16.msra.mxu0 %v2770
    %2780 = vmatprep.subr.bf16.mxu0 0
    %2781 = vmatpush1.bf16.msra.mxu0 0
    %2782 = vmatprep.subr.bf16.mxu0 0
    %2783 = vmatpush1.bf16.msra.mxu0 0
    %2784 = vmatprep.subr.bf16.mxu0 0
    %2785 = vmatpush1.bf16.msra.mxu0 0
    %2786 = vmatprep.subr.bf16.mxu0 0
    %2787 = vmatpush1.bf16.msra.mxu0 0
    %2788 = vmatprep.subr.bf16.mxu0 0
    %2789 = vmatpush1.bf16.msra.mxu0 0
    %2790 = vmatprep.subr.bf16.mxu0 0
    %2791 = vmatpush1.bf16.msra.mxu0 0
    %2792 = vmatprep.subr.bf16.mxu0 0
    %2793 = vmatpush1.bf16.msra.mxu0 0
    %2794 = vmatprep.subr.bf16.mxu0 0
    %2795 = vmatpush1.bf16.msra.mxu0 0
    %2796 = vmatprep.subr.bf16.mxu0 0
    %2797 = vmatpush1.bf16.msra.mxu0 0
    %2798 = vmatprep.subr.bf16.mxu0 0
    %2799 = vmatpush1.bf16.msra.mxu0 0
    %2800 = vmatprep.subr.bf16.mxu0 0
    %2801 = vmatpush1.bf16.msra.mxu0 0
    %2802 = vmatprep.subr.bf16.mxu0 0
    %2803 = vmatpush1.bf16.msra.mxu0 0
    %2804 = vmatprep.subr.bf16.mxu0 0
    %2805 = vmatpush1.bf16.msra.mxu0 0
    %2806 = vmatprep.subr.bf16.mxu0 0
    %2807 = vmatpush1.bf16.msra.mxu0 0
    %2808 = vmatprep.mubr.bf16.mxu0 0
    %2809 = vmatmul.mubr.bf16.gmra.mrb[0].mxu0 %v2774
    %v2810 = vpop.f32.mrb[0].mxu0
    %v2811 = vadd.f32 %v2759, %v2810
    %v2812 = vpop.f32.mrb[0].mxu0
    %v2813 = vpop.f32.mrb[0].mxu0
    %v2814 = vpop.f32.mrb[0].mxu0
    %2815 = vdwg.mxu0
    %2816 = vst [vmem:[#allocation2] sm:$0x3] %v2811
    // Predicated region
    $region74: #{prunebert_clf_forward.1} parent=1 // pred_check
      _
    $region75: #{prunebert_clf_forward.1} parent=1 // pred_check_branch
      %2818 = sbr.rel (0) target = $region77
    $region76: #{prunebert_clf_forward.1} parent=1 // pred_region
      %s2820 = ssub.s32 32, 32
      %2821 = vsyncadd [#allocation3], %s2820
      %s2823 = sshll.u32 [#allocation2], 4
      %s2824 = int_to_ptr.vmem [resolvable:$true] %s2823
      %2826 = dma.vmem_to_hbm [thread:$0]  %s2824, 32, %s18, [#allocation3]
    $region77: #{prunebert_clf_forward.1} parent=1 // pred_fallthru
      _
    // Predicated region
    $region78: #{prunebert_clf_forward.1} parent=1 // pred_check
      _
    $region79: #{prunebert_clf_forward.1} parent=1 // pred_check_branch
      %2828 = sbr.rel (0) target = $region81
    $region80: #{prunebert_clf_forward.1} parent=1 // pred_region
      %2829 = dma.done [#allocation3], 32
    $region81: #{prunebert_clf_forward.1} parent=1 // pred_fallthru
      _
    %2830 = vsyncpa [#allocation3], 1

</llo_original>
